<compile_context>
chip_gen: v5e
topology: v5e:2x2
jax: 0.10.0
libtpu: 0.0.40
codegen_flags: <defaults>
</compile_context>

<pallas_src>
import functools
import math

import jax
import jax.numpy as jnp
from jax.experimental import pallas as pl
from jax.experimental.pallas import tpu as pltpu


# ----------------------------- in-kernel helpers -----------------------------

def _gelu(x):
    # tanh-approximate GELU (BERT-style).
    # TODO(synk): HF BERT default is exact-erf GELU; tanh approx differs by <1e-3.
    c = math.sqrt(2.0 / math.pi)
    return 0.5 * x * (1.0 + jnp.tanh(c * (x + 0.044715 * x * x * x)))


def _layer_norm(x, gamma, beta, eps=1e-12):
    mu = jnp.mean(x, axis=-1, keepdims=True)
    var = jnp.mean((x - mu) ** 2, axis=-1, keepdims=True)
    return (x - mu) * jax.lax.rsqrt(var + eps) * gamma + beta


# --------------------------------- fused kernel -------------------------------

def fused_encoder_kernel(num_heads, head_dim,
                         x_ref, m_ref, eg_ref, eb_ref,
                         wq_ref, bq_ref, wk_ref, bk_ref, wv_ref, bv_ref,
                         wo_ref, bo_ref, g1_ref, be1_ref,
                         w1_ref, b1_ref, w2_ref, b2_ref, g2_ref, be2_ref,
                         o_ref):
    """Grid = (batch, layer). The output block (1,S,H) has a constant index
    along the layer axis, so it stays resident in VMEM and acts as the
    running activation; it is written back to HBM only when the batch index
    changes (i.e. after the last layer)."""
    layer = pl.program_id(1)

    # --- layer 0: embedding LayerNorm seeds the resident activation --------
    @pl.when(layer == 0)
    def _():
        o_ref[0] = _layer_norm(x_ref[0], eg_ref[...], eb_ref[...])

    x = o_ref[0]                                   # (S, H) f32, VMEM-resident
    S, H = x.shape
    nh, hd = num_heads, head_dim

    # Additive key-padding mask, computed once per step: 0 valid / -1e9 pad.
    add_mask = (m_ref[0] - 1.0) * 1e9              # (1, S)

    xb = x.astype(jnp.bfloat16)

    # --- QKV projections (bf16 MXU, f32 accumulation) -----------------------
    q = jnp.dot(xb, wq_ref[0], preferred_element_type=jnp.float32) + bq_ref[0]
    k = jnp.dot(xb, wk_ref[0], preferred_element_type=jnp.float32) + bk_ref[0]
    v = jnp.dot(xb, wv_ref[0], preferred_element_type=jnp.float32) + bv_ref[0]

    # --- batched multi-head attention (heads leading, head_dim lane-dense) --
    qh = q.reshape(S, nh, hd).transpose(1, 0, 2)   # (nh, S, hd)
    kh = k.reshape(S, nh, hd).transpose(1, 0, 2)
    vh = v.reshape(S, nh, hd).transpose(1, 0, 2)

    scale = 1.0 / math.sqrt(head_dim)
    s = jnp.einsum('hqd,hkd->hqk',
                   qh.astype(jnp.bfloat16), kh.astype(jnp.bfloat16),
                   preferred_element_type=jnp.float32) * scale   # (nh, S, S)
    s = s + add_mask[None]                                       # broadcast mask
    s = s - jnp.max(s, axis=-1, keepdims=True)
    p = jnp.exp(s)
    p = p * pl.reciprocal(jnp.sum(p, axis=-1, keepdims=True), approx=True)
    ctx = jnp.einsum('hqk,hkd->hqd',
                     p.astype(jnp.bfloat16), vh.astype(jnp.bfloat16),
                     preferred_element_type=jnp.float32)         # (nh, S, hd)
    ctx = ctx.transpose(1, 0, 2).reshape(S, H)                   # (S, H)

    attn = jnp.dot(ctx.astype(jnp.bfloat16), wo_ref[0],
                   preferred_element_type=jnp.float32) + bo_ref[0]
    h1 = _layer_norm(x + attn, g1_ref[0], be1_ref[0])

    # --- feed-forward -------------------------------------------------------
    ff = jnp.dot(h1.astype(jnp.bfloat16), w1_ref[0],
                 preferred_element_type=jnp.float32) + b1_ref[0]
    ff = _gelu(ff)
    ff = jnp.dot(ff.astype(jnp.bfloat16), w2_ref[0],
                 preferred_element_type=jnp.float32) + b2_ref[0]

    o_ref[0] = _layer_norm(h1 + ff, g2_ref[0], be2_ref[0])


# ------------------------------ pallas wrapper --------------------------------

def pallas_bert_encoder(x_emb, mask, emb_ln_g, emb_ln_b, params,
                        num_heads, head_dim, num_layers):
    B, S, H = x_emb.shape
    F = params["w1"].shape[-1]
    L = num_layers
    nh = num_heads

    mask3 = mask.astype(jnp.float32).reshape(B, 1, S)

    kernel = functools.partial(fused_encoder_kernel, num_heads, head_dim)

    batch_act = pl.BlockSpec((1, S, H), lambda b, l: (b, 0, 0))
    batch_msk = pl.BlockSpec((1, 1, S), lambda b, l: (b, 0, 0))
    const_vec = pl.BlockSpec((1, H), lambda b, l: (0, 0))
    w_hh = pl.BlockSpec((1, H, H), lambda b, l: (l, 0, 0))
    w_hf = pl.BlockSpec((1, H, F), lambda b, l: (l, 0, 0))
    w_fh = pl.BlockSpec((1, F, H), lambda b, l: (l, 0, 0))
    vec_h = pl.BlockSpec((1, 1, H), lambda b, l: (l, 0, 0))
    vec_f = pl.BlockSpec((1, 1, F), lambda b, l: (l, 0, 0))

    flops = int(B * L * (8 * S * H * H + 4 * nh * S * S * head_dim + 4 * S * H * F))
    transcendentals = int(B * L * (nh * S * S + S * F + 4 * S))
    bytes_accessed = int(L * (4 * H * H + 2 * H * F) * 2        # bf16 weights
                         + 2 * B * S * H * 4 + B * S * 4)       # activations + mask

    return pl.pallas_call(
        kernel,
        out_shape=jax.ShapeDtypeStruct((B, S, H), jnp.float32),
        grid_spec=pltpu.PrefetchScalarGridSpec(
            num_scalar_prefetch=0,
            grid=(B, L),                          # layer axis innermost (resident act)
            in_specs=[
                batch_act, batch_msk,             # x_emb, mask
                const_vec, const_vec,             # embedding LN gamma/beta
                w_hh, vec_h, w_hh, vec_h, w_hh, vec_h,   # wq,bq, wk,bk, wv,bv
                w_hh, vec_h,                              # wo, bo
                vec_h, vec_h,                             # ln1 gamma/beta
                w_hf, vec_f, w_fh, vec_h,                 # w1,b1, w2,b2
                vec_h, vec_h,                             # ln2 gamma/beta
            ],
            out_specs=pl.BlockSpec((1, S, H), lambda b, l: (b, 0, 0)),
        ),
        compiler_params=pltpu.CompilerParams(
            dimension_semantics=("parallel", "arbitrary"),
            vmem_limit_bytes=32 * 1024 * 1024),
        cost_estimate=pl.CostEstimate(
            flops=flops, transcendentals=transcendentals,
            bytes_accessed=bytes_accessed),
    )(x_emb, mask3,
      emb_ln_g.reshape(1, H), emb_ln_b.reshape(1, H),
      params["wq"], params["bq"], params["wk"], params["bk"],
      params["wv"], params["bv"], params["wo"], params["bo"],
      params["ln1_g"], params["ln1_b"],
      params["w1"], params["b1"], params["w2"], params["b2"],
      params["ln2_g"], params["ln2_b"])


# ------------------------------- model wrapper --------------------------------

class HuggingFaceTextModelWrapperPallas:
    """JAX/Pallas analogue of HuggingFaceTextModelWrapper.forward.

    forward(src, src_mask) -> last_hidden_state of shape [B, S, d_model].
    The encoder is a small synthetic BERT-style stack with deterministic
    weights (no checkpoint loading / tokenizers).
    """

    def __init__(self, vocab_size=512, max_pos=64, d_model=256, num_heads=2,
                 ffn_dim=512, num_layers=2, seed=0):
        assert d_model % 128 == 0 and ffn_dim % 128 == 0      # lane-dense
        assert d_model % num_heads == 0
        self.vocab_size = vocab_size
        self.d_model = d_model
        self.num_heads = num_heads
        self.head_dim = d_model // num_heads
        self.num_layers = num_layers

        n_keys = 3 + 6 * num_layers
        ks = iter(jax.random.split(jax.random.PRNGKey(seed), n_keys))
        init = lambda k, shape: (0.02 * jax.random.normal(k, shape)).astype(jnp.float32)

        # TODO(synk): real HF pretrained-weight loading has no Pallas equivalent;
        # weights are synthesized deterministically instead.
        self.word_emb = init(next(ks), (vocab_size, d_model))
        self.pos_emb = init(next(ks), (max_pos, d_model))
        self.type_emb = init(next(ks), (2, d_model))
        self.emb_ln_g = jnp.ones((d_model,), jnp.float32)
        self.emb_ln_b = jnp.zeros((d_model,), jnp.float32)

        L, H, F = num_layers, d_model, ffn_dim

        def stack_w(shape):
            return jnp.stack([init(next(ks), shape) for _ in range(L)]
                             ).astype(jnp.bfloat16)            # (L, *shape)

        self.params = {
            "wq": stack_w((H, H)), "bq": jnp.zeros((L, 1, H), jnp.float32),
            "wk": stack_w((H, H)), "bk": jnp.zeros((L, 1, H), jnp.float32),
            "wv": stack_w((H, H)), "bv": jnp.zeros((L, 1, H), jnp.float32),
            "wo": stack_w((H, H)), "bo": jnp.zeros((L, 1, H), jnp.float32),
            "ln1_g": jnp.ones((L, 1, H), jnp.float32),
            "ln1_b": jnp.zeros((L, 1, H), jnp.float32),
            "w1": stack_w((H, F)), "b1": jnp.zeros((L, 1, F), jnp.float32),
            "w2": stack_w((F, H)), "b2": jnp.zeros((L, 1, H), jnp.float32),
            "ln2_g": jnp.ones((L, 1, H), jnp.float32),
            "ln2_b": jnp.zeros((L, 1, H), jnp.float32),
        }

    def encode(self, src, src_mask=None):
        if isinstance(src, dict):          # mirror the torch wrapper's dict handling
            for k in ("attention_mask", "src_mask", "mask", "attn_mask"):
                if k in src:
                    src_mask = src[k]
                    break
            for k in ("input_ids", "src", "token_ids", "ids"):
                if k in src:
                    src = src[k]
                    break
        B, S = src.shape
        if src_mask is None:
            src_mask = jnp.ones((B, S), jnp.float32)
        if src_mask.ndim > 2:              # mirror the squeeze(1) behavior
            src_mask = src_mask.reshape(B, S)

        # Clip out-of-vocab ids, exactly as the torch wrapper does.
        ids = jnp.clip(src, 0, self.vocab_size - 1)

        # TODO(synk): embedding lookup is a data-dependent gather -> plain JAX glue.
        x = (jnp.take(self.word_emb, ids, axis=0)
             + self.pos_emb[:S][None, :, :]
             + self.type_emb[0][None, None, :]).astype(jnp.float32)

        # Hot path: embedding LayerNorm + all transformer layers in ONE fused
        # pallas_call with the activation tile resident in VMEM across layers.
        return pallas_bert_encoder(x, src_mask, self.emb_ln_g, self.emb_ln_b,
                                   self.params, self.num_heads, self.head_dim,
                                   self.num_layers)

    def forward(self, src, tgt=None, src_mask=None, tgt_mask=None):
        return self.encode(src, src_mask)


# ----------------------------------- main --------------------------------------

if __name__ == "__main__":
    B, S = 2, 16
    model = HuggingFaceTextModelWrapperPallas(
        vocab_size=512, max_pos=64, d_model=256, num_heads=2, ffn_dim=512,
        num_layers=2, seed=0)

    key = jax.random.PRNGKey(0)
    k_ids, _ = jax.random.split(key)
    input_ids = jax.random.randint(k_ids, (B, S), 0, 512, dtype=jnp.int32)
    attention_mask = jnp.ones((B, S), jnp.float32).at[1, 12:].set(0.0)  # pad tail

    out = model.forward(input_ids, src_mask=attention_mask)
    out = jax.block_until_ready(out)

    assert out.shape == (B, S, model.d_model), out.shape
    assert out.dtype == jnp.float32
    assert bool(jnp.all(jnp.isfinite(out)))
    print("KERNEL_OK")
</pallas_src>

<mosaic_0001>
module attributes {stable_mosaic.version = 11 : i64} {
  func.func @fused_encoder_kernel(%arg0: i32, %arg1: i32, %arg2: memref<1x16x256xf32, #tpu.memory_space<vmem>>, %arg3: memref<1x1x16xf32, #tpu.memory_space<vmem>>, %arg4: memref<1x256xf32, #tpu.memory_space<vmem>>, %arg5: memref<1x256xf32, #tpu.memory_space<vmem>>, %arg6: memref<1x256x256xbf16, #tpu.memory_space<vmem>>, %arg7: memref<1x1x256xf32, #tpu.memory_space<vmem>>, %arg8: memref<1x256x256xbf16, #tpu.memory_space<vmem>>, %arg9: memref<1x1x256xf32, #tpu.memory_space<vmem>>, %arg10: memref<1x256x256xbf16, #tpu.memory_space<vmem>>, %arg11: memref<1x1x256xf32, #tpu.memory_space<vmem>>, %arg12: memref<1x256x256xbf16, #tpu.memory_space<vmem>>, %arg13: memref<1x1x256xf32, #tpu.memory_space<vmem>>, %arg14: memref<1x1x256xf32, #tpu.memory_space<vmem>>, %arg15: memref<1x1x256xf32, #tpu.memory_space<vmem>>, %arg16: memref<1x256x512xbf16, #tpu.memory_space<vmem>>, %arg17: memref<1x1x512xf32, #tpu.memory_space<vmem>>, %arg18: memref<1x512x256xbf16, #tpu.memory_space<vmem>>, %arg19: memref<1x1x256xf32, #tpu.memory_space<vmem>>, %arg20: memref<1x1x256xf32, #tpu.memory_space<vmem>>, %arg21: memref<1x1x256xf32, #tpu.memory_space<vmem>>, %arg22: memref<1x16x256xf32, #tpu.memory_space<vmem>>) attributes {dimension_semantics = [#tpu.dimension_semantics<parallel>, #tpu.dimension_semantics<arbitrary>], iteration_bounds = array<i64: 2, 2>, scalar_prefetch = 0 : i64, scratch_operands = 0 : i64, tpu.core_type = #tpu.core_type<tc>, window_params = [{transform_indices = @transform_0, window_bounds = array<i64: 1, 16, 256>}, {transform_indices = @transform_1, window_bounds = array<i64: 1, 1, 16>}, {pipeline_mode = #tpu.pipeline_mode<synchronous>, transform_indices = @transform_2, window_bounds = array<i64: 1, 256>}, {pipeline_mode = #tpu.pipeline_mode<synchronous>, transform_indices = @transform_3, window_bounds = array<i64: 1, 256>}, {transform_indices = @transform_4, window_bounds = array<i64: 1, 256, 256>}, {transform_indices = @transform_5, window_bounds = array<i64: 1, 1, 256>}, {transform_indices = @transform_6, window_bounds = array<i64: 1, 256, 256>}, {transform_indices = @transform_7, window_bounds = array<i64: 1, 1, 256>}, {transform_indices = @transform_8, window_bounds = array<i64: 1, 256, 256>}, {transform_indices = @transform_9, window_bounds = array<i64: 1, 1, 256>}, {transform_indices = @transform_10, window_bounds = array<i64: 1, 256, 256>}, {transform_indices = @transform_11, window_bounds = array<i64: 1, 1, 256>}, {transform_indices = @transform_12, window_bounds = array<i64: 1, 1, 256>}, {transform_indices = @transform_13, window_bounds = array<i64: 1, 1, 256>}, {transform_indices = @transform_14, window_bounds = array<i64: 1, 256, 512>}, {transform_indices = @transform_15, window_bounds = array<i64: 1, 1, 512>}, {transform_indices = @transform_16, window_bounds = array<i64: 1, 512, 256>}, {transform_indices = @transform_17, window_bounds = array<i64: 1, 1, 256>}, {transform_indices = @transform_18, window_bounds = array<i64: 1, 1, 256>}, {transform_indices = @transform_19, window_bounds = array<i64: 1, 1, 256>}, {transform_indices = @transform_20, window_bounds = array<i64: 1, 16, 256>}]} {
    %c0_i32 = arith.constant 0 : i32
    %0 = arith.cmpi eq, %arg1, %c0_i32 : i32
    %1 = arith.extui %0 : i1 to i32
    %c0_i32_0 = arith.constant 0 : i32
    %2 = arith.cmpi ne, %1, %c0_i32_0 : i32
    scf.if %2 {
      %c0_83 = arith.constant 0 : index
      %c0_84 = arith.constant 0 : index
      %c0_85 = arith.constant 0 : index
      %156 = vector.load %arg2[%c0_83, %c0_84, %c0_85] : memref<1x16x256xf32, #tpu.memory_space<vmem>>, vector<1x16x256xf32>
      %157 = vector.shape_cast %156 : vector<1x16x256xf32> to vector<16x256xf32>
      %c0_86 = arith.constant 0 : index
      %c0_87 = arith.constant 0 : index
      %158 = vector.load %arg4[%c0_86, %c0_87] : memref<1x256xf32, #tpu.memory_space<vmem>>, vector<1x256xf32>
      %c0_88 = arith.constant 0 : index
      %c0_89 = arith.constant 0 : index
      %159 = vector.load %arg5[%c0_88, %c0_89] : memref<1x256xf32, #tpu.memory_space<vmem>>, vector<1x256xf32>
      %cst_90 = arith.constant dense<0.000000e+00> : vector<16xf32>
      %160 = vector.multi_reduction <add>, %157, %cst_90 [1] : vector<16x256xf32> to vector<16xf32>
      %161 = vector.shape_cast %160 : vector<16xf32> to vector<16x1xf32>
      %cst_91 = arith.constant 2.560000e+02 : f32
      %162 = vector.broadcast %cst_91 : f32 to vector<16x1xf32>
      %163 = arith.divf %161, %162 : vector<16x1xf32>
      %164 = vector.broadcast %163 : vector<16x1xf32> to vector<16x256xf32>
      %165 = arith.subf %157, %164 : vector<16x256xf32>
      %166 = arith.mulf %165, %165 : vector<16x256xf32>
      %cst_92 = arith.constant dense<0.000000e+00> : vector<16xf32>
      %167 = vector.multi_reduction <add>, %166, %cst_92 [1] : vector<16x256xf32> to vector<16xf32>
      %168 = vector.shape_cast %167 : vector<16xf32> to vector<16x1xf32>
      %cst_93 = arith.constant 2.560000e+02 : f32
      %169 = vector.broadcast %cst_93 : f32 to vector<16x1xf32>
      %170 = arith.divf %168, %169 : vector<16x1xf32>
      %171 = vector.broadcast %163 : vector<16x1xf32> to vector<16x256xf32>
      %172 = arith.subf %157, %171 : vector<16x256xf32>
      %cst_94 = arith.constant 9.99999996E-13 : f32
      %173 = vector.broadcast %cst_94 : f32 to vector<16x1xf32>
      %174 = arith.addf %170, %173 : vector<16x1xf32>
      %175 = math.rsqrt %174 : vector<16x1xf32>
      %176 = vector.broadcast %175 : vector<16x1xf32> to vector<16x256xf32>
      %177 = arith.mulf %172, %176 : vector<16x256xf32>
      %178 = vector.broadcast %158 : vector<1x256xf32> to vector<16x256xf32>
      %179 = arith.mulf %177, %178 : vector<16x256xf32>
      %180 = vector.broadcast %159 : vector<1x256xf32> to vector<16x256xf32>
      %181 = arith.addf %179, %180 : vector<16x256xf32>
      %c0_95 = arith.constant 0 : index
      %c0_96 = arith.constant 0 : index
      %c0_97 = arith.constant 0 : index
      %182 = vector.load %arg22[%c0_95, %c0_96, %c0_97] : memref<1x16x256xf32, #tpu.memory_space<vmem>>, vector<1x16x256xf32>
      %183 = vector.shape_cast %182 : vector<1x16x256xf32> to vector<16x256xf32>
      %184 = vector.shape_cast %181 : vector<16x256xf32> to vector<1x16x256xf32>
      tpu.vector_store %arg22[%c0_95, %c0_96, %c0_97], %184 {strides = array<i32>} : memref<1x16x256xf32, #tpu.memory_space<vmem>>, vector<1x16x256xf32>,
    } else {
    }
    %c0 = arith.constant 0 : index
    %c0_1 = arith.constant 0 : index
    %c0_2 = arith.constant 0 : index
    %3 = vector.load %arg22[%c0, %c0_1, %c0_2] : memref<1x16x256xf32, #tpu.memory_space<vmem>>, vector<1x16x256xf32>
    %4 = vector.shape_cast %3 : vector<1x16x256xf32> to vector<16x256xf32>
    %c0_3 = arith.constant 0 : index
    %c0_4 = arith.constant 0 : index
    %c0_5 = arith.constant 0 : index
    %5 = vector.load %arg3[%c0_3, %c0_4, %c0_5] : memref<1x1x16xf32, #tpu.memory_space<vmem>>, vector<1x1x16xf32>
    %6 = vector.shape_cast %5 : vector<1x1x16xf32> to vector<1x16xf32>
    %cst = arith.constant 1.000000e+00 : f32
    %7 = vector.broadcast %cst : f32 to vector<1x16xf32>
    %8 = arith.subf %6, %7 : vector<1x16xf32>
    %cst_6 = arith.constant 1.000000e+09 : f32
    %9 = vector.broadcast %cst_6 : f32 to vector<1x16xf32>
    %10 = arith.mulf %8, %9 : vector<1x16xf32>
    %11 = arith.truncf %4 : vector<16x256xf32> to vector<16x256xbf16>
    %c0_7 = arith.constant 0 : index
    %c0_8 = arith.constant 0 : index
    %c0_9 = arith.constant 0 : index
    %12 = vector.load %arg6[%c0_7, %c0_8, %c0_9] : memref<1x256x256xbf16, #tpu.memory_space<vmem>>, vector<1x256x256xbf16>
    %13 = vector.shape_cast %12 : vector<1x256x256xbf16> to vector<256x256xbf16>
    %cst_10 = arith.constant dense<0.000000e+00> : vector<16x256xf32>
    %14 = tpu.matmul %11, %13, %cst_10 {dimension_numbers = #tpu.dot_dimension_numbers<[1], [0], [0], [1], [0, 0, 1, 1], [], []>} : vector<16x256xbf16>, vector<256x256xbf16>, vector<16x256xf32> -> vector<16x256xf32>
    %c0_11 = arith.constant 0 : index
    %c0_12 = arith.constant 0 : index
    %c0_13 = arith.constant 0 : index
    %15 = vector.load %arg7[%c0_11, %c0_12, %c0_13] : memref<1x1x256xf32, #tpu.memory_space<vmem>>, vector<1x1x256xf32>
    %16 = vector.shape_cast %15 : vector<1x1x256xf32> to vector<1x256xf32>
    %17 = vector.broadcast %16 : vector<1x256xf32> to vector<16x256xf32>
    %18 = arith.addf %14, %17 : vector<16x256xf32>
    %c0_14 = arith.constant 0 : index
    %c0_15 = arith.constant 0 : index
    %c0_16 = arith.constant 0 : index
    %19 = vector.load %arg8[%c0_14, %c0_15, %c0_16] : memref<1x256x256xbf16, #tpu.memory_space<vmem>>, vector<1x256x256xbf16>
    %20 = vector.shape_cast %19 : vector<1x256x256xbf16> to vector<256x256xbf16>
    %cst_17 = arith.constant dense<0.000000e+00> : vector<16x256xf32>
    %21 = tpu.matmul %11, %20, %cst_17 {dimension_numbers = #tpu.dot_dimension_numbers<[1], [0], [0], [1], [0, 0, 1, 1], [], []>} : vector<16x256xbf16>, vector<256x256xbf16>, vector<16x256xf32> -> vector<16x256xf32>
    %c0_18 = arith.constant 0 : index
    %c0_19 = arith.constant 0 : index
    %c0_20 = arith.constant 0 : index
    %22 = vector.load %arg9[%c0_18, %c0_19, %c0_20] : memref<1x1x256xf32, #tpu.memory_space<vmem>>, vector<1x1x256xf32>
    %23 = vector.shape_cast %22 : vector<1x1x256xf32> to vector<1x256xf32>
    %24 = vector.broadcast %23 : vector<1x256xf32> to vector<16x256xf32>
    %25 = arith.addf %21, %24 : vector<16x256xf32>
    %c0_21 = arith.constant 0 : index
    %c0_22 = arith.constant 0 : index
    %c0_23 = arith.constant 0 : index
    %26 = vector.load %arg10[%c0_21, %c0_22, %c0_23] : memref<1x256x256xbf16, #tpu.memory_space<vmem>>, vector<1x256x256xbf16>
    %27 = vector.shape_cast %26 : vector<1x256x256xbf16> to vector<256x256xbf16>
    %cst_24 = arith.constant dense<0.000000e+00> : vector<16x256xf32>
    %28 = tpu.matmul %11, %27, %cst_24 {dimension_numbers = #tpu.dot_dimension_numbers<[1], [0], [0], [1], [0, 0, 1, 1], [], []>} : vector<16x256xbf16>, vector<256x256xbf16>, vector<16x256xf32> -> vector<16x256xf32>
    %c0_25 = arith.constant 0 : index
    %c0_26 = arith.constant 0 : index
    %c0_27 = arith.constant 0 : index
    %29 = vector.load %arg11[%c0_25, %c0_26, %c0_27] : memref<1x1x256xf32, #tpu.memory_space<vmem>>, vector<1x1x256xf32>
    %30 = vector.shape_cast %29 : vector<1x1x256xf32> to vector<1x256xf32>
    %31 = vector.broadcast %30 : vector<1x256xf32> to vector<16x256xf32>
    %32 = arith.addf %28, %31 : vector<16x256xf32>
    %33 = vector.shape_cast %18 : vector<16x256xf32> to vector<16x2x128xf32>
    %34 = tpu.transpose %33, [1, 0, 2] : vector<16x2x128xf32> -> vector<2x16x128xf32>
    %35 = vector.shape_cast %25 : vector<16x256xf32> to vector<16x2x128xf32>
    %36 = tpu.transpose %35, [1, 0, 2] : vector<16x2x128xf32> -> vector<2x16x128xf32>
    %37 = vector.shape_cast %32 : vector<16x256xf32> to vector<16x2x128xf32>
    %38 = tpu.transpose %37, [1, 0, 2] : vector<16x2x128xf32> -> vector<2x16x128xf32>
    %39 = arith.truncf %34 : vector<2x16x128xf32> to vector<2x16x128xbf16>
    %40 = arith.truncf %36 : vector<2x16x128xf32> to vector<2x16x128xbf16>
    "tpu.trace_start"() <{level = 10 : i32, message = "hqd,hkd->hqk"}> : () -> ()
    %cst_28 = arith.constant dense<0.000000e+00> : vector<2x16x16xf32>
    %41 = tpu.matmul %39, %40, %cst_28 {dimension_numbers = #tpu.dot_dimension_numbers<[2], [2], [1], [1], [0, 0, 0, 1, 1, 1], [0], [0]>} : vector<2x16x128xbf16>, vector<2x16x128xbf16>, vector<2x16x16xf32> -> vector<2x16x16xf32>
    "tpu.trace_stop"() : () -> ()
    %cst_29 = arith.constant 0.0883883461 : f32
    %42 = vector.broadcast %cst_29 : f32 to vector<2x16x16xf32>
    %43 = arith.mulf %41, %42 : vector<2x16x16xf32>
    %44 = vector.shape_cast %10 : vector<1x16xf32> to vector<1x1x16xf32>
    %45 = vector.broadcast %44 : vector<1x1x16xf32> to vector<2x16x16xf32>
    %46 = arith.addf %43, %45 : vector<2x16x16xf32>
    %cst_30 = arith.constant dense<0xFF800000> : vector<2x16xf32>
    %47 = vector.multi_reduction <maximumf>, %46, %cst_30 [2] : vector<2x16x16xf32> to vector<2x16xf32>
    %48 = vector.shape_cast %47 : vector<2x16xf32> to vector<2x16x1xf32>
    %49 = vector.broadcast %48 : vector<2x16x1xf32> to vector<2x16x16xf32>
    %50 = arith.subf %46, %49 : vector<2x16x16xf32>
    %51 = math.exp %50 : vector<2x16x16xf32>
    %cst_31 = arith.constant dense<0.000000e+00> : vector<2x16xf32>
    %52 = vector.multi_reduction <add>, %51, %cst_31 [2] : vector<2x16x16xf32> to vector<2x16xf32>
    %53 = vector.shape_cast %52 : vector<2x16xf32> to vector<2x16x1xf32>
    %54 = tpu.reciprocal %53 {approx = true} : vector<2x16x1xf32> -> vector<2x16x1xf32>
    %55 = vector.broadcast %54 : vector<2x16x1xf32> to vector<2x16x16xf32>
    %56 = arith.mulf %51, %55 : vector<2x16x16xf32>
    %57 = arith.truncf %56 : vector<2x16x16xf32> to vector<2x16x16xbf16>
    %58 = arith.truncf %38 : vector<2x16x128xf32> to vector<2x16x128xbf16>
    "tpu.trace_start"() <{level = 10 : i32, message = "hqk,hkd->hqd"}> : () -> ()
    %cst_32 = arith.constant dense<0.000000e+00> : vector<2x16x128xf32>
    %59 = tpu.matmul %57, %58, %cst_32 {dimension_numbers = #tpu.dot_dimension_numbers<[2], [1], [1], [2], [0, 0, 0, 1, 1, 2], [0], [0]>} : vector<2x16x16xbf16>, vector<2x16x128xbf16>, vector<2x16x128xf32> -> vector<2x16x128xf32>
    "tpu.trace_stop"() : () -> ()
    %60 = tpu.transpose %59, [1, 0, 2] : vector<2x16x128xf32> -> vector<16x2x128xf32>
    %61 = vector.shape_cast %60 : vector<16x2x128xf32> to vector<16x256xf32>
    %62 = arith.truncf %61 : vector<16x256xf32> to vector<16x256xbf16>
    %c0_33 = arith.constant 0 : index
    %c0_34 = arith.constant 0 : index
    %c0_35 = arith.constant 0 : index
    %63 = vector.load %arg12[%c0_33, %c0_34, %c0_35] : memref<1x256x256xbf16, #tpu.memory_space<vmem>>, vector<1x256x256xbf16>
    %64 = vector.shape_cast %63 : vector<1x256x256xbf16> to vector<256x256xbf16>
    %cst_36 = arith.constant dense<0.000000e+00> : vector<16x256xf32>
    %65 = tpu.matmul %62, %64, %cst_36 {dimension_numbers = #tpu.dot_dimension_numbers<[1], [0], [0], [1], [0, 0, 1, 1], [], []>} : vector<16x256xbf16>, vector<256x256xbf16>, vector<16x256xf32> -> vector<16x256xf32>
    %c0_37 = arith.constant 0 : index
    %c0_38 = arith.constant 0 : index
    %c0_39 = arith.constant 0 : index
    %66 = vector.load %arg13[%c0_37, %c0_38, %c0_39] : memref<1x1x256xf32, #tpu.memory_space<vmem>>, vector<1x1x256xf32>
    %67 = vector.shape_cast %66 : vector<1x1x256xf32> to vector<1x256xf32>
    %68 = vector.broadcast %67 : vector<1x256xf32> to vector<16x256xf32>
    %69 = arith.addf %65, %68 : vector<16x256xf32>
    %70 = arith.addf %4, %69 : vector<16x256xf32>
    %c0_40 = arith.constant 0 : index
    %c0_41 = arith.constant 0 : index
    %c0_42 = arith.constant 0 : index
    %71 = vector.load %arg14[%c0_40, %c0_41, %c0_42] : memref<1x1x256xf32, #tpu.memory_space<vmem>>, vector<1x1x256xf32>
    %72 = vector.shape_cast %71 : vector<1x1x256xf32> to vector<1x256xf32>
    %c0_43 = arith.constant 0 : index
    %c0_44 = arith.constant 0 : index
    %c0_45 = arith.constant 0 : index
    %73 = vector.load %arg15[%c0_43, %c0_44, %c0_45] : memref<1x1x256xf32, #tpu.memory_space<vmem>>, vector<1x1x256xf32>
    %74 = vector.shape_cast %73 : vector<1x1x256xf32> to vector<1x256xf32>
    %cst_46 = arith.constant dense<0.000000e+00> : vector<16xf32>
    %75 = vector.multi_reduction <add>, %70, %cst_46 [1] : vector<16x256xf32> to vector<16xf32>
    %76 = vector.shape_cast %75 : vector<16xf32> to vector<16x1xf32>
    %cst_47 = arith.constant 2.560000e+02 : f32
    %77 = vector.broadcast %cst_47 : f32 to vector<16x1xf32>
    %78 = arith.divf %76, %77 : vector<16x1xf32>
    %79 = vector.broadcast %78 : vector<16x1xf32> to vector<16x256xf32>
    %80 = arith.subf %70, %79 : vector<16x256xf32>
    %81 = arith.mulf %80, %80 : vector<16x256xf32>
    %cst_48 = arith.constant dense<0.000000e+00> : vector<16xf32>
    %82 = vector.multi_reduction <add>, %81, %cst_48 [1] : vector<16x256xf32> to vector<16xf32>
    %83 = vector.shape_cast %82 : vector<16xf32> to vector<16x1xf32>
    %cst_49 = arith.constant 2.560000e+02 : f32
    %84 = vector.broadcast %cst_49 : f32 to vector<16x1xf32>
    %85 = arith.divf %83, %84 : vector<16x1xf32>
    %86 = vector.broadcast %78 : vector<16x1xf32> to vector<16x256xf32>
    %87 = arith.subf %70, %86 : vector<16x256xf32>
    %cst_50 = arith.constant 9.99999996E-13 : f32
    %88 = vector.broadcast %cst_50 : f32 to vector<16x1xf32>
    %89 = arith.addf %85, %88 : vector<16x1xf32>
    %90 = math.rsqrt %89 : vector<16x1xf32>
    %91 = vector.broadcast %90 : vector<16x1xf32> to vector<16x256xf32>
    %92 = arith.mulf %87, %91 : vector<16x256xf32>
    %93 = vector.broadcast %72 : vector<1x256xf32> to vector<16x256xf32>
    %94 = arith.mulf %92, %93 : vector<16x256xf32>
    %95 = vector.broadcast %74 : vector<1x256xf32> to vector<16x256xf32>
    %96 = arith.addf %94, %95 : vector<16x256xf32>
    %97 = arith.truncf %96 : vector<16x256xf32> to vector<16x256xbf16>
    %c0_51 = arith.constant 0 : index
    %c0_52 = arith.constant 0 : index
    %c0_53 = arith.constant 0 : index
    %98 = vector.load %arg16[%c0_51, %c0_52, %c0_53] : memref<1x256x512xbf16, #tpu.memory_space<vmem>>, vector<1x256x512xbf16>
    %99 = vector.shape_cast %98 : vector<1x256x512xbf16> to vector<256x512xbf16>
    %cst_54 = arith.constant dense<0.000000e+00> : vector<16x512xf32>
    %100 = tpu.matmul %97, %99, %cst_54 {dimension_numbers = #tpu.dot_dimension_numbers<[1], [0], [0], [1], [0, 0, 1, 1], [], []>} : vector<16x256xbf16>, vector<256x512xbf16>, vector<16x512xf32> -> vector<16x512xf32>
    %c0_55 = arith.constant 0 : index
    %c0_56 = arith.constant 0 : index
    %c0_57 = arith.constant 0 : index
    %101 = vector.load %arg17[%c0_55, %c0_56, %c0_57] : memref<1x1x512xf32, #tpu.memory_space<vmem>>, vector<1x1x512xf32>
    %102 = vector.shape_cast %101 : vector<1x1x512xf32> to vector<1x512xf32>
    %103 = vector.broadcast %102 : vector<1x512xf32> to vector<16x512xf32>
    %104 = arith.addf %100, %103 : vector<16x512xf32>
    %cst_58 = arith.constant 5.000000e-01 : f32
    %105 = vector.broadcast %cst_58 : f32 to vector<16x512xf32>
    %106 = arith.mulf %105, %104 : vector<16x512xf32>
    %cst_59 = arith.constant 4.471500e-02 : f32
    %107 = vector.broadcast %cst_59 : f32 to vector<16x512xf32>
    %108 = arith.mulf %107, %104 : vector<16x512xf32>
    %109 = arith.mulf %108, %104 : vector<16x512xf32>
    %110 = arith.mulf %109, %104 : vector<16x512xf32>
    %111 = arith.addf %104, %110 : vector<16x512xf32>
    %cst_60 = arith.constant 0.797884583 : f32
    %112 = vector.broadcast %cst_60 : f32 to vector<16x512xf32>
    %113 = arith.mulf %112, %111 : vector<16x512xf32>
    %114 = math.tanh %113 : vector<16x512xf32>
    %cst_61 = arith.constant 1.000000e+00 : f32
    %115 = vector.broadcast %cst_61 : f32 to vector<16x512xf32>
    %116 = arith.addf %115, %114 : vector<16x512xf32>
    %117 = arith.mulf %106, %116 : vector<16x512xf32>
    %118 = arith.truncf %117 : vector<16x512xf32> to vector<16x512xbf16>
    %c0_62 = arith.constant 0 : index
    %c0_63 = arith.constant 0 : index
    %c0_64 = arith.constant 0 : index
    %119 = vector.load %arg18[%c0_62, %c0_63, %c0_64] : memref<1x512x256xbf16, #tpu.memory_space<vmem>>, vector<1x512x256xbf16>
    %120 = vector.shape_cast %119 : vector<1x512x256xbf16> to vector<512x256xbf16>
    %cst_65 = arith.constant dense<0.000000e+00> : vector<16x256xf32>
    %121 = tpu.matmul %118, %120, %cst_65 {dimension_numbers = #tpu.dot_dimension_numbers<[1], [0], [0], [1], [0, 0, 1, 1], [], []>} : vector<16x512xbf16>, vector<512x256xbf16>, vector<16x256xf32> -> vector<16x256xf32>
    %c0_66 = arith.constant 0 : index
    %c0_67 = arith.constant 0 : index
    %c0_68 = arith.constant 0 : index
    %122 = vector.load %arg19[%c0_66, %c0_67, %c0_68] : memref<1x1x256xf32, #tpu.memory_space<vmem>>, vector<1x1x256xf32>
    %123 = vector.shape_cast %122 : vector<1x1x256xf32> to vector<1x256xf32>
    %124 = vector.broadcast %123 : vector<1x256xf32> to vector<16x256xf32>
    %125 = arith.addf %121, %124 : vector<16x256xf32>
    %126 = arith.addf %96, %125 : vector<16x256xf32>
    %c0_69 = arith.constant 0 : index
    %c0_70 = arith.constant 0 : index
    %c0_71 = arith.constant 0 : index
    %127 = vector.load %arg20[%c0_69, %c0_70, %c0_71] : memref<1x1x256xf32, #tpu.memory_space<vmem>>, vector<1x1x256xf32>
    %128 = vector.shape_cast %127 : vector<1x1x256xf32> to vector<1x256xf32>
    %c0_72 = arith.constant 0 : index
    %c0_73 = arith.constant 0 : index
    %c0_74 = arith.constant 0 : index
    %129 = vector.load %arg21[%c0_72, %c0_73, %c0_74] : memref<1x1x256xf32, #tpu.memory_space<vmem>>, vector<1x1x256xf32>
    %130 = vector.shape_cast %129 : vector<1x1x256xf32> to vector<1x256xf32>
    %cst_75 = arith.constant dense<0.000000e+00> : vector<16xf32>
    %131 = vector.multi_reduction <add>, %126, %cst_75 [1] : vector<16x256xf32> to vector<16xf32>
    %132 = vector.shape_cast %131 : vector<16xf32> to vector<16x1xf32>
    %cst_76 = arith.constant 2.560000e+02 : f32
    %133 = vector.broadcast %cst_76 : f32 to vector<16x1xf32>
    %134 = arith.divf %132, %133 : vector<16x1xf32>
    %135 = vector.broadcast %134 : vector<16x1xf32> to vector<16x256xf32>
    %136 = arith.subf %126, %135 : vector<16x256xf32>
    %137 = arith.mulf %136, %136 : vector<16x256xf32>
    %cst_77 = arith.constant dense<0.000000e+00> : vector<16xf32>
    %138 = vector.multi_reduction <add>, %137, %cst_77 [1] : vector<16x256xf32> to vector<16xf32>
    %139 = vector.shape_cast %138 : vector<16xf32> to vector<16x1xf32>
    %cst_78 = arith.constant 2.560000e+02 : f32
    %140 = vector.broadcast %cst_78 : f32 to vector<16x1xf32>
    %141 = arith.divf %139, %140 : vector<16x1xf32>
    %142 = vector.broadcast %134 : vector<16x1xf32> to vector<16x256xf32>
    %143 = arith.subf %126, %142 : vector<16x256xf32>
    %cst_79 = arith.constant 9.99999996E-13 : f32
    %144 = vector.broadcast %cst_79 : f32 to vector<16x1xf32>
    %145 = arith.addf %141, %144 : vector<16x1xf32>
    %146 = math.rsqrt %145 : vector<16x1xf32>
    %147 = vector.broadcast %146 : vector<16x1xf32> to vector<16x256xf32>
    %148 = arith.mulf %143, %147 : vector<16x256xf32>
    %149 = vector.broadcast %128 : vector<1x256xf32> to vector<16x256xf32>
    %150 = arith.mulf %148, %149 : vector<16x256xf32>
    %151 = vector.broadcast %130 : vector<1x256xf32> to vector<16x256xf32>
    %152 = arith.addf %150, %151 : vector<16x256xf32>
    %c0_80 = arith.constant 0 : index
    %c0_81 = arith.constant 0 : index
    %c0_82 = arith.constant 0 : index
    %153 = vector.load %arg22[%c0_80, %c0_81, %c0_82] : memref<1x16x256xf32, #tpu.memory_space<vmem>>, vector<1x16x256xf32>
    %154 = vector.shape_cast %153 : vector<1x16x256xf32> to vector<16x256xf32>
    %155 = vector.shape_cast %152 : vector<16x256xf32> to vector<1x16x256xf32>
    tpu.vector_store %arg22[%c0_80, %c0_81, %c0_82], %155 {strides = array<i32>} : memref<1x16x256xf32, #tpu.memory_space<vmem>>, vector<1x16x256xf32>,
    return
  }
  func.func @transform_0(%arg0: i32, %arg1: i32) -> (i32, i32, i32) {
    %c0_i32 = arith.constant 0 : i32
    %c0_i32_0 = arith.constant 0 : i32
    %c0_i32_1 = arith.constant 0 : i32
    return %arg0, %c0_i32, %c0_i32_0 : i32, i32, i32
  }
  func.func @transform_1(%arg0: i32, %arg1: i32) -> (i32, i32, i32) {
    %c0_i32 = arith.constant 0 : i32
    %c0_i32_0 = arith.constant 0 : i32
    %c0_i32_1 = arith.constant 0 : i32
    return %arg0, %c0_i32, %c0_i32_0 : i32, i32, i32
  }
  func.func @transform_2(%arg0: i32, %arg1: i32) -> (i32, i32) {
    %c0_i32 = arith.constant 0 : i32
    %c0_i32_0 = arith.constant 0 : i32
    %c0_i32_1 = arith.constant 0 : i32
    return %c0_i32, %c0_i32_0 : i32, i32
  }
  func.func @transform_3(%arg0: i32, %arg1: i32) -> (i32, i32) {
    %c0_i32 = arith.constant 0 : i32
    %c0_i32_0 = arith.constant 0 : i32
    %c0_i32_1 = arith.constant 0 : i32
    return %c0_i32, %c0_i32_0 : i32, i32
  }
  func.func @transform_4(%arg0: i32, %arg1: i32) -> (i32, i32, i32) {
    %c0_i32 = arith.constant 0 : i32
    %c0_i32_0 = arith.constant 0 : i32
    %c0_i32_1 = arith.constant 0 : i32
    return %arg1, %c0_i32, %c0_i32_0 : i32, i32, i32
  }
  func.func @transform_5(%arg0: i32, %arg1: i32) -> (i32, i32, i32) {
    %c0_i32 = arith.constant 0 : i32
    %c0_i32_0 = arith.constant 0 : i32
    %c0_i32_1 = arith.constant 0 : i32
    return %arg1, %c0_i32, %c0_i32_0 : i32, i32, i32
  }
  func.func @transform_6(%arg0: i32, %arg1: i32) -> (i32, i32, i32) {
    %c0_i32 = arith.constant 0 : i32
    %c0_i32_0 = arith.constant 0 : i32
    %c0_i32_1 = arith.constant 0 : i32
    return %arg1, %c0_i32, %c0_i32_0 : i32, i32, i32
  }
  func.func @transform_7(%arg0: i32, %arg1: i32) -> (i32, i32, i32) {
    %c0_i32 = arith.constant 0 : i32
    %c0_i32_0 = arith.constant 0 : i32
    %c0_i32_1 = arith.constant 0 : i32
    return %arg1, %c0_i32, %c0_i32_0 : i32, i32, i32
  }
  func.func @transform_8(%arg0: i32, %arg1: i32) -> (i32, i32, i32) {
    %c0_i32 = arith.constant 0 : i32
    %c0_i32_0 = arith.constant 0 : i32
    %c0_i32_1 = arith.constant 0 : i32
    return %arg1, %c0_i32, %c0_i32_0 : i32, i32, i32
  }
  func.func @transform_9(%arg0: i32, %arg1: i32) -> (i32, i32, i32) {
    %c0_i32 = arith.constant 0 : i32
    %c0_i32_0 = arith.constant 0 : i32
    %c0_i32_1 = arith.constant 0 : i32
    return %arg1, %c0_i32, %c0_i32_0 : i32, i32, i32
  }
  func.func @transform_10(%arg0: i32, %arg1: i32) -> (i32, i32, i32) {
    %c0_i32 = arith.constant 0 : i32
    %c0_i32_0 = arith.constant 0 : i32
    %c0_i32_1 = arith.constant 0 : i32
    return %arg1, %c0_i32, %c0_i32_0 : i32, i32, i32
  }
  func.func @transform_11(%arg0: i32, %arg1: i32) -> (i32, i32, i32) {
    %c0_i32 = arith.constant 0 : i32
    %c0_i32_0 = arith.constant 0 : i32
    %c0_i32_1 = arith.constant 0 : i32
    return %arg1, %c0_i32, %c0_i32_0 : i32, i32, i32
  }
  func.func @transform_12(%arg0: i32, %arg1: i32) -> (i32, i32, i32) {
    %c0_i32 = arith.constant 0 : i32
    %c0_i32_0 = arith.constant 0 : i32
    %c0_i32_1 = arith.constant 0 : i32
    return %arg1, %c0_i32, %c0_i32_0 : i32, i32, i32
  }
  func.func @transform_13(%arg0: i32, %arg1: i32) -> (i32, i32, i32) {
    %c0_i32 = arith.constant 0 : i32
    %c0_i32_0 = arith.constant 0 : i32
    %c0_i32_1 = arith.constant 0 : i32
    return %arg1, %c0_i32, %c0_i32_0 : i32, i32, i32
  }
  func.func @transform_14(%arg0: i32, %arg1: i32) -> (i32, i32, i32) {
    %c0_i32 = arith.constant 0 : i32
    %c0_i32_0 = arith.constant 0 : i32
    %c0_i32_1 = arith.constant 0 : i32
    return %arg1, %c0_i32, %c0_i32_0 : i32, i32, i32
  }
  func.func @transform_15(%arg0: i32, %arg1: i32) -> (i32, i32, i32) {
    %c0_i32 = arith.constant 0 : i32
    %c0_i32_0 = arith.constant 0 : i32
    %c0_i32_1 = arith.constant 0 : i32
    return %arg1, %c0_i32, %c0_i32_0 : i32, i32, i32
  }
  func.func @transform_16(%arg0: i32, %arg1: i32) -> (i32, i32, i32) {
    %c0_i32 = arith.constant 0 : i32
    %c0_i32_0 = arith.constant 0 : i32
    %c0_i32_1 = arith.constant 0 : i32
    return %arg1, %c0_i32, %c0_i32_0 : i32, i32, i32
  }
  func.func @transform_17(%arg0: i32, %arg1: i32) -> (i32, i32, i32) {
    %c0_i32 = arith.constant 0 : i32
    %c0_i32_0 = arith.constant 0 : i32
    %c0_i32_1 = arith.constant 0 : i32
    return %arg1, %c0_i32, %c0_i32_0 : i32, i32, i32
  }
  func.func @transform_18(%arg0: i32, %arg1: i32) -> (i32, i32, i32) {
    %c0_i32 = arith.constant 0 : i32
    %c0_i32_0 = arith.constant 0 : i32
    %c0_i32_1 = arith.constant 0 : i32
    return %arg1, %c0_i32, %c0_i32_0 : i32, i32, i32
  }
  func.func @transform_19(%arg0: i32, %arg1: i32) -> (i32, i32, i32) {
    %c0_i32 = arith.constant 0 : i32
    %c0_i32_0 = arith.constant 0 : i32
    %c0_i32_1 = arith.constant 0 : i32
    return %arg1, %c0_i32, %c0_i32_0 : i32, i32, i32
  }
  func.func @transform_20(%arg0: i32, %arg1: i32) -> (i32, i32, i32) {
    %c0_i32 = arith.constant 0 : i32
    %c0_i32_0 = arith.constant 0 : i32
    %c0_i32_1 = arith.constant 0 : i32
    return %arg0, %c0_i32, %c0_i32_0 : i32, i32, i32
  }
}

</mosaic_0001>

<llo_original>
// kernel: tpu_custom_call.1
$region0: #{tpu_custom_call.1}
  #allocation0 [shape = 'u32[]', space=smem, size = 0x4, offset = 0x4, fixed_abs, tag = 'smem constant byte address 0x4 - core index']
  #allocation1 [shape = 'u32[72,128]{1,0:T(1,128)}', space=vmem, size = 0x9000, scoped, tag = 'internal scratch']
  %s0 = inlined_call_operand.hbm [shape: f32[2,16,256], index: 0, kind: input, shape index: {}]
  %s1 = inlined_call_operand.hbm [shape: f32[2,1,16], index: 1, kind: input, shape index: {}]
  %s2 = inlined_call_operand.hbm [shape: f32[1,256], index: 2, kind: input, shape index: {}]
  %s3 = inlined_call_operand.hbm [shape: f32[1,256], index: 3, kind: input, shape index: {}]
  %s4 = inlined_call_operand.hbm [shape: bf16[2,256,256], index: 4, kind: input, shape index: {}]
  %s5 = inlined_call_operand.vmem [shape: f32[2,1,256], index: 5, kind: input, shape index: {}]
  %s6 = inlined_call_operand.hbm [shape: bf16[2,256,256], index: 6, kind: input, shape index: {}]
  %s7 = inlined_call_operand.hbm [shape: f32[2,1,256], index: 7, kind: input, shape index: {}]
  %s8 = inlined_call_operand.hbm [shape: bf16[2,256,256], index: 8, kind: input, shape index: {}]
  %s9 = inlined_call_operand.hbm [shape: f32[2,1,256], index: 9, kind: input, shape index: {}]
  %s10 = inlined_call_operand.hbm [shape: bf16[2,256,256], index: 10, kind: input, shape index: {}]
  %s11 = inlined_call_operand.hbm [shape: f32[2,1,256], index: 11, kind: input, shape index: {}]
  %s12 = inlined_call_operand.hbm [shape: f32[2,1,256], index: 12, kind: input, shape index: {}]
  %s13 = inlined_call_operand.hbm [shape: f32[2,1,256], index: 13, kind: input, shape index: {}]
  %s14 = inlined_call_operand.hbm [shape: bf16[2,256,512], index: 14, kind: input, shape index: {}]
  %s15 = inlined_call_operand.vmem [shape: f32[2,1,512], index: 15, kind: input, shape index: {}]
  %s16 = inlined_call_operand.hbm [shape: bf16[2,512,256], index: 16, kind: input, shape index: {}]
  %s17 = inlined_call_operand.vmem [shape: f32[2,1,256], index: 17, kind: input, shape index: {}]
  %s18 = inlined_call_operand.hbm [shape: f32[2,1,256], index: 18, kind: input, shape index: {}]
  %s19 = inlined_call_operand.hbm [shape: f32[2,1,256], index: 19, kind: input, shape index: {}]
  %s20 = inlined_call_operand.hbm [shape: f32[2,16,256], index: 20, kind: output, shape index: {}]
  %s21 = sld [smem:[#allocation0]]
  $region185: #{tpu_custom_call.1} parent=0
    _
  %s23 = ssub.s32 1, %s21
  %s24 = scalar_select 0, %s23, %s21
  $region1: #{tpu_custom_call.1} parent=0
    #allocation2 [shape = 'u8[32768]{0}', space=vmem, size = 0x8000, scoped, tag = 'input window, operand 0']
    #allocation3 [shape = 's32[2]{0}', space=sflag, size = 0x8, scoped, tag = 'scoped memory for tpu_custom_call.1']
    #allocation4 [shape = 's32[2]{0}', space=sflag, size = 0x8, scoped, tag = 'scoped memory for tpu_custom_call.1']
    #allocation5 [shape = 'u8[1024]{0}', space=vmem, size = 0x400, scoped, tag = 'input window, operand 1']
    #allocation6 [shape = 's32[2]{0}', space=sflag, size = 0x8, scoped, tag = 'scoped memory for tpu_custom_call.1']
    #allocation7 [shape = 'u8[1024]{0}', space=vmem, size = 0x400, scoped, tag = 'input window, operand 2, single buffered']
    #allocation8 [shape = 'u8[1024]{0}', space=vmem, size = 0x400, scoped, tag = 'input window, operand 3, single buffered']
    #allocation9 [shape = 's32[1]{0}', space=sflag, size = 0x4, scoped, tag = 'scoped memory for tpu_custom_call.1']
    #allocation10 [shape = 'u8[262144]{0}', space=vmem, size = 0x40000, scoped, tag = 'input window, operand 4']
    #allocation11 [shape = 'u8[262144]{0}', space=vmem, size = 0x40000, scoped, tag = 'input window, operand 6']
    #allocation12 [shape = 'u8[2048]{0}', space=vmem, size = 0x800, scoped, tag = 'input window, operand 7']
    #allocation13 [shape = 'u8[262144]{0}', space=vmem, size = 0x40000, scoped, tag = 'input window, operand 8']
    #allocation14 [shape = 'u8[2048]{0}', space=vmem, size = 0x800, scoped, tag = 'input window, operand 9']
    #allocation15 [shape = 'u8[262144]{0}', space=vmem, size = 0x40000, scoped, tag = 'input window, operand 10']
    #allocation16 [shape = 'u8[2048]{0}', space=vmem, size = 0x800, scoped, tag = 'input window, operand 11']
    #allocation17 [shape = 'u8[2048]{0}', space=vmem, size = 0x800, scoped, tag = 'input window, operand 12']
    #allocation18 [shape = 'u8[2048]{0}', space=vmem, size = 0x800, scoped, tag = 'input window, operand 13']
    #allocation19 [shape = 'u8[524288]{0}', space=vmem, size = 0x80000, scoped, tag = 'input window, operand 14']
    #allocation20 [shape = 'u8[524288]{0}', space=vmem, size = 0x80000, scoped, tag = 'input window, operand 16']
    #allocation21 [shape = 'u8[2048]{0}', space=vmem, size = 0x800, scoped, tag = 'input window, operand 18']
    #allocation22 [shape = 'u8[2048]{0}', space=vmem, size = 0x800, scoped, tag = 'input window, operand 19']
    #allocation23 [shape = 'u8[32768]{0}', space=vmem, size = 0x8000, scoped, tag = 'output window, operand 0']
    %25 = vsyncpa [#allocation3], 0
    %s26 = scalar_lea.sflag [#allocation3], 1
    %27 = vsyncpa %s26, 0
    %28 = vsyncpa [#allocation6], 0
    %s29 = scalar_lea.sflag [#allocation6], 1
    %30 = vsyncpa %s29, 0
    %31 = vsyncpa [#allocation9], 0
    %32 = vsyncpa [#allocation4], 0
    %s33 = scalar_lea.sflag [#allocation4], 1
    %34 = vsyncpa %s33, 0
    loop: start=0, step=1, limit=6
    $region2: #{tpu_custom_call.1} parent=1 // loop_pre_header
      _
    $region3: #{tpu_custom_call.1} parent=1 // loop_header
      %s36 = sphi 0, %s40
      %p37 = scmp.ge.s32.totalorder %s36, 6
      %s43 = sphi 0, %s55
      %s44 = sphi 0, %s51
      %s45 = sphi 0, %s43
      %s46 = sphi 0, %s44
      %s47 = sphi 0, %s45
      %s48 = sphi 0, %s46
      %s58 = sphi 0, %s60
      %s61 = sphi 0, %s58
      %s62 = sphi 0, %s61
      %s78 = sphi 0, %s62
      %s84 = sphi 0, %s86
      %s87 = sphi 0, %s84
      %s88 = sphi 0, %s87
      %s104 = sphi 0, %s88
      %s108 = sphi 0, %s108
      %s110 = sphi 0, %s108
      %s111 = sphi 0, %s110
      %s125 = sphi 0, %s111
      %s129 = sphi 0, %s129
      %s131 = sphi 0, %s129
      %s132 = sphi 0, %s131
      %s146 = sphi 0, %s132
      %s152 = sphi 0, %s154
      %s155 = sphi 0, %s152
      %s156 = sphi 0, %s155
      %s172 = sphi 0, %s156
      %s178 = sphi 0, %s180
      %s181 = sphi 0, %s178
      %s182 = sphi 0, %s181
      %s198 = sphi 0, %s182
      %s204 = sphi 0, %s206
      %s207 = sphi 0, %s204
      %s208 = sphi 0, %s207
      %s224 = sphi 0, %s208
      %s230 = sphi 0, %s232
      %s233 = sphi 0, %s230
      %s234 = sphi 0, %s233
      %s250 = sphi 0, %s234
      %s256 = sphi 0, %s258
      %s259 = sphi 0, %s256
      %s260 = sphi 0, %s259
      %s276 = sphi 0, %s260
      %s282 = sphi 0, %s284
      %s285 = sphi 0, %s282
      %s286 = sphi 0, %s285
      %s302 = sphi 0, %s286
      %s308 = sphi 0, %s310
      %s311 = sphi 0, %s308
      %s312 = sphi 0, %s311
      %s328 = sphi 0, %s312
      %s334 = sphi 0, %s336
      %s337 = sphi 0, %s334
      %s338 = sphi 0, %s337
      %s354 = sphi 0, %s338
      %s360 = sphi 0, %s362
      %s363 = sphi 0, %s360
      %s364 = sphi 0, %s363
      %s380 = sphi 0, %s364
      %s386 = sphi 0, %s388
      %s389 = sphi 0, %s386
      %s390 = sphi 0, %s389
      %s406 = sphi 0, %s390
      %s412 = sphi 0, %s414
      %s415 = sphi 0, %s412
      %s416 = sphi 0, %s415
      %s432 = sphi 0, %s416
      %s438 = sphi 0, %s440
      %s441 = sphi 0, %s438
      %s442 = sphi 0, %s441
      %s458 = sphi 0, %s442
      %s464 = sphi 0, %s466
      %s467 = sphi 0, %s464
      %s468 = sphi 0, %s467
      %s484 = sphi 0, %s468
      %s490 = sphi 0, %s492
      %s493 = sphi 0, %s490
      %s494 = sphi 0, %s493
      %s510 = sphi 0, %s494
      %s516 = sphi 0, %s518
      %s519 = sphi 0, %s516
      %s520 = sphi 0, %s519
      %s536 = sphi 0, %s520
      %s542 = sphi 0, %s544
      %s545 = sphi 0, %s542
      %s546 = sphi 0, %s545
      %s562 = sphi 0, %s546
      %s568 = sphi 0, %s570
      %s571 = sphi 0, %s568
      %s572 = sphi 0, %s571
      %s588 = sphi 0, %s572
    $region4: #{tpu_custom_call.1} parent=1 // loop_header_branch
      %39 = sbr.rel (%p37) target = $region8
    $region5: #{tpu_custom_call.1} parent=1 // loop_body
      %s41 = ssub.s32 %s36, 1
      %s42 = ssub.s32 %s36, 2
      %s49 = sadd.s32 1, %s44
      %p50 = scmp.ge.s32.totalorder %s49, 2
      %s51 = scalar_select %p50, 0, %s49
      %s52 = sadd.s32 1, %s43
      %s53 = scalar_select %p50, %s52, %s43
      %p54 = scmp.ge.s32.totalorder %s53, 2
      %s55 = scalar_select %p54, 0, %s53
      %s56 = ssub.s32 %s43, %s55
      %p57 = scmp.eq.s32.totalorder %s56, 0
      %s59 = sadd.s32 %s58, 1
      %s60 = scalar_select %p57, %s58, %s59
      %p63 = pneg %p57
      %p64 = scmp.eq.s32.totalorder %s36, 3
      %p65 = por %p63, %p64
      %p66 = scmp.ne.s32.totalorder %s58, %s61
      %p67 = scmp.eq.s32.totalorder %s36, 0
      %p68 = por %p66, %p67
      %p69 = scmp.ne.s32.totalorder %s58, %s61
      %p70 = scmp.eq.s32.totalorder %s41, 3
      %p71 = por %p69, %p70
      %p72 = scmp.ne.s32.totalorder %s61, %s62
      %p73 = scmp.eq.s32.totalorder %s41, 0
      %p74 = por %p72, %p73
      %p75 = scmp.ne.s32.totalorder %s61, %s62
      %p76 = scmp.eq.s32.totalorder %s42, 3
      %p77 = por %p75, %p76
      %p79 = scmp.ne.s32.totalorder %s62, %s78
      %p80 = scmp.eq.s32.totalorder %s42, 0
      %p81 = por %p79, %p80
      %s82 = ssub.s32 %s43, %s55
      %p83 = scmp.eq.s32.totalorder %s82, 0
      %s85 = sadd.s32 %s84, 1
      %s86 = scalar_select %p83, %s84, %s85
      %p89 = pneg %p83
      %p90 = scmp.eq.s32.totalorder %s36, 3
      %p91 = por %p89, %p90
      %p92 = scmp.ne.s32.totalorder %s84, %s87
      %p93 = scmp.eq.s32.totalorder %s36, 0
      %p94 = por %p92, %p93
      %p95 = scmp.ne.s32.totalorder %s84, %s87
      %p96 = scmp.eq.s32.totalorder %s41, 3
      %p97 = por %p95, %p96
      %p98 = scmp.ne.s32.totalorder %s87, %s88
      %p99 = scmp.eq.s32.totalorder %s41, 0
      %p100 = por %p98, %p99
      %p101 = scmp.ne.s32.totalorder %s87, %s88
      %p102 = scmp.eq.s32.totalorder %s42, 3
      %p103 = por %p101, %p102
      %p105 = scmp.ne.s32.totalorder %s88, %s104
      %p106 = scmp.eq.s32.totalorder %s42, 0
      %p107 = por %p105, %p106
      %s109 = sadd.s32 %s108, 1
      %p112 = scmp.eq.s32.totalorder %s36, 3
      %p113 = scmp.ne.s32.totalorder %s108, %s110
      %p114 = scmp.eq.s32.totalorder %s36, 0
      %p115 = por %p113, %p114
      %p116 = scmp.ne.s32.totalorder %s108, %s110
      %p117 = scmp.eq.s32.totalorder %s41, 3
      %p118 = por %p116, %p117
      %p119 = scmp.ne.s32.totalorder %s110, %s111
      %p120 = scmp.eq.s32.totalorder %s41, 0
      %p121 = por %p119, %p120
      %p122 = scmp.ne.s32.totalorder %s110, %s111
      %p123 = scmp.eq.s32.totalorder %s42, 3
      %p124 = por %p122, %p123
      %p126 = scmp.ne.s32.totalorder %s111, %s125
      %p127 = scmp.eq.s32.totalorder %s42, 0
      %p128 = por %p126, %p127
      %s130 = sadd.s32 %s129, 1
      %p133 = scmp.eq.s32.totalorder %s36, 3
      %p134 = scmp.ne.s32.totalorder %s129, %s131
      %p135 = scmp.eq.s32.totalorder %s36, 0
      %p136 = por %p134, %p135
      %p137 = scmp.ne.s32.totalorder %s129, %s131
      %p138 = scmp.eq.s32.totalorder %s41, 3
      %p139 = por %p137, %p138
      %p140 = scmp.ne.s32.totalorder %s131, %s132
      %p141 = scmp.eq.s32.totalorder %s41, 0
      %p142 = por %p140, %p141
      %p143 = scmp.ne.s32.totalorder %s131, %s132
      %p144 = scmp.eq.s32.totalorder %s42, 3
      %p145 = por %p143, %p144
      %p147 = scmp.ne.s32.totalorder %s132, %s146
      %p148 = scmp.eq.s32.totalorder %s42, 0
      %p149 = por %p147, %p148
      %s150 = ssub.s32 %s44, %s51
      %p151 = scmp.eq.s32.totalorder %s150, 0
      %s153 = sadd.s32 %s152, 1
      %s154 = scalar_select %p151, %s152, %s153
      %p157 = pneg %p151
      %p158 = scmp.eq.s32.totalorder %s36, 3
      %p159 = por %p157, %p158
      %p160 = scmp.ne.s32.totalorder %s152, %s155
      %p161 = scmp.eq.s32.totalorder %s36, 0
      %p162 = por %p160, %p161
      %p163 = scmp.ne.s32.totalorder %s152, %s155
      %p164 = scmp.eq.s32.totalorder %s41, 3
      %p165 = por %p163, %p164
      %p166 = scmp.ne.s32.totalorder %s155, %s156
      %p167 = scmp.eq.s32.totalorder %s41, 0
      %p168 = por %p166, %p167
      %p169 = scmp.ne.s32.totalorder %s155, %s156
      %p170 = scmp.eq.s32.totalorder %s42, 3
      %p171 = por %p169, %p170
      %p173 = scmp.ne.s32.totalorder %s156, %s172
      %p174 = scmp.eq.s32.totalorder %s42, 0
      %p175 = por %p173, %p174
      %s176 = ssub.s32 %s44, %s51
      %p177 = scmp.eq.s32.totalorder %s176, 0
      %s179 = sadd.s32 %s178, 1
      %s180 = scalar_select %p177, %s178, %s179
      %p183 = pneg %p177
      %p184 = scmp.eq.s32.totalorder %s36, 3
      %p185 = por %p183, %p184
      %p186 = scmp.ne.s32.totalorder %s178, %s181
      %p187 = scmp.eq.s32.totalorder %s36, 0
      %p188 = por %p186, %p187
      %p189 = scmp.ne.s32.totalorder %s178, %s181
      %p190 = scmp.eq.s32.totalorder %s41, 3
      %p191 = por %p189, %p190
      %p192 = scmp.ne.s32.totalorder %s181, %s182
      %p193 = scmp.eq.s32.totalorder %s41, 0
      %p194 = por %p192, %p193
      %p195 = scmp.ne.s32.totalorder %s181, %s182
      %p196 = scmp.eq.s32.totalorder %s42, 3
      %p197 = por %p195, %p196
      %p199 = scmp.ne.s32.totalorder %s182, %s198
      %p200 = scmp.eq.s32.totalorder %s42, 0
      %p201 = por %p199, %p200
      %s202 = ssub.s32 %s44, %s51
      %p203 = scmp.eq.s32.totalorder %s202, 0
      %s205 = sadd.s32 %s204, 1
      %s206 = scalar_select %p203, %s204, %s205
      %p209 = pneg %p203
      %p210 = scmp.eq.s32.totalorder %s36, 3
      %p211 = por %p209, %p210
      %p212 = scmp.ne.s32.totalorder %s204, %s207
      %p213 = scmp.eq.s32.totalorder %s36, 0
      %p214 = por %p212, %p213
      %p215 = scmp.ne.s32.totalorder %s204, %s207
      %p216 = scmp.eq.s32.totalorder %s41, 3
      %p217 = por %p215, %p216
      %p218 = scmp.ne.s32.totalorder %s207, %s208
      %p219 = scmp.eq.s32.totalorder %s41, 0
      %p220 = por %p218, %p219
      %p221 = scmp.ne.s32.totalorder %s207, %s208
      %p222 = scmp.eq.s32.totalorder %s42, 3
      %p223 = por %p221, %p222
      %p225 = scmp.ne.s32.totalorder %s208, %s224
      %p226 = scmp.eq.s32.totalorder %s42, 0
      %p227 = por %p225, %p226
      %s228 = ssub.s32 %s44, %s51
      %p229 = scmp.eq.s32.totalorder %s228, 0
      %s231 = sadd.s32 %s230, 1
      %s232 = scalar_select %p229, %s230, %s231
      %p235 = pneg %p229
      %p236 = scmp.eq.s32.totalorder %s36, 3
      %p237 = por %p235, %p236
      %p238 = scmp.ne.s32.totalorder %s230, %s233
      %p239 = scmp.eq.s32.totalorder %s36, 0
      %p240 = por %p238, %p239
      %p241 = scmp.ne.s32.totalorder %s230, %s233
      %p242 = scmp.eq.s32.totalorder %s41, 3
      %p243 = por %p241, %p242
      %p244 = scmp.ne.s32.totalorder %s233, %s234
      %p245 = scmp.eq.s32.totalorder %s41, 0
      %p246 = por %p244, %p245
      %p247 = scmp.ne.s32.totalorder %s233, %s234
      %p248 = scmp.eq.s32.totalorder %s42, 3
      %p249 = por %p247, %p248
      %p251 = scmp.ne.s32.totalorder %s234, %s250
      %p252 = scmp.eq.s32.totalorder %s42, 0
      %p253 = por %p251, %p252
      %s254 = ssub.s32 %s44, %s51
      %p255 = scmp.eq.s32.totalorder %s254, 0
      %s257 = sadd.s32 %s256, 1
      %s258 = scalar_select %p255, %s256, %s257
      %p261 = pneg %p255
      %p262 = scmp.eq.s32.totalorder %s36, 3
      %p263 = por %p261, %p262
      %p264 = scmp.ne.s32.totalorder %s256, %s259
      %p265 = scmp.eq.s32.totalorder %s36, 0
      %p266 = por %p264, %p265
      %p267 = scmp.ne.s32.totalorder %s256, %s259
      %p268 = scmp.eq.s32.totalorder %s41, 3
      %p269 = por %p267, %p268
      %p270 = scmp.ne.s32.totalorder %s259, %s260
      %p271 = scmp.eq.s32.totalorder %s41, 0
      %p272 = por %p270, %p271
      %p273 = scmp.ne.s32.totalorder %s259, %s260
      %p274 = scmp.eq.s32.totalorder %s42, 3
      %p275 = por %p273, %p274
      %p277 = scmp.ne.s32.totalorder %s260, %s276
      %p278 = scmp.eq.s32.totalorder %s42, 0
      %p279 = por %p277, %p278
      %s280 = ssub.s32 %s44, %s51
      %p281 = scmp.eq.s32.totalorder %s280, 0
      %s283 = sadd.s32 %s282, 1
      %s284 = scalar_select %p281, %s282, %s283
      %p287 = pneg %p281
      %p288 = scmp.eq.s32.totalorder %s36, 3
      %p289 = por %p287, %p288
      %p290 = scmp.ne.s32.totalorder %s282, %s285
      %p291 = scmp.eq.s32.totalorder %s36, 0
      %p292 = por %p290, %p291
      %p293 = scmp.ne.s32.totalorder %s282, %s285
      %p294 = scmp.eq.s32.totalorder %s41, 3
      %p295 = por %p293, %p294
      %p296 = scmp.ne.s32.totalorder %s285, %s286
      %p297 = scmp.eq.s32.totalorder %s41, 0
      %p298 = por %p296, %p297
      %p299 = scmp.ne.s32.totalorder %s285, %s286
      %p300 = scmp.eq.s32.totalorder %s42, 3
      %p301 = por %p299, %p300
      %p303 = scmp.ne.s32.totalorder %s286, %s302
      %p304 = scmp.eq.s32.totalorder %s42, 0
      %p305 = por %p303, %p304
      %s306 = ssub.s32 %s44, %s51
      %p307 = scmp.eq.s32.totalorder %s306, 0
      %s309 = sadd.s32 %s308, 1
      %s310 = scalar_select %p307, %s308, %s309
      %p313 = pneg %p307
      %p314 = scmp.eq.s32.totalorder %s36, 3
      %p315 = por %p313, %p314
      %p316 = scmp.ne.s32.totalorder %s308, %s311
      %p317 = scmp.eq.s32.totalorder %s36, 0
      %p318 = por %p316, %p317
      %p319 = scmp.ne.s32.totalorder %s308, %s311
      %p320 = scmp.eq.s32.totalorder %s41, 3
      %p321 = por %p319, %p320
      %p322 = scmp.ne.s32.totalorder %s311, %s312
      %p323 = scmp.eq.s32.totalorder %s41, 0
      %p324 = por %p322, %p323
      %p325 = scmp.ne.s32.totalorder %s311, %s312
      %p326 = scmp.eq.s32.totalorder %s42, 3
      %p327 = por %p325, %p326
      %p329 = scmp.ne.s32.totalorder %s312, %s328
      %p330 = scmp.eq.s32.totalorder %s42, 0
      %p331 = por %p329, %p330
      %s332 = ssub.s32 %s44, %s51
      %p333 = scmp.eq.s32.totalorder %s332, 0
      %s335 = sadd.s32 %s334, 1
      %s336 = scalar_select %p333, %s334, %s335
      %p339 = pneg %p333
      %p340 = scmp.eq.s32.totalorder %s36, 3
      %p341 = por %p339, %p340
      %p342 = scmp.ne.s32.totalorder %s334, %s337
      %p343 = scmp.eq.s32.totalorder %s36, 0
      %p344 = por %p342, %p343
      %p345 = scmp.ne.s32.totalorder %s334, %s337
      %p346 = scmp.eq.s32.totalorder %s41, 3
      %p347 = por %p345, %p346
      %p348 = scmp.ne.s32.totalorder %s337, %s338
      %p349 = scmp.eq.s32.totalorder %s41, 0
      %p350 = por %p348, %p349
      %p351 = scmp.ne.s32.totalorder %s337, %s338
      %p352 = scmp.eq.s32.totalorder %s42, 3
      %p353 = por %p351, %p352
      %p355 = scmp.ne.s32.totalorder %s338, %s354
      %p356 = scmp.eq.s32.totalorder %s42, 0
      %p357 = por %p355, %p356
      %s358 = ssub.s32 %s44, %s51
      %p359 = scmp.eq.s32.totalorder %s358, 0
      %s361 = sadd.s32 %s360, 1
      %s362 = scalar_select %p359, %s360, %s361
      %p365 = pneg %p359
      %p366 = scmp.eq.s32.totalorder %s36, 3
      %p367 = por %p365, %p366
      %p368 = scmp.ne.s32.totalorder %s360, %s363
      %p369 = scmp.eq.s32.totalorder %s36, 0
      %p370 = por %p368, %p369
      %p371 = scmp.ne.s32.totalorder %s360, %s363
      %p372 = scmp.eq.s32.totalorder %s41, 3
      %p373 = por %p371, %p372
      %p374 = scmp.ne.s32.totalorder %s363, %s364
      %p375 = scmp.eq.s32.totalorder %s41, 0
      %p376 = por %p374, %p375
      %p377 = scmp.ne.s32.totalorder %s363, %s364
      %p378 = scmp.eq.s32.totalorder %s42, 3
      %p379 = por %p377, %p378
      %p381 = scmp.ne.s32.totalorder %s364, %s380
      %p382 = scmp.eq.s32.totalorder %s42, 0
      %p383 = por %p381, %p382
      %s384 = ssub.s32 %s44, %s51
      %p385 = scmp.eq.s32.totalorder %s384, 0
      %s387 = sadd.s32 %s386, 1
      %s388 = scalar_select %p385, %s386, %s387
      %p391 = pneg %p385
      %p392 = scmp.eq.s32.totalorder %s36, 3
      %p393 = por %p391, %p392
      %p394 = scmp.ne.s32.totalorder %s386, %s389
      %p395 = scmp.eq.s32.totalorder %s36, 0
      %p396 = por %p394, %p395
      %p397 = scmp.ne.s32.totalorder %s386, %s389
      %p398 = scmp.eq.s32.totalorder %s41, 3
      %p399 = por %p397, %p398
      %p400 = scmp.ne.s32.totalorder %s389, %s390
      %p401 = scmp.eq.s32.totalorder %s41, 0
      %p402 = por %p400, %p401
      %p403 = scmp.ne.s32.totalorder %s389, %s390
      %p404 = scmp.eq.s32.totalorder %s42, 3
      %p405 = por %p403, %p404
      %p407 = scmp.ne.s32.totalorder %s390, %s406
      %p408 = scmp.eq.s32.totalorder %s42, 0
      %p409 = por %p407, %p408
      %s410 = ssub.s32 %s44, %s51
      %p411 = scmp.eq.s32.totalorder %s410, 0
      %s413 = sadd.s32 %s412, 1
      %s414 = scalar_select %p411, %s412, %s413
      %p417 = pneg %p411
      %p418 = scmp.eq.s32.totalorder %s36, 3
      %p419 = por %p417, %p418
      %p420 = scmp.ne.s32.totalorder %s412, %s415
      %p421 = scmp.eq.s32.totalorder %s36, 0
      %p422 = por %p420, %p421
      %p423 = scmp.ne.s32.totalorder %s412, %s415
      %p424 = scmp.eq.s32.totalorder %s41, 3
      %p425 = por %p423, %p424
      %p426 = scmp.ne.s32.totalorder %s415, %s416
      %p427 = scmp.eq.s32.totalorder %s41, 0
      %p428 = por %p426, %p427
      %p429 = scmp.ne.s32.totalorder %s415, %s416
      %p430 = scmp.eq.s32.totalorder %s42, 3
      %p431 = por %p429, %p430
      %p433 = scmp.ne.s32.totalorder %s416, %s432
      %p434 = scmp.eq.s32.totalorder %s42, 0
      %p435 = por %p433, %p434
      %s436 = ssub.s32 %s44, %s51
      %p437 = scmp.eq.s32.totalorder %s436, 0
      %s439 = sadd.s32 %s438, 1
      %s440 = scalar_select %p437, %s438, %s439
      %p443 = pneg %p437
      %p444 = scmp.eq.s32.totalorder %s36, 3
      %p445 = por %p443, %p444
      %p446 = scmp.ne.s32.totalorder %s438, %s441
      %p447 = scmp.eq.s32.totalorder %s36, 0
      %p448 = por %p446, %p447
      %p449 = scmp.ne.s32.totalorder %s438, %s441
      %p450 = scmp.eq.s32.totalorder %s41, 3
      %p451 = por %p449, %p450
      %p452 = scmp.ne.s32.totalorder %s441, %s442
      %p453 = scmp.eq.s32.totalorder %s41, 0
      %p454 = por %p452, %p453
      %p455 = scmp.ne.s32.totalorder %s441, %s442
      %p456 = scmp.eq.s32.totalorder %s42, 3
      %p457 = por %p455, %p456
      %p459 = scmp.ne.s32.totalorder %s442, %s458
      %p460 = scmp.eq.s32.totalorder %s42, 0
      %p461 = por %p459, %p460
      %s462 = ssub.s32 %s44, %s51
      %p463 = scmp.eq.s32.totalorder %s462, 0
      %s465 = sadd.s32 %s464, 1
      %s466 = scalar_select %p463, %s464, %s465
      %p469 = pneg %p463
      %p470 = scmp.eq.s32.totalorder %s36, 3
      %p471 = por %p469, %p470
      %p472 = scmp.ne.s32.totalorder %s464, %s467
      %p473 = scmp.eq.s32.totalorder %s36, 0
      %p474 = por %p472, %p473
      %p475 = scmp.ne.s32.totalorder %s464, %s467
      %p476 = scmp.eq.s32.totalorder %s41, 3
      %p477 = por %p475, %p476
      %p478 = scmp.ne.s32.totalorder %s467, %s468
      %p479 = scmp.eq.s32.totalorder %s41, 0
      %p480 = por %p478, %p479
      %p481 = scmp.ne.s32.totalorder %s467, %s468
      %p482 = scmp.eq.s32.totalorder %s42, 3
      %p483 = por %p481, %p482
      %p485 = scmp.ne.s32.totalorder %s468, %s484
      %p486 = scmp.eq.s32.totalorder %s42, 0
      %p487 = por %p485, %p486
      %s488 = ssub.s32 %s44, %s51
      %p489 = scmp.eq.s32.totalorder %s488, 0
      %s491 = sadd.s32 %s490, 1
      %s492 = scalar_select %p489, %s490, %s491
      %p495 = pneg %p489
      %p496 = scmp.eq.s32.totalorder %s36, 3
      %p497 = por %p495, %p496
      %p498 = scmp.ne.s32.totalorder %s490, %s493
      %p499 = scmp.eq.s32.totalorder %s36, 0
      %p500 = por %p498, %p499
      %p501 = scmp.ne.s32.totalorder %s490, %s493
      %p502 = scmp.eq.s32.totalorder %s41, 3
      %p503 = por %p501, %p502
      %p504 = scmp.ne.s32.totalorder %s493, %s494
      %p505 = scmp.eq.s32.totalorder %s41, 0
      %p506 = por %p504, %p505
      %p507 = scmp.ne.s32.totalorder %s493, %s494
      %p508 = scmp.eq.s32.totalorder %s42, 3
      %p509 = por %p507, %p508
      %p511 = scmp.ne.s32.totalorder %s494, %s510
      %p512 = scmp.eq.s32.totalorder %s42, 0
      %p513 = por %p511, %p512
      %s514 = ssub.s32 %s44, %s51
      %p515 = scmp.eq.s32.totalorder %s514, 0
      %s517 = sadd.s32 %s516, 1
      %s518 = scalar_select %p515, %s516, %s517
      %p521 = pneg %p515
      %p522 = scmp.eq.s32.totalorder %s36, 3
      %p523 = por %p521, %p522
      %p524 = scmp.ne.s32.totalorder %s516, %s519
      %p525 = scmp.eq.s32.totalorder %s36, 0
      %p526 = por %p524, %p525
      %p527 = scmp.ne.s32.totalorder %s516, %s519
      %p528 = scmp.eq.s32.totalorder %s41, 3
      %p529 = por %p527, %p528
      %p530 = scmp.ne.s32.totalorder %s519, %s520
      %p531 = scmp.eq.s32.totalorder %s41, 0
      %p532 = por %p530, %p531
      %p533 = scmp.ne.s32.totalorder %s519, %s520
      %p534 = scmp.eq.s32.totalorder %s42, 3
      %p535 = por %p533, %p534
      %p537 = scmp.ne.s32.totalorder %s520, %s536
      %p538 = scmp.eq.s32.totalorder %s42, 0
      %p539 = por %p537, %p538
      %s540 = ssub.s32 %s44, %s51
      %p541 = scmp.eq.s32.totalorder %s540, 0
      %s543 = sadd.s32 %s542, 1
      %s544 = scalar_select %p541, %s542, %s543
      %p547 = pneg %p541
      %p548 = scmp.eq.s32.totalorder %s36, 3
      %p549 = por %p547, %p548
      %p550 = scmp.ne.s32.totalorder %s542, %s545
      %p551 = scmp.eq.s32.totalorder %s36, 0
      %p552 = por %p550, %p551
      %p553 = scmp.ne.s32.totalorder %s542, %s545
      %p554 = scmp.eq.s32.totalorder %s41, 3
      %p555 = por %p553, %p554
      %p556 = scmp.ne.s32.totalorder %s545, %s546
      %p557 = scmp.eq.s32.totalorder %s41, 0
      %p558 = por %p556, %p557
      %p559 = scmp.ne.s32.totalorder %s545, %s546
      %p560 = scmp.eq.s32.totalorder %s42, 3
      %p561 = por %p559, %p560
      %p563 = scmp.ne.s32.totalorder %s546, %s562
      %p564 = scmp.eq.s32.totalorder %s42, 0
      %p565 = por %p563, %p564
      %s566 = ssub.s32 %s43, %s55
      %p567 = scmp.eq.s32.totalorder %s566, 0
      %s569 = sadd.s32 %s568, 1
      %s570 = scalar_select %p567, %s568, %s569
      %p573 = pneg %p567
      %p574 = scmp.eq.s32.totalorder %s36, 3
      %p575 = por %p573, %p574
      %p576 = scmp.ne.s32.totalorder %s568, %s571
      %p577 = scmp.eq.s32.totalorder %s36, 0
      %p578 = por %p576, %p577
      %p579 = scmp.ne.s32.totalorder %s568, %s571
      %p580 = scmp.eq.s32.totalorder %s41, 3
      %p581 = por %p579, %p580
      %p582 = scmp.ne.s32.totalorder %s571, %s572
      %p583 = scmp.eq.s32.totalorder %s41, 0
      %p584 = por %p582, %p583
      %p585 = scmp.ne.s32.totalorder %s571, %s572
      %p586 = scmp.eq.s32.totalorder %s42, 3
      %p587 = por %p585, %p586
      %p589 = scmp.ne.s32.totalorder %s572, %s588
      %p590 = scmp.eq.s32.totalorder %s42, 0
      %p591 = por %p589, %p590
      %p592 = scmp.le.s32.totalorder 1, %s36
      %p593 = scmp.lt.s32.totalorder %s36, 5
      %p594 = pnand %p592, %p593
      %p595 = pneg %p594
      // Predicated region
      $region9: #{tpu_custom_call.1} parent=5 // pred_check
        _
      $region10: #{tpu_custom_call.1} parent=5 // pred_check_branch
        %597 = sbr.rel (%p594) target = $region12
      $region11: #{tpu_custom_call.1} parent=5 // pred_region
        %s598 = ssub.s32 %s36, 1
        // Predicated region
        $region13: #{tpu_custom_call.1} parent=11 // pred_check
          %p599 = pneg %p121
        $region14: #{tpu_custom_call.1} parent=11 // pred_check_branch
          %601 = sbr.rel (%p599) target = $region16
        $region15: #{tpu_custom_call.1} parent=11 // pred_region
          %603 = vsyncadd [#allocation6], 0
          %s605 = sshll.u32 %s2, 4
          %s606 = int_to_ptr.hbm [resolvable:$true] %s605
          %s607 = sshll.u32 [#allocation7], 4
          %s608 = int_to_ptr.vmem [resolvable:$true] %s607
          %610 = dma.hbm_to_vmem [thread:$0]  %s606, 32, %s608, [#allocation6]
        $region16: #{tpu_custom_call.1} parent=11 // pred_fallthru
          _
        // Predicated region
        $region17: #{tpu_custom_call.1} parent=11 // pred_check
          %p611 = pneg %p142
        $region18: #{tpu_custom_call.1} parent=11 // pred_check_branch
          %613 = sbr.rel (%p611) target = $region20
        $region19: #{tpu_custom_call.1} parent=11 // pred_region
          %615 = vsyncadd [#allocation9], 0
          %s617 = sshll.u32 %s3, 4
          %s618 = int_to_ptr.hbm [resolvable:$true] %s617
          %s619 = sshll.u32 [#allocation8], 4
          %s620 = int_to_ptr.vmem [resolvable:$true] %s619
          %622 = dma.hbm_to_vmem [thread:$0]  %s618, 32, %s620, [#allocation9]
        $region20: #{tpu_custom_call.1} parent=11 // pred_fallthru
          _
      $region12: #{tpu_custom_call.1} parent=5 // pred_fallthru
        _
      %p623 = scmp.lt.s32.totalorder %s36, 4
      // Predicated region
      $region21: #{tpu_custom_call.1} parent=5 // pred_check
        %p624 = pneg %p623
      $region22: #{tpu_custom_call.1} parent=5 // pred_check_branch
        %626 = sbr.rel (%p624) target = $region24
      $region23: #{tpu_custom_call.1} parent=5 // pred_region
        // Predicated region
        $region25: #{tpu_custom_call.1} parent=23 // pred_check
          %p627 = pneg %p68
        $region26: #{tpu_custom_call.1} parent=23 // pred_check_branch
          %629 = sbr.rel (%p627) target = $region28
        $region27: #{tpu_custom_call.1} parent=23 // pred_region
          %s630 = sand.u32 %s36, 1
          %s631 = scalar_lea.sflag [#allocation3], %s630
          %s632 = sand.u32 %s58, 1
          %s633 = smul.addr %s632, 32
          %s634 = scalar_lea.vmem [#allocation2], %s633
          %636 = vsyncadd %s631, 0
          %s637 = smul.addr %s43, 4
          %s638 = smul.addr %s637, 8
          %s639 = scalar_lea.hbm %s0, %s638
          %s640 = sshll.u32 %s639, 4
          %s641 = int_to_ptr.hbm [resolvable:$true] %s640
          %s642 = sshll.u32 %s634, 4
          %s643 = int_to_ptr.vmem [resolvable:$true] %s642
          %648 = dma.hbm_to_vmem [thread:$0]  %s641, 512, %s643, %s631, 256, 256, 16
        $region28: #{tpu_custom_call.1} parent=23 // pred_fallthru
          _
        // Predicated region
        $region29: #{tpu_custom_call.1} parent=23 // pred_check
          %p649 = pneg %p94
        $region30: #{tpu_custom_call.1} parent=23 // pred_check_branch
          %651 = sbr.rel (%p649) target = $region32
        $region31: #{tpu_custom_call.1} parent=23 // pred_region
          %s652 = sand.u32 %s36, 1
          %s653 = scalar_lea.sflag [#allocation6], %s652
          %s654 = sand.u32 %s84, 1
          %s655 = scalar_lea.vmem [#allocation5], %s654
          %657 = vsyncadd %s653, 0
          %s658 = scalar_lea.hbm %s1, %s43
          %s660 = sshll.u32 %s658, 4
          %s661 = int_to_ptr.hbm [resolvable:$true] %s660
          %s662 = sshll.u32 %s655, 4
          %s663 = int_to_ptr.vmem [resolvable:$true] %s662
          %665 = dma.hbm_to_vmem [thread:$0]  %s661, 16, %s663, %s653
        $region32: #{tpu_custom_call.1} parent=23 // pred_fallthru
          _
        // Predicated region
        $region33: #{tpu_custom_call.1} parent=23 // pred_check
          %p666 = pneg %p162
        $region34: #{tpu_custom_call.1} parent=23 // pred_check_branch
          %668 = sbr.rel (%p666) target = $region36
        $region35: #{tpu_custom_call.1} parent=23 // pred_region
          %s669 = sand.u32 %s36, 1
          %s670 = scalar_lea.sflag [#allocation3], %s669
          %s671 = sand.u32 %s152, 1
          %s672 = smul.addr %s671, 256
          %s673 = scalar_lea.vmem [#allocation10], %s672
          %675 = vsyncadd %s670, 0
          %s676 = smul.addr %s44, 64
          %s677 = smul.addr %s676, 4
          %s678 = scalar_lea.hbm %s4, %s677
          %s679 = sshll.u32 %s678, 4
          %s680 = int_to_ptr.hbm [resolvable:$true] %s679
          %s681 = sshll.u32 %s673, 4
          %s682 = int_to_ptr.vmem [resolvable:$true] %s681
          %687 = dma.hbm_to_vmem [thread:$0]  %s680, 4096, %s682, %s670, 128, 128, 8
        $region36: #{tpu_custom_call.1} parent=23 // pred_fallthru
          _
        // Predicated region
        $region37: #{tpu_custom_call.1} parent=23 // pred_check
          %p688 = pneg %p188
        $region38: #{tpu_custom_call.1} parent=23 // pred_check_branch
          %690 = sbr.rel (%p688) target = $region40
        $region39: #{tpu_custom_call.1} parent=23 // pred_region
          %p691 = scmp.lt.s32.totalorder %s44, 1
          %s692 = scalar_select %p691, %s44, 1
          %s693 = smul.addr %s692, 2
          %s694 = scalar_lea.vmem %s5, %s693
        $region40: #{tpu_custom_call.1} parent=23 // pred_fallthru
          _
        // Predicated region
        $region41: #{tpu_custom_call.1} parent=23 // pred_check
          %p695 = pneg %p214
        $region42: #{tpu_custom_call.1} parent=23 // pred_check_branch
          %697 = sbr.rel (%p695) target = $region44
        $region43: #{tpu_custom_call.1} parent=23 // pred_region
          %s698 = sand.u32 %s36, 1
          %s699 = scalar_lea.sflag [#allocation6], %s698
          %s700 = sand.u32 %s204, 1
          %s701 = smul.addr %s700, 256
          %s702 = scalar_lea.vmem [#allocation11], %s701
          %704 = vsyncadd %s699, 0
          %s705 = smul.addr %s44, 64
          %s706 = smul.addr %s705, 4
          %s707 = scalar_lea.hbm %s6, %s706
          %s708 = sshll.u32 %s707, 4
          %s709 = int_to_ptr.hbm [resolvable:$true] %s708
          %s710 = sshll.u32 %s702, 4
          %s711 = int_to_ptr.vmem [resolvable:$true] %s710
          %716 = dma.hbm_to_vmem [thread:$0]  %s709, 4096, %s711, %s699, 128, 128, 8
        $region44: #{tpu_custom_call.1} parent=23 // pred_fallthru
          _
        // Predicated region
        $region45: #{tpu_custom_call.1} parent=23 // pred_check
          %p717 = pneg %p240
        $region46: #{tpu_custom_call.1} parent=23 // pred_check_branch
          %719 = sbr.rel (%p717) target = $region48
        $region47: #{tpu_custom_call.1} parent=23 // pred_region
          %s720 = sand.u32 %s36, 1
          %s721 = scalar_lea.sflag [#allocation3], %s720
          %s722 = sand.u32 %s230, 1
          %s723 = smul.addr %s722, 2
          %s724 = scalar_lea.vmem [#allocation12], %s723
          %726 = vsyncadd %s721, 0
          %s727 = smul.addr %s44, 2
          %s728 = scalar_lea.hbm %s7, %s727
          %s730 = sshll.u32 %s728, 4
          %s731 = int_to_ptr.hbm [resolvable:$true] %s730
          %s732 = sshll.u32 %s724, 4
          %s733 = int_to_ptr.vmem [resolvable:$true] %s732
          %735 = dma.hbm_to_vmem [thread:$0]  %s731, 32, %s733, %s721
        $region48: #{tpu_custom_call.1} parent=23 // pred_fallthru
          _
        // Predicated region
        $region49: #{tpu_custom_call.1} parent=23 // pred_check
          %p736 = pneg %p266
        $region50: #{tpu_custom_call.1} parent=23 // pred_check_branch
          %738 = sbr.rel (%p736) target = $region52
        $region51: #{tpu_custom_call.1} parent=23 // pred_region
          %s739 = sand.u32 %s36, 1
          %s740 = scalar_lea.sflag [#allocation6], %s739
          %s741 = sand.u32 %s256, 1
          %s742 = smul.addr %s741, 256
          %s743 = scalar_lea.vmem [#allocation13], %s742
          %745 = vsyncadd %s740, 0
          %s746 = smul.addr %s44, 64
          %s747 = smul.addr %s746, 4
          %s748 = scalar_lea.hbm %s8, %s747
          %s749 = sshll.u32 %s748, 4
          %s750 = int_to_ptr.hbm [resolvable:$true] %s749
          %s751 = sshll.u32 %s743, 4
          %s752 = int_to_ptr.vmem [resolvable:$true] %s751
          %757 = dma.hbm_to_vmem [thread:$0]  %s750, 4096, %s752, %s740, 128, 128, 8
        $region52: #{tpu_custom_call.1} parent=23 // pred_fallthru
          _
        // Predicated region
        $region53: #{tpu_custom_call.1} parent=23 // pred_check
          %p758 = pneg %p292
        $region54: #{tpu_custom_call.1} parent=23 // pred_check_branch
          %760 = sbr.rel (%p758) target = $region56
        $region55: #{tpu_custom_call.1} parent=23 // pred_region
          %s761 = sand.u32 %s36, 1
          %s762 = scalar_lea.sflag [#allocation3], %s761
          %s763 = sand.u32 %s282, 1
          %s764 = smul.addr %s763, 2
          %s765 = scalar_lea.vmem [#allocation14], %s764
          %767 = vsyncadd %s762, 0
          %s768 = smul.addr %s44, 2
          %s769 = scalar_lea.hbm %s9, %s768
          %s771 = sshll.u32 %s769, 4
          %s772 = int_to_ptr.hbm [resolvable:$true] %s771
          %s773 = sshll.u32 %s765, 4
          %s774 = int_to_ptr.vmem [resolvable:$true] %s773
          %776 = dma.hbm_to_vmem [thread:$0]  %s772, 32, %s774, %s762
        $region56: #{tpu_custom_call.1} parent=23 // pred_fallthru
          _
        // Predicated region
        $region57: #{tpu_custom_call.1} parent=23 // pred_check
          %p777 = pneg %p318
        $region58: #{tpu_custom_call.1} parent=23 // pred_check_branch
          %779 = sbr.rel (%p777) target = $region60
        $region59: #{tpu_custom_call.1} parent=23 // pred_region
          %s780 = sand.u32 %s36, 1
          %s781 = scalar_lea.sflag [#allocation6], %s780
          %s782 = sand.u32 %s308, 1
          %s783 = smul.addr %s782, 256
          %s784 = scalar_lea.vmem [#allocation15], %s783
          %786 = vsyncadd %s781, 0
          %s787 = smul.addr %s44, 64
          %s788 = smul.addr %s787, 4
          %s789 = scalar_lea.hbm %s10, %s788
          %s790 = sshll.u32 %s789, 4
          %s791 = int_to_ptr.hbm [resolvable:$true] %s790
          %s792 = sshll.u32 %s784, 4
          %s793 = int_to_ptr.vmem [resolvable:$true] %s792
          %798 = dma.hbm_to_vmem [thread:$0]  %s791, 4096, %s793, %s781, 128, 128, 8
        $region60: #{tpu_custom_call.1} parent=23 // pred_fallthru
          _
        // Predicated region
        $region61: #{tpu_custom_call.1} parent=23 // pred_check
          %p799 = pneg %p344
        $region62: #{tpu_custom_call.1} parent=23 // pred_check_branch
          %801 = sbr.rel (%p799) target = $region64
        $region63: #{tpu_custom_call.1} parent=23 // pred_region
          %s802 = sand.u32 %s36, 1
          %s803 = scalar_lea.sflag [#allocation3], %s802
          %s804 = sand.u32 %s334, 1
          %s805 = smul.addr %s804, 2
          %s806 = scalar_lea.vmem [#allocation16], %s805
          %808 = vsyncadd %s803, 0
          %s809 = smul.addr %s44, 2
          %s810 = scalar_lea.hbm %s11, %s809
          %s812 = sshll.u32 %s810, 4
          %s813 = int_to_ptr.hbm [resolvable:$true] %s812
          %s814 = sshll.u32 %s806, 4
          %s815 = int_to_ptr.vmem [resolvable:$true] %s814
          %817 = dma.hbm_to_vmem [thread:$0]  %s813, 32, %s815, %s803
        $region64: #{tpu_custom_call.1} parent=23 // pred_fallthru
          _
        // Predicated region
        $region65: #{tpu_custom_call.1} parent=23 // pred_check
          %p818 = pneg %p370
        $region66: #{tpu_custom_call.1} parent=23 // pred_check_branch
          %820 = sbr.rel (%p818) target = $region68
        $region67: #{tpu_custom_call.1} parent=23 // pred_region
          %s821 = sand.u32 %s36, 1
          %s822 = scalar_lea.sflag [#allocation6], %s821
          %s823 = sand.u32 %s360, 1
          %s824 = smul.addr %s823, 2
          %s825 = scalar_lea.vmem [#allocation17], %s824
          %827 = vsyncadd %s822, 0
          %s828 = smul.addr %s44, 2
          %s829 = scalar_lea.hbm %s12, %s828
          %s831 = sshll.u32 %s829, 4
          %s832 = int_to_ptr.hbm [resolvable:$true] %s831
          %s833 = sshll.u32 %s825, 4
          %s834 = int_to_ptr.vmem [resolvable:$true] %s833
          %836 = dma.hbm_to_vmem [thread:$0]  %s832, 32, %s834, %s822
        $region68: #{tpu_custom_call.1} parent=23 // pred_fallthru
          _
        // Predicated region
        $region69: #{tpu_custom_call.1} parent=23 // pred_check
          %p837 = pneg %p396
        $region70: #{tpu_custom_call.1} parent=23 // pred_check_branch
          %839 = sbr.rel (%p837) target = $region72
        $region71: #{tpu_custom_call.1} parent=23 // pred_region
          %s840 = sand.u32 %s36, 1
          %s841 = scalar_lea.sflag [#allocation3], %s840
          %s842 = sand.u32 %s386, 1
          %s843 = smul.addr %s842, 2
          %s844 = scalar_lea.vmem [#allocation18], %s843
          %846 = vsyncadd %s841, 0
          %s847 = smul.addr %s44, 2
          %s848 = scalar_lea.hbm %s13, %s847
          %s850 = sshll.u32 %s848, 4
          %s851 = int_to_ptr.hbm [resolvable:$true] %s850
          %s852 = sshll.u32 %s844, 4
          %s853 = int_to_ptr.vmem [resolvable:$true] %s852
          %855 = dma.hbm_to_vmem [thread:$0]  %s851, 32, %s853, %s841
        $region72: #{tpu_custom_call.1} parent=23 // pred_fallthru
          _
        // Predicated region
        $region73: #{tpu_custom_call.1} parent=23 // pred_check
          %p856 = pneg %p422
        $region74: #{tpu_custom_call.1} parent=23 // pred_check_branch
          %858 = sbr.rel (%p856) target = $region76
        $region75: #{tpu_custom_call.1} parent=23 // pred_region
          %s859 = sand.u32 %s36, 1
          %s860 = scalar_lea.sflag [#allocation6], %s859
          %s861 = sand.u32 %s412, 1
          %s862 = smul.addr %s861, 512
          %s863 = scalar_lea.vmem [#allocation19], %s862
          %865 = vsyncadd %s860, 0
          %s866 = smul.addr %s44, 128
          %s867 = smul.addr %s866, 4
          %s868 = scalar_lea.hbm %s14, %s867
          %s869 = sshll.u32 %s868, 4
          %s870 = int_to_ptr.hbm [resolvable:$true] %s869
          %s871 = sshll.u32 %s863, 4
          %s872 = int_to_ptr.vmem [resolvable:$true] %s871
          %877 = dma.hbm_to_vmem [thread:$0]  %s870, 8192, %s872, %s860, 256, 256, 16
        $region76: #{tpu_custom_call.1} parent=23 // pred_fallthru
          _
        // Predicated region
        $region77: #{tpu_custom_call.1} parent=23 // pred_check
          %p878 = pneg %p448
        $region78: #{tpu_custom_call.1} parent=23 // pred_check_branch
          %880 = sbr.rel (%p878) target = $region80
        $region79: #{tpu_custom_call.1} parent=23 // pred_region
          %p881 = scmp.lt.s32.totalorder %s44, 1
          %s882 = scalar_select %p881, %s44, 1
          %s883 = smul.addr %s882, 4
          %s884 = scalar_lea.vmem %s15, %s883
        $region80: #{tpu_custom_call.1} parent=23 // pred_fallthru
          _
        // Predicated region
        $region81: #{tpu_custom_call.1} parent=23 // pred_check
          %p885 = pneg %p474
        $region82: #{tpu_custom_call.1} parent=23 // pred_check_branch
          %887 = sbr.rel (%p885) target = $region84
        $region83: #{tpu_custom_call.1} parent=23 // pred_region
          %s888 = sand.u32 %s36, 1
          %s889 = scalar_lea.sflag [#allocation3], %s888
          %s890 = sand.u32 %s464, 1
          %s891 = smul.addr %s890, 512
          %s892 = scalar_lea.vmem [#allocation20], %s891
          %894 = vsyncadd %s889, 0
          %s895 = smul.addr %s44, 128
          %s896 = smul.addr %s895, 4
          %s897 = scalar_lea.hbm %s16, %s896
          %s898 = sshll.u32 %s897, 4
          %s899 = int_to_ptr.hbm [resolvable:$true] %s898
          %s900 = sshll.u32 %s892, 4
          %s901 = int_to_ptr.vmem [resolvable:$true] %s900
          %906 = dma.hbm_to_vmem [thread:$0]  %s899, 8192, %s901, %s889, 128, 128, 8
        $region84: #{tpu_custom_call.1} parent=23 // pred_fallthru
          _
        // Predicated region
        $region85: #{tpu_custom_call.1} parent=23 // pred_check
          %p907 = pneg %p500
        $region86: #{tpu_custom_call.1} parent=23 // pred_check_branch
          %909 = sbr.rel (%p907) target = $region88
        $region87: #{tpu_custom_call.1} parent=23 // pred_region
          %p910 = scmp.lt.s32.totalorder %s44, 1
          %s911 = scalar_select %p910, %s44, 1
          %s912 = smul.addr %s911, 2
          %s913 = scalar_lea.vmem %s17, %s912
        $region88: #{tpu_custom_call.1} parent=23 // pred_fallthru
          _
        // Predicated region
        $region89: #{tpu_custom_call.1} parent=23 // pred_check
          %p914 = pneg %p526
        $region90: #{tpu_custom_call.1} parent=23 // pred_check_branch
          %916 = sbr.rel (%p914) target = $region92
        $region91: #{tpu_custom_call.1} parent=23 // pred_region
          %s917 = sand.u32 %s36, 1
          %s918 = scalar_lea.sflag [#allocation6], %s917
          %s919 = sand.u32 %s516, 1
          %s920 = smul.addr %s919, 2
          %s921 = scalar_lea.vmem [#allocation21], %s920
          %923 = vsyncadd %s918, 0
          %s924 = smul.addr %s44, 2
          %s925 = scalar_lea.hbm %s18, %s924
          %s927 = sshll.u32 %s925, 4
          %s928 = int_to_ptr.hbm [resolvable:$true] %s927
          %s929 = sshll.u32 %s921, 4
          %s930 = int_to_ptr.vmem [resolvable:$true] %s929
          %932 = dma.hbm_to_vmem [thread:$0]  %s928, 32, %s930, %s918
        $region92: #{tpu_custom_call.1} parent=23 // pred_fallthru
          _
        // Predicated region
        $region93: #{tpu_custom_call.1} parent=23 // pred_check
          %p933 = pneg %p552
        $region94: #{tpu_custom_call.1} parent=23 // pred_check_branch
          %935 = sbr.rel (%p933) target = $region96
        $region95: #{tpu_custom_call.1} parent=23 // pred_region
          %s936 = sand.u32 %s36, 1
          %s937 = scalar_lea.sflag [#allocation3], %s936
          %s938 = sand.u32 %s542, 1
          %s939 = smul.addr %s938, 2
          %s940 = scalar_lea.vmem [#allocation22], %s939
          %942 = vsyncadd %s937, 0
          %s943 = smul.addr %s44, 2
          %s944 = scalar_lea.hbm %s19, %s943
          %s946 = sshll.u32 %s944, 4
          %s947 = int_to_ptr.hbm [resolvable:$true] %s946
          %s948 = sshll.u32 %s940, 4
          %s949 = int_to_ptr.vmem [resolvable:$true] %s948
          %951 = dma.hbm_to_vmem [thread:$0]  %s947, 32, %s949, %s937
        $region96: #{tpu_custom_call.1} parent=23 // pred_fallthru
          _
      $region24: #{tpu_custom_call.1} parent=5 // pred_fallthru
        _
      %p952 = scmp.le.s32.totalorder 1, %s36
      %p953 = scmp.lt.s32.totalorder %s36, 5
      %p954 = pnand %p952, %p953
      %p955 = pneg %p954
      // Predicated region
      $region97: #{tpu_custom_call.1} parent=5 // pred_check
        _
      $region98: #{tpu_custom_call.1} parent=5 // pred_check_branch
        %957 = sbr.rel (%p954) target = $region100
      $region99: #{tpu_custom_call.1} parent=5 // pred_region
        %s958 = ssub.s32 %s36, 1
        %s959 = sand.u32 %s41, 1
        %s960 = scalar_lea.sflag [#allocation3], %s959
        %s961 = sand.u32 %s61, 1
        %s962 = smul.addr %s961, 32
        %s963 = scalar_lea.vmem [#allocation2], %s962
        // Predicated region
        $region101: #{tpu_custom_call.1} parent=99 // pred_check
          %p964 = pneg %p74
        $region102: #{tpu_custom_call.1} parent=99 // pred_check_branch
          %966 = sbr.rel (%p964) target = $region104
        $region103: #{tpu_custom_call.1} parent=99 // pred_region
          %968 = dma.done %s960, 512
        $region104: #{tpu_custom_call.1} parent=99 // pred_fallthru
          _
        %s969 = sand.u32 %s41, 1
        %s970 = scalar_lea.sflag [#allocation6], %s969
        %s971 = sand.u32 %s87, 1
        %s972 = scalar_lea.vmem [#allocation5], %s971
        // Predicated region
        $region105: #{tpu_custom_call.1} parent=99 // pred_check
          %p973 = pneg %p100
        $region106: #{tpu_custom_call.1} parent=99 // pred_check_branch
          %975 = sbr.rel (%p973) target = $region108
        $region107: #{tpu_custom_call.1} parent=99 // pred_region
          %977 = dma.done %s970, 16
        $region108: #{tpu_custom_call.1} parent=99 // pred_fallthru
          _
        // Predicated region
        $region109: #{tpu_custom_call.1} parent=99 // pred_check
          %p978 = pneg %p121
        $region110: #{tpu_custom_call.1} parent=99 // pred_check_branch
          %980 = sbr.rel (%p978) target = $region112
        $region111: #{tpu_custom_call.1} parent=99 // pred_region
          %982 = dma.done [#allocation6], 32
        $region112: #{tpu_custom_call.1} parent=99 // pred_fallthru
          _
        // Predicated region
        $region113: #{tpu_custom_call.1} parent=99 // pred_check
          %p983 = pneg %p142
        $region114: #{tpu_custom_call.1} parent=99 // pred_check_branch
          %985 = sbr.rel (%p983) target = $region116
        $region115: #{tpu_custom_call.1} parent=99 // pred_region
          %987 = dma.done [#allocation9], 32
        $region116: #{tpu_custom_call.1} parent=99 // pred_fallthru
          _
        %s988 = sand.u32 %s41, 1
        %s989 = scalar_lea.sflag [#allocation3], %s988
        %s990 = sand.u32 %s155, 1
        %s991 = smul.addr %s990, 256
        %s992 = scalar_lea.vmem [#allocation10], %s991
        // Predicated region
        $region117: #{tpu_custom_call.1} parent=99 // pred_check
          %p993 = pneg %p168
        $region118: #{tpu_custom_call.1} parent=99 // pred_check_branch
          %995 = sbr.rel (%p993) target = $region120
        $region119: #{tpu_custom_call.1} parent=99 // pred_region
          %997 = dma.done %s989, 4096
        $region120: #{tpu_custom_call.1} parent=99 // pred_fallthru
          _
        %s998 = sand.u32 %s41, 1
        %s999 = scalar_lea.sflag [#allocation6], %s998
        %s1000 = sand.u32 %s207, 1
        %s1001 = smul.addr %s1000, 256
        %s1002 = scalar_lea.vmem [#allocation11], %s1001
        // Predicated region
        $region121: #{tpu_custom_call.1} parent=99 // pred_check
          %p1003 = pneg %p220
        $region122: #{tpu_custom_call.1} parent=99 // pred_check_branch
          %1005 = sbr.rel (%p1003) target = $region124
        $region123: #{tpu_custom_call.1} parent=99 // pred_region
          %1007 = dma.done %s999, 4096
        $region124: #{tpu_custom_call.1} parent=99 // pred_fallthru
          _
        %s1008 = sand.u32 %s41, 1
        %s1009 = scalar_lea.sflag [#allocation3], %s1008
        %s1010 = sand.u32 %s233, 1
        %s1011 = smul.addr %s1010, 2
        %s1012 = scalar_lea.vmem [#allocation12], %s1011
        // Predicated region
        $region125: #{tpu_custom_call.1} parent=99 // pred_check
          %p1013 = pneg %p246
        $region126: #{tpu_custom_call.1} parent=99 // pred_check_branch
          %1015 = sbr.rel (%p1013) target = $region128
        $region127: #{tpu_custom_call.1} parent=99 // pred_region
          %1017 = dma.done %s1009, 32
        $region128: #{tpu_custom_call.1} parent=99 // pred_fallthru
          _
        %s1018 = sand.u32 %s41, 1
        %s1019 = scalar_lea.sflag [#allocation6], %s1018
        %s1020 = sand.u32 %s259, 1
        %s1021 = smul.addr %s1020, 256
        %s1022 = scalar_lea.vmem [#allocation13], %s1021
        // Predicated region
        $region129: #{tpu_custom_call.1} parent=99 // pred_check
          %p1023 = pneg %p272
        $region130: #{tpu_custom_call.1} parent=99 // pred_check_branch
          %1025 = sbr.rel (%p1023) target = $region132
        $region131: #{tpu_custom_call.1} parent=99 // pred_region
          %1027 = dma.done %s1019, 4096
        $region132: #{tpu_custom_call.1} parent=99 // pred_fallthru
          _
        %s1028 = sand.u32 %s41, 1
        %s1029 = scalar_lea.sflag [#allocation3], %s1028
        %s1030 = sand.u32 %s285, 1
        %s1031 = smul.addr %s1030, 2
        %s1032 = scalar_lea.vmem [#allocation14], %s1031
        // Predicated region
        $region133: #{tpu_custom_call.1} parent=99 // pred_check
          %p1033 = pneg %p298
        $region134: #{tpu_custom_call.1} parent=99 // pred_check_branch
          %1035 = sbr.rel (%p1033) target = $region136
        $region135: #{tpu_custom_call.1} parent=99 // pred_region
          %1037 = dma.done %s1029, 32
        $region136: #{tpu_custom_call.1} parent=99 // pred_fallthru
          _
        %s1038 = sand.u32 %s41, 1
        %s1039 = scalar_lea.sflag [#allocation6], %s1038
        %s1040 = sand.u32 %s311, 1
        %s1041 = smul.addr %s1040, 256
        %s1042 = scalar_lea.vmem [#allocation15], %s1041
        // Predicated region
        $region137: #{tpu_custom_call.1} parent=99 // pred_check
          %p1043 = pneg %p324
        $region138: #{tpu_custom_call.1} parent=99 // pred_check_branch
          %1045 = sbr.rel (%p1043) target = $region140
        $region139: #{tpu_custom_call.1} parent=99 // pred_region
          %1047 = dma.done %s1039, 4096
        $region140: #{tpu_custom_call.1} parent=99 // pred_fallthru
          _
        %s1048 = sand.u32 %s41, 1
        %s1049 = scalar_lea.sflag [#allocation3], %s1048
        %s1050 = sand.u32 %s337, 1
        %s1051 = smul.addr %s1050, 2
        %s1052 = scalar_lea.vmem [#allocation16], %s1051
        // Predicated region
        $region141: #{tpu_custom_call.1} parent=99 // pred_check
          %p1053 = pneg %p350
        $region142: #{tpu_custom_call.1} parent=99 // pred_check_branch
          %1055 = sbr.rel (%p1053) target = $region144
        $region143: #{tpu_custom_call.1} parent=99 // pred_region
          %1057 = dma.done %s1049, 32
        $region144: #{tpu_custom_call.1} parent=99 // pred_fallthru
          _
        %s1058 = sand.u32 %s41, 1
        %s1059 = scalar_lea.sflag [#allocation6], %s1058
        %s1060 = sand.u32 %s363, 1
        %s1061 = smul.addr %s1060, 2
        %s1062 = scalar_lea.vmem [#allocation17], %s1061
        // Predicated region
        $region145: #{tpu_custom_call.1} parent=99 // pred_check
          %p1063 = pneg %p376
        $region146: #{tpu_custom_call.1} parent=99 // pred_check_branch
          %1065 = sbr.rel (%p1063) target = $region148
        $region147: #{tpu_custom_call.1} parent=99 // pred_region
          %1067 = dma.done %s1059, 32
        $region148: #{tpu_custom_call.1} parent=99 // pred_fallthru
          _
        %s1068 = sand.u32 %s41, 1
        %s1069 = scalar_lea.sflag [#allocation3], %s1068
        %s1070 = sand.u32 %s389, 1
        %s1071 = smul.addr %s1070, 2
        %s1072 = scalar_lea.vmem [#allocation18], %s1071
        // Predicated region
        $region149: #{tpu_custom_call.1} parent=99 // pred_check
          %p1073 = pneg %p402
        $region150: #{tpu_custom_call.1} parent=99 // pred_check_branch
          %1075 = sbr.rel (%p1073) target = $region152
        $region151: #{tpu_custom_call.1} parent=99 // pred_region
          %1077 = dma.done %s1069, 32
        $region152: #{tpu_custom_call.1} parent=99 // pred_fallthru
          _
        %s1078 = sand.u32 %s41, 1
        %s1079 = scalar_lea.sflag [#allocation6], %s1078
        %s1080 = sand.u32 %s415, 1
        %s1081 = smul.addr %s1080, 512
        %s1082 = scalar_lea.vmem [#allocation19], %s1081
        // Predicated region
        $region153: #{tpu_custom_call.1} parent=99 // pred_check
          %p1083 = pneg %p428
        $region154: #{tpu_custom_call.1} parent=99 // pred_check_branch
          %1085 = sbr.rel (%p1083) target = $region156
        $region155: #{tpu_custom_call.1} parent=99 // pred_region
          %1087 = dma.done %s1079, 8192
        $region156: #{tpu_custom_call.1} parent=99 // pred_fallthru
          _
        %s1088 = sand.u32 %s41, 1
        %s1089 = scalar_lea.sflag [#allocation3], %s1088
        %s1090 = sand.u32 %s467, 1
        %s1091 = smul.addr %s1090, 512
        %s1092 = scalar_lea.vmem [#allocation20], %s1091
        // Predicated region
        $region157: #{tpu_custom_call.1} parent=99 // pred_check
          %p1093 = pneg %p480
        $region158: #{tpu_custom_call.1} parent=99 // pred_check_branch
          %1095 = sbr.rel (%p1093) target = $region160
        $region159: #{tpu_custom_call.1} parent=99 // pred_region
          %1097 = dma.done %s1089, 8192
        $region160: #{tpu_custom_call.1} parent=99 // pred_fallthru
          _
        %s1098 = sand.u32 %s41, 1
        %s1099 = scalar_lea.sflag [#allocation6], %s1098
        %s1100 = sand.u32 %s519, 1
        %s1101 = smul.addr %s1100, 2
        %s1102 = scalar_lea.vmem [#allocation21], %s1101
        // Predicated region
        $region161: #{tpu_custom_call.1} parent=99 // pred_check
          %p1103 = pneg %p532
        $region162: #{tpu_custom_call.1} parent=99 // pred_check_branch
          %1105 = sbr.rel (%p1103) target = $region164
        $region163: #{tpu_custom_call.1} parent=99 // pred_region
          %1107 = dma.done %s1099, 32
        $region164: #{tpu_custom_call.1} parent=99 // pred_fallthru
          _
        %s1108 = sand.u32 %s41, 1
        %s1109 = scalar_lea.sflag [#allocation3], %s1108
        %s1110 = sand.u32 %s545, 1
        %s1111 = smul.addr %s1110, 2
        %s1112 = scalar_lea.vmem [#allocation22], %s1111
        // Predicated region
        $region165: #{tpu_custom_call.1} parent=99 // pred_check
          %p1113 = pneg %p558
        $region166: #{tpu_custom_call.1} parent=99 // pred_check_branch
          %1115 = sbr.rel (%p1113) target = $region168
        $region167: #{tpu_custom_call.1} parent=99 // pred_region
          %1117 = dma.done %s1109, 32
        $region168: #{tpu_custom_call.1} parent=99 // pred_fallthru
          _
        %s1118 = sand.u32 %s41, 1
        %s1119 = scalar_lea.sflag [#allocation3], %s1118
        %s1120 = sand.u32 %s61, 1
        %s1121 = smul.addr %s1120, 32
        %s1122 = scalar_lea.vmem [#allocation2], %s1121
        %p1123 = pneg %p74
        %p1124 = pneg %p71
        %s1125 = sand.u32 %s41, 1
        %s1126 = scalar_lea.sflag [#allocation6], %s1125
        %s1127 = sand.u32 %s87, 1
        %s1128 = scalar_lea.vmem [#allocation5], %s1127
        %p1129 = pneg %p100
        %p1130 = pneg %p97
        %p1131 = pneg %p121
        %p1132 = pneg %p118
        %p1133 = pneg %p142
        %p1134 = pneg %p139
        %s1135 = sand.u32 %s41, 1
        %s1136 = scalar_lea.sflag [#allocation3], %s1135
        %s1137 = sand.u32 %s155, 1
        %s1138 = smul.addr %s1137, 256
        %s1139 = scalar_lea.vmem [#allocation10], %s1138
        %p1140 = pneg %p168
        %p1141 = pneg %p165
        %p1142 = scmp.lt.s32.totalorder %s46, 1
        %s1143 = scalar_select %p1142, %s46, 1
        %s1144 = smul.addr %s1143, 2
        %s1145 = scalar_lea.vmem %s5, %s1144
        %p1146 = pneg %p194
        %p1147 = pneg %p191
        %s1148 = sand.u32 %s41, 1
        %s1149 = scalar_lea.sflag [#allocation6], %s1148
        %s1150 = sand.u32 %s207, 1
        %s1151 = smul.addr %s1150, 256
        %s1152 = scalar_lea.vmem [#allocation11], %s1151
        %p1153 = pneg %p220
        %p1154 = pneg %p217
        %s1155 = sand.u32 %s41, 1
        %s1156 = scalar_lea.sflag [#allocation3], %s1155
        %s1157 = sand.u32 %s233, 1
        %s1158 = smul.addr %s1157, 2
        %s1159 = scalar_lea.vmem [#allocation12], %s1158
        %p1160 = pneg %p246
        %p1161 = pneg %p243
        %s1162 = sand.u32 %s41, 1
        %s1163 = scalar_lea.sflag [#allocation6], %s1162
        %s1164 = sand.u32 %s259, 1
        %s1165 = smul.addr %s1164, 256
        %s1166 = scalar_lea.vmem [#allocation13], %s1165
        %p1167 = pneg %p272
        %p1168 = pneg %p269
        %s1169 = sand.u32 %s41, 1
        %s1170 = scalar_lea.sflag [#allocation3], %s1169
        %s1171 = sand.u32 %s285, 1
        %s1172 = smul.addr %s1171, 2
        %s1173 = scalar_lea.vmem [#allocation14], %s1172
        %p1174 = pneg %p298
        %p1175 = pneg %p295
        %s1176 = sand.u32 %s41, 1
        %s1177 = scalar_lea.sflag [#allocation6], %s1176
        %s1178 = sand.u32 %s311, 1
        %s1179 = smul.addr %s1178, 256
        %s1180 = scalar_lea.vmem [#allocation15], %s1179
        %p1181 = pneg %p324
        %p1182 = pneg %p321
        %s1183 = sand.u32 %s41, 1
        %s1184 = scalar_lea.sflag [#allocation3], %s1183
        %s1185 = sand.u32 %s337, 1
        %s1186 = smul.addr %s1185, 2
        %s1187 = scalar_lea.vmem [#allocation16], %s1186
        %p1188 = pneg %p350
        %p1189 = pneg %p347
        %s1190 = sand.u32 %s41, 1
        %s1191 = scalar_lea.sflag [#allocation6], %s1190
        %s1192 = sand.u32 %s363, 1
        %s1193 = smul.addr %s1192, 2
        %s1194 = scalar_lea.vmem [#allocation17], %s1193
        %p1195 = pneg %p376
        %p1196 = pneg %p373
        %s1197 = sand.u32 %s41, 1
        %s1198 = scalar_lea.sflag [#allocation3], %s1197
        %s1199 = sand.u32 %s389, 1
        %s1200 = smul.addr %s1199, 2
        %s1201 = scalar_lea.vmem [#allocation18], %s1200
        %p1202 = pneg %p402
        %p1203 = pneg %p399
        %s1204 = sand.u32 %s41, 1
        %s1205 = scalar_lea.sflag [#allocation6], %s1204
        %s1206 = sand.u32 %s415, 1
        %s1207 = smul.addr %s1206, 512
        %s1208 = scalar_lea.vmem [#allocation19], %s1207
        %p1209 = pneg %p428
        %p1210 = pneg %p425
        %p1211 = scmp.lt.s32.totalorder %s46, 1
        %s1212 = scalar_select %p1211, %s46, 1
        %s1213 = smul.addr %s1212, 4
        %s1214 = scalar_lea.vmem %s15, %s1213
        %p1215 = pneg %p454
        %p1216 = pneg %p451
        %s1217 = sand.u32 %s41, 1
        %s1218 = scalar_lea.sflag [#allocation3], %s1217
        %s1219 = sand.u32 %s467, 1
        %s1220 = smul.addr %s1219, 512
        %s1221 = scalar_lea.vmem [#allocation20], %s1220
        %p1222 = pneg %p480
        %p1223 = pneg %p477
        %p1224 = scmp.lt.s32.totalorder %s46, 1
        %s1225 = scalar_select %p1224, %s46, 1
        %s1226 = smul.addr %s1225, 2
        %s1227 = scalar_lea.vmem %s17, %s1226
        %p1228 = pneg %p506
        %p1229 = pneg %p503
        %s1230 = sand.u32 %s41, 1
        %s1231 = scalar_lea.sflag [#allocation6], %s1230
        %s1232 = sand.u32 %s519, 1
        %s1233 = smul.addr %s1232, 2
        %s1234 = scalar_lea.vmem [#allocation21], %s1233
        %p1235 = pneg %p532
        %p1236 = pneg %p529
        %s1237 = sand.u32 %s41, 1
        %s1238 = scalar_lea.sflag [#allocation3], %s1237
        %s1239 = sand.u32 %s545, 1
        %s1240 = smul.addr %s1239, 2
        %s1241 = scalar_lea.vmem [#allocation22], %s1240
        %p1242 = pneg %p558
        %p1243 = pneg %p555
        %p1244 = pneg %p584
        %p1245 = pneg %p581
        %s1246 = sand.u32 %s571, 1
        %s1247 = scalar_lea.sflag [#allocation4], %s1246
        %s1248 = sand.u32 %s571, 1
        %s1249 = smul.addr %s1248, 32
        %s1250 = scalar_lea.vmem [#allocation23], %s1249
        %p1251 = scmp.lt.s32.totalorder %s46, 1
        %s1252 = scalar_select %p1251, %s46, 1
        %s1253 = smul.addr %s1252, 2
        %s1254 = scalar_lea.vmem %s5, %s1253
        %p1255 = scmp.lt.s32.totalorder %s46, 1
        %s1256 = scalar_select %p1255, %s46, 1
        %s1257 = smul.addr %s1256, 4
        %s1258 = scalar_lea.vmem %s15, %s1257
        %p1259 = scmp.lt.s32.totalorder %s46, 1
        %s1260 = scalar_select %p1259, %s46, 1
        %s1261 = smul.addr %s1260, 2
        %s1262 = scalar_lea.vmem %s17, %s1261
        %p1264 = scmp.eq.s32.totalorder %s46, 0
        // Predicated region
        $region169: #{tpu_custom_call.1} parent=99 // pred_check
          %p1265 = pneg %p1264
        $region170: #{tpu_custom_call.1} parent=99 // pred_check_branch
          %1267 = sbr.rel (%p1265) target = $region172
        $region171: #{tpu_custom_call.1} parent=99 // pred_region
          %v1268 = vld [vmem:[%s963] sm:$0xff]
          %v1269 = vld [vmem:[%s963 + $0x8] sm:$0xff]
          %v1270 = vld [vmem:[%s963 + $0x10] sm:$0xff]
          %v1271 = vld [vmem:[%s963 + $0x18] sm:$0xff]
          %v1272 = vld [vmem:[#allocation7] sm:$0x3]
          %v1273 = vld [vmem:[#allocation8] sm:$0x3]
          %v1274 = vadd.f32 %v1268, %v1269
          %1275 = vadd.xlane.f32.xlu0 %v1274
          %v1276 = vpop.xlane.xlu0 %1275
          %v1277 = vadd.f32 %v1270, %v1271
          %1278 = vadd.xlane.f32.xlu0 %v1277
          %v1279 = vpop.xlane.xlu0 %1278
          %v1280 = vrcp.pop 256.0
          %v1281 = vmul.f32 256.0, %v1280
          %v1282 = vsub.f32 1.0, %v1281
          %v1283 = vmul.f32 %v1280, %v1282
          %v1284 = vadd.f32 %v1280, %v1283
          %vm1285 = vweird.f32 %v1280
          %v1286 = vsel %vm1285, %v1280, %v1284
          %v1287 = vmul.f32 %v1276, %v1286
          %v1288 = vmul.f32 %v1279, %v1286
          %v1289 = vsub.f32 %v1268, %v1287
          %v1290 = vsub.f32 %v1269, %v1287
          %v1291 = vsub.f32 %v1270, %v1288
          %v1292 = vsub.f32 %v1271, %v1288
          %v1293 = vmul.f32 %v1289, %v1289
          %v1294 = vmul.f32 %v1290, %v1290
          %v1295 = vmul.f32 %v1291, %v1291
          %v1296 = vmul.f32 %v1292, %v1292
          %v1297 = vadd.f32 %v1293, %v1294
          %1298 = vadd.xlane.f32.xlu0 %v1297
          %v1299 = vpop.xlane.xlu0 %1298
          %v1300 = vadd.f32 %v1295, %v1296
          %1301 = vadd.xlane.f32.xlu0 %v1300
          %v1302 = vpop.xlane.xlu0 %1301
          %v1303 = vmul.f32 %v1299, %v1286
          %v1304 = vmul.f32 %v1302, %v1286
          %v1305 = vadd.f32 %v1303, 1e-12
          %v1306 = vadd.f32 %v1304, 1e-12
          %v1307 = vrsqrt.pop %v1305
          %v1308 = vmul.f32 %v1307, %v1305
          %v1309 = vmul.f32 %v1308, %v1307
          %v1310 = vmul.f32 0.5, %v1309
          %v1311 = vsub.f32 1.5, %v1310
          %v1312 = vmul.f32 %v1307, %v1311
          %vm1313 = vweird.f32 %v1305
          %vm1314 = vweird.f32 %v1307
          %vm1315 = vmor %vm1313, %vm1314
          %v1316 = vsel %vm1315, %v1307, %v1312
          %v1317 = vrsqrt.pop %v1306
          %v1318 = vmul.f32 %v1317, %v1306
          %v1319 = vmul.f32 %v1318, %v1317
          %v1320 = vmul.f32 0.5, %v1319
          %v1321 = vsub.f32 1.5, %v1320
          %v1322 = vmul.f32 %v1317, %v1321
          %vm1323 = vweird.f32 %v1306
          %vm1324 = vweird.f32 %v1317
          %vm1325 = vmor %vm1323, %vm1324
          %v1326 = vsel %vm1325, %v1317, %v1322
          %v1327 = vmul.f32 %v1289, %v1316
          %v1328 = vmul.f32 %v1290, %v1316
          %v1329 = vmul.f32 %v1291, %v1326
          %v1330 = vmul.f32 %v1292, %v1326
          %v1332 = vperm.slane %v1272, 0
          %v1333 = vperm.slane %v1272, 1
          %v1336 = vmul.f32 %v1327, %v1332
          %v1337 = vmul.f32 %v1328, %v1333
          %v1338 = vmul.f32 %v1329, %v1332
          %v1339 = vmul.f32 %v1330, %v1333
          %v1341 = vperm.slane %v1273, 0
          %v1342 = vperm.slane %v1273, 1
          %v1345 = vadd.f32 %v1336, %v1341
          %v1346 = vadd.f32 %v1337, %v1342
          %v1347 = vadd.f32 %v1338, %v1341
          %v1348 = vadd.f32 %v1339, %v1342
          %1349 = vst [vmem:[%s1250] sm:$0xff] %v1345
          %1350 = vst [vmem:[%s1250 + $0x8] sm:$0xff] %v1346
          %1351 = vst [vmem:[%s1250 + $0x10] sm:$0xff] %v1347
          %1352 = vst [vmem:[%s1250 + $0x18] sm:$0xff] %v1348
        $region172: #{tpu_custom_call.1} parent=99 // pred_fallthru
          _
        %v1353 = vld [vmem:[%s1250] sm:$0xff]
        %v1354 = vld [vmem:[%s1250 + $0x8] sm:$0xff]
        %v1355 = vld [vmem:[%s1250 + $0x10] sm:$0xff]
        %v1356 = vld [vmem:[%s1250 + $0x18] sm:$0xff]
        %v1357 = vld [vmem:[%s972] sm:$0x1]
        %v1358 = vsub.f32 %v1357, 1.0
        %v1359 = vmul.f32 %v1358, 1e+09
        %v1360 = vpack.c.bf16 %v1355, %v1353
        %v1361 = vpack.c.bf16 %v1356, %v1354
        %v1362 = vld [vmem:[%s992] sm:$0xff]
        %v1363 = vld [vmem:[%s992 + $0x8] sm:$0xff]
        %v1364 = vld [vmem:[%s992 + $0x10] sm:$0xff]
        %v1365 = vld [vmem:[%s992 + $0x18] sm:$0xff]
        %v1366 = vld [vmem:[%s992 + $0x20] sm:$0xff]
        %v1367 = vld [vmem:[%s992 + $0x28] sm:$0xff]
        %v1368 = vld [vmem:[%s992 + $0x30] sm:$0xff]
        %v1369 = vld [vmem:[%s992 + $0x38] sm:$0xff]
        %v1370 = vld [vmem:[%s992 + $0x40] sm:$0xff]
        %v1371 = vld [vmem:[%s992 + $0x48] sm:$0xff]
        %v1372 = vld [vmem:[%s992 + $0x50] sm:$0xff]
        %v1373 = vld [vmem:[%s992 + $0x58] sm:$0xff]
        %v1374 = vld [vmem:[%s992 + $0x60] sm:$0xff]
        %v1375 = vld [vmem:[%s992 + $0x68] sm:$0xff]
        %v1376 = vld [vmem:[%s992 + $0x70] sm:$0xff]
        %v1377 = vld [vmem:[%s992 + $0x78] sm:$0xff]
        %v1378 = vld [vmem:[%s992 + $0x80] sm:$0xff]
        %v1379 = vld [vmem:[%s992 + $0x88] sm:$0xff]
        %v1380 = vld [vmem:[%s992 + $0x90] sm:$0xff]
        %v1381 = vld [vmem:[%s992 + $0x98] sm:$0xff]
        %v1382 = vld [vmem:[%s992 + $0xa0] sm:$0xff]
        %v1383 = vld [vmem:[%s992 + $0xa8] sm:$0xff]
        %v1384 = vld [vmem:[%s992 + $0xb0] sm:$0xff]
        %v1385 = vld [vmem:[%s992 + $0xb8] sm:$0xff]
        %v1386 = vld [vmem:[%s992 + $0xc0] sm:$0xff]
        %v1387 = vld [vmem:[%s992 + $0xc8] sm:$0xff]
        %v1388 = vld [vmem:[%s992 + $0xd0] sm:$0xff]
        %v1389 = vld [vmem:[%s992 + $0xd8] sm:$0xff]
        %v1390 = vld [vmem:[%s992 + $0xe0] sm:$0xff]
        %v1391 = vld [vmem:[%s992 + $0xe8] sm:$0xff]
        %v1392 = vld [vmem:[%s992 + $0xf0] sm:$0xff]
        %v1393 = vld [vmem:[%s992 + $0xf8] sm:$0xff]
        %v1394 = vld [vmem:[%s1254] sm:$0x3]
        %v1396 = vperm.slane %v1394, 0
        %v1397 = vperm.slane %v1394, 1
        %v1432 = vunpack.c.l.b16 %v1362
        %v1433 = vunpack.c.h.b16 %v1362
        %v1434 = vunpack.c.l.b16 %v1363
        %v1435 = vunpack.c.h.b16 %v1363
        %v1436 = vunpack.c.l.b16 %v1364
        %v1437 = vunpack.c.h.b16 %v1364
        %v1438 = vunpack.c.l.b16 %v1365
        %v1439 = vunpack.c.h.b16 %v1365
        %v1440 = vunpack.c.l.b16 %v1366
        %v1441 = vunpack.c.h.b16 %v1366
        %v1442 = vunpack.c.l.b16 %v1367
        %v1443 = vunpack.c.h.b16 %v1367
        %v1444 = vunpack.c.l.b16 %v1368
        %v1445 = vunpack.c.h.b16 %v1368
        %v1446 = vunpack.c.l.b16 %v1369
        %v1447 = vunpack.c.h.b16 %v1369
        %v1448 = vunpack.c.l.b16 %v1370
        %v1449 = vunpack.c.h.b16 %v1370
        %v1450 = vunpack.c.l.b16 %v1371
        %v1451 = vunpack.c.h.b16 %v1371
        %v1452 = vunpack.c.l.b16 %v1372
        %v1453 = vunpack.c.h.b16 %v1372
        %v1454 = vunpack.c.l.b16 %v1373
        %v1455 = vunpack.c.h.b16 %v1373
        %v1456 = vunpack.c.l.b16 %v1374
        %v1457 = vunpack.c.h.b16 %v1374
        %v1458 = vunpack.c.l.b16 %v1375
        %v1459 = vunpack.c.h.b16 %v1375
        %v1460 = vunpack.c.l.b16 %v1376
        %v1461 = vunpack.c.h.b16 %v1376
        %v1462 = vunpack.c.l.b16 %v1377
        %v1463 = vunpack.c.h.b16 %v1377
        %v1464 = vunpack.c.l.b16 %v1378
        %v1465 = vunpack.c.h.b16 %v1378
        %v1466 = vunpack.c.l.b16 %v1379
        %v1467 = vunpack.c.h.b16 %v1379
        %v1468 = vunpack.c.l.b16 %v1380
        %v1469 = vunpack.c.h.b16 %v1380
        %v1470 = vunpack.c.l.b16 %v1381
        %v1471 = vunpack.c.h.b16 %v1381
        %v1472 = vunpack.c.l.b16 %v1382
        %v1473 = vunpack.c.h.b16 %v1382
        %v1474 = vunpack.c.l.b16 %v1383
        %v1475 = vunpack.c.h.b16 %v1383
        %v1476 = vunpack.c.l.b16 %v1384
        %v1477 = vunpack.c.h.b16 %v1384
        %v1478 = vunpack.c.l.b16 %v1385
        %v1479 = vunpack.c.h.b16 %v1385
        %v1480 = vunpack.c.l.b16 %v1386
        %v1481 = vunpack.c.h.b16 %v1386
        %v1482 = vunpack.c.l.b16 %v1387
        %v1483 = vunpack.c.h.b16 %v1387
        %v1484 = vunpack.c.l.b16 %v1388
        %v1485 = vunpack.c.h.b16 %v1388
        %v1486 = vunpack.c.l.b16 %v1389
        %v1487 = vunpack.c.h.b16 %v1389
        %v1488 = vunpack.c.l.b16 %v1390
        %v1489 = vunpack.c.h.b16 %v1390
        %v1490 = vunpack.c.l.b16 %v1391
        %v1491 = vunpack.c.h.b16 %v1391
        %v1492 = vunpack.c.l.b16 %v1392
        %v1493 = vunpack.c.h.b16 %v1392
        %v1494 = vunpack.c.l.b16 %v1393
        %v1495 = vunpack.c.h.b16 %v1393
        %v1496 = vpack.c.b16 %v1434, %v1432
        %v1497 = vpack.c.b16 %v1435, %v1433
        %v1498 = vpack.c.b16 %v1438, %v1436
        %v1499 = vpack.c.b16 %v1439, %v1437
        %v1500 = vpack.c.b16 %v1442, %v1440
        %v1501 = vpack.c.b16 %v1443, %v1441
        %v1502 = vpack.c.b16 %v1446, %v1444
        %v1503 = vpack.c.b16 %v1447, %v1445
        %v1504 = vpack.c.b16 %v1450, %v1448
        %v1505 = vpack.c.b16 %v1451, %v1449
        %v1506 = vpack.c.b16 %v1454, %v1452
        %v1507 = vpack.c.b16 %v1455, %v1453
        %v1508 = vpack.c.b16 %v1458, %v1456
        %v1509 = vpack.c.b16 %v1459, %v1457
        %v1510 = vpack.c.b16 %v1462, %v1460
        %v1511 = vpack.c.b16 %v1463, %v1461
        %v1512 = vpack.c.b16 %v1466, %v1464
        %v1513 = vpack.c.b16 %v1467, %v1465
        %v1514 = vpack.c.b16 %v1470, %v1468
        %v1515 = vpack.c.b16 %v1471, %v1469
        %v1516 = vpack.c.b16 %v1474, %v1472
        %v1517 = vpack.c.b16 %v1475, %v1473
        %v1518 = vpack.c.b16 %v1478, %v1476
        %v1519 = vpack.c.b16 %v1479, %v1477
        %v1520 = vpack.c.b16 %v1482, %v1480
        %v1521 = vpack.c.b16 %v1483, %v1481
        %v1522 = vpack.c.b16 %v1486, %v1484
        %v1523 = vpack.c.b16 %v1487, %v1485
        %v1524 = vpack.c.b16 %v1490, %v1488
        %v1525 = vpack.c.b16 %v1491, %v1489
        %v1526 = vpack.c.b16 %v1494, %v1492
        %v1527 = vpack.c.b16 %v1495, %v1493
        %1560 = vmatpush.bf16.msra.mxu0 %v1510
        %1561 = vmatpush.bf16.msra.mxu0 %v1508
        %1562 = vmatpush.bf16.msra.mxu0 %v1506
        %1563 = vmatpush.bf16.msra.mxu0 %v1504
        %1564 = vmatpush.bf16.msra.mxu0 %v1502
        %1565 = vmatpush.bf16.msra.mxu0 %v1500
        %1566 = vmatpush.bf16.msra.mxu0 %v1498
        %1567 = vmatpush.bf16.msra.mxu0 %v1496
        %1568 = vmatmul.bf16.gmra.mxu0 %v1360
        %v1569 = vpop.f32.mrf.mxu0
        %v1570 = vadd.f32 %v1396, %v1569
        %v1571 = vpop.f32.mrf.mxu0
        %v1572 = vadd.f32 %v1396, %v1571
        %1573 = vdwg.mxu0
        %1574 = vmatpush.bf16.msra.mxu0 %v1526
        %1575 = vmatpush.bf16.msra.mxu0 %v1524
        %1576 = vmatpush.bf16.msra.mxu0 %v1522
        %1577 = vmatpush.bf16.msra.mxu0 %v1520
        %1578 = vmatpush.bf16.msra.mxu0 %v1518
        %1579 = vmatpush.bf16.msra.mxu0 %v1516
        %1580 = vmatpush.bf16.msra.mxu0 %v1514
        %1581 = vmatpush.bf16.msra.mxu0 %v1512
        %1582 = vmatmul.bf16.gmra.mxu0 %v1361
        %v1583 = vpop.f32.mrf.mxu0
        %v1584 = vadd.f32 %v1570, %v1583
        %v1585 = vpop.f32.mrf.mxu0
        %v1586 = vadd.f32 %v1572, %v1585
        %1587 = vdwg.mxu0
        %1588 = vmatpush.bf16.msra.mxu0 %v1511
        %1589 = vmatpush.bf16.msra.mxu0 %v1509
        %1590 = vmatpush.bf16.msra.mxu0 %v1507
        %1591 = vmatpush.bf16.msra.mxu0 %v1505
        %1592 = vmatpush.bf16.msra.mxu0 %v1503
        %1593 = vmatpush.bf16.msra.mxu0 %v1501
        %1594 = vmatpush.bf16.msra.mxu0 %v1499
        %1595 = vmatpush.bf16.msra.mxu0 %v1497
        %1596 = vmatmul.bf16.gmra.mxu0 %v1360
        %v1597 = vpop.f32.mrf.mxu0
        %v1598 = vadd.f32 %v1397, %v1597
        %v1599 = vpop.f32.mrf.mxu0
        %v1600 = vadd.f32 %v1397, %v1599
        %1601 = vdwg.mxu0
        %1602 = vmatpush.bf16.msra.mxu0 %v1527
        %1603 = vmatpush.bf16.msra.mxu0 %v1525
        %1604 = vmatpush.bf16.msra.mxu0 %v1523
        %1605 = vmatpush.bf16.msra.mxu0 %v1521
        %1606 = vmatpush.bf16.msra.mxu0 %v1519
        %1607 = vmatpush.bf16.msra.mxu0 %v1517
        %1608 = vmatpush.bf16.msra.mxu0 %v1515
        %1609 = vmatpush.bf16.msra.mxu0 %v1513
        %1610 = vmatmul.bf16.gmra.mxu0 %v1361
        %v1611 = vpop.f32.mrf.mxu0
        %v1612 = vadd.f32 %v1598, %v1611
        %v1613 = vpop.f32.mrf.mxu0
        %v1614 = vadd.f32 %v1600, %v1613
        %1615 = vdwg.mxu0
        %v1616 = vld [vmem:[%s1002] sm:$0xff]
        %v1617 = vld [vmem:[%s1002 + $0x8] sm:$0xff]
        %v1618 = vld [vmem:[%s1002 + $0x10] sm:$0xff]
        %v1619 = vld [vmem:[%s1002 + $0x18] sm:$0xff]
        %v1620 = vld [vmem:[%s1002 + $0x20] sm:$0xff]
        %v1621 = vld [vmem:[%s1002 + $0x28] sm:$0xff]
        %v1622 = vld [vmem:[%s1002 + $0x30] sm:$0xff]
        %v1623 = vld [vmem:[%s1002 + $0x38] sm:$0xff]
        %v1624 = vld [vmem:[%s1002 + $0x40] sm:$0xff]
        %v1625 = vld [vmem:[%s1002 + $0x48] sm:$0xff]
        %v1626 = vld [vmem:[%s1002 + $0x50] sm:$0xff]
        %v1627 = vld [vmem:[%s1002 + $0x58] sm:$0xff]
        %v1628 = vld [vmem:[%s1002 + $0x60] sm:$0xff]
        %v1629 = vld [vmem:[%s1002 + $0x68] sm:$0xff]
        %v1630 = vld [vmem:[%s1002 + $0x70] sm:$0xff]
        %v1631 = vld [vmem:[%s1002 + $0x78] sm:$0xff]
        %v1632 = vld [vmem:[%s1002 + $0x80] sm:$0xff]
        %v1633 = vld [vmem:[%s1002 + $0x88] sm:$0xff]
        %v1634 = vld [vmem:[%s1002 + $0x90] sm:$0xff]
        %v1635 = vld [vmem:[%s1002 + $0x98] sm:$0xff]
        %v1636 = vld [vmem:[%s1002 + $0xa0] sm:$0xff]
        %v1637 = vld [vmem:[%s1002 + $0xa8] sm:$0xff]
        %v1638 = vld [vmem:[%s1002 + $0xb0] sm:$0xff]
        %v1639 = vld [vmem:[%s1002 + $0xb8] sm:$0xff]
        %v1640 = vld [vmem:[%s1002 + $0xc0] sm:$0xff]
        %v1641 = vld [vmem:[%s1002 + $0xc8] sm:$0xff]
        %v1642 = vld [vmem:[%s1002 + $0xd0] sm:$0xff]
        %v1643 = vld [vmem:[%s1002 + $0xd8] sm:$0xff]
        %v1644 = vld [vmem:[%s1002 + $0xe0] sm:$0xff]
        %v1645 = vld [vmem:[%s1002 + $0xe8] sm:$0xff]
        %v1646 = vld [vmem:[%s1002 + $0xf0] sm:$0xff]
        %v1647 = vld [vmem:[%s1002 + $0xf8] sm:$0xff]
        %v1648 = vld [vmem:[%s1012] sm:$0x3]
        %v1650 = vperm.slane %v1648, 0
        %v1651 = vperm.slane %v1648, 1
        %v1686 = vunpack.c.l.b16 %v1616
        %v1687 = vunpack.c.h.b16 %v1616
        %v1688 = vunpack.c.l.b16 %v1617
        %v1689 = vunpack.c.h.b16 %v1617
        %v1690 = vunpack.c.l.b16 %v1618
        %v1691 = vunpack.c.h.b16 %v1618
        %v1692 = vunpack.c.l.b16 %v1619
        %v1693 = vunpack.c.h.b16 %v1619
        %v1694 = vunpack.c.l.b16 %v1620
        %v1695 = vunpack.c.h.b16 %v1620
        %v1696 = vunpack.c.l.b16 %v1621
        %v1697 = vunpack.c.h.b16 %v1621
        %v1698 = vunpack.c.l.b16 %v1622
        %v1699 = vunpack.c.h.b16 %v1622
        %v1700 = vunpack.c.l.b16 %v1623
        %v1701 = vunpack.c.h.b16 %v1623
        %v1702 = vunpack.c.l.b16 %v1624
        %v1703 = vunpack.c.h.b16 %v1624
        %v1704 = vunpack.c.l.b16 %v1625
        %v1705 = vunpack.c.h.b16 %v1625
        %v1706 = vunpack.c.l.b16 %v1626
        %v1707 = vunpack.c.h.b16 %v1626
        %v1708 = vunpack.c.l.b16 %v1627
        %v1709 = vunpack.c.h.b16 %v1627
        %v1710 = vunpack.c.l.b16 %v1628
        %v1711 = vunpack.c.h.b16 %v1628
        %v1712 = vunpack.c.l.b16 %v1629
        %v1713 = vunpack.c.h.b16 %v1629
        %v1714 = vunpack.c.l.b16 %v1630
        %v1715 = vunpack.c.h.b16 %v1630
        %v1716 = vunpack.c.l.b16 %v1631
        %v1717 = vunpack.c.h.b16 %v1631
        %v1718 = vunpack.c.l.b16 %v1632
        %v1719 = vunpack.c.h.b16 %v1632
        %v1720 = vunpack.c.l.b16 %v1633
        %v1721 = vunpack.c.h.b16 %v1633
        %v1722 = vunpack.c.l.b16 %v1634
        %v1723 = vunpack.c.h.b16 %v1634
        %v1724 = vunpack.c.l.b16 %v1635
        %v1725 = vunpack.c.h.b16 %v1635
        %v1726 = vunpack.c.l.b16 %v1636
        %v1727 = vunpack.c.h.b16 %v1636
        %v1728 = vunpack.c.l.b16 %v1637
        %v1729 = vunpack.c.h.b16 %v1637
        %v1730 = vunpack.c.l.b16 %v1638
        %v1731 = vunpack.c.h.b16 %v1638
        %v1732 = vunpack.c.l.b16 %v1639
        %v1733 = vunpack.c.h.b16 %v1639
        %v1734 = vunpack.c.l.b16 %v1640
        %v1735 = vunpack.c.h.b16 %v1640
        %v1736 = vunpack.c.l.b16 %v1641
        %v1737 = vunpack.c.h.b16 %v1641
        %v1738 = vunpack.c.l.b16 %v1642
        %v1739 = vunpack.c.h.b16 %v1642
        %v1740 = vunpack.c.l.b16 %v1643
        %v1741 = vunpack.c.h.b16 %v1643
        %v1742 = vunpack.c.l.b16 %v1644
        %v1743 = vunpack.c.h.b16 %v1644
        %v1744 = vunpack.c.l.b16 %v1645
        %v1745 = vunpack.c.h.b16 %v1645
        %v1746 = vunpack.c.l.b16 %v1646
        %v1747 = vunpack.c.h.b16 %v1646
        %v1748 = vunpack.c.l.b16 %v1647
        %v1749 = vunpack.c.h.b16 %v1647
        %v1750 = vpack.c.b16 %v1688, %v1686
        %v1751 = vpack.c.b16 %v1689, %v1687
        %v1752 = vpack.c.b16 %v1692, %v1690
        %v1753 = vpack.c.b16 %v1693, %v1691
        %v1754 = vpack.c.b16 %v1696, %v1694
        %v1755 = vpack.c.b16 %v1697, %v1695
        %v1756 = vpack.c.b16 %v1700, %v1698
        %v1757 = vpack.c.b16 %v1701, %v1699
        %v1758 = vpack.c.b16 %v1704, %v1702
        %v1759 = vpack.c.b16 %v1705, %v1703
        %v1760 = vpack.c.b16 %v1708, %v1706
        %v1761 = vpack.c.b16 %v1709, %v1707
        %v1762 = vpack.c.b16 %v1712, %v1710
        %v1763 = vpack.c.b16 %v1713, %v1711
        %v1764 = vpack.c.b16 %v1716, %v1714
        %v1765 = vpack.c.b16 %v1717, %v1715
        %v1766 = vpack.c.b16 %v1720, %v1718
        %v1767 = vpack.c.b16 %v1721, %v1719
        %v1768 = vpack.c.b16 %v1724, %v1722
        %v1769 = vpack.c.b16 %v1725, %v1723
        %v1770 = vpack.c.b16 %v1728, %v1726
        %v1771 = vpack.c.b16 %v1729, %v1727
        %v1772 = vpack.c.b16 %v1732, %v1730
        %v1773 = vpack.c.b16 %v1733, %v1731
        %v1774 = vpack.c.b16 %v1736, %v1734
        %v1775 = vpack.c.b16 %v1737, %v1735
        %v1776 = vpack.c.b16 %v1740, %v1738
        %v1777 = vpack.c.b16 %v1741, %v1739
        %v1778 = vpack.c.b16 %v1744, %v1742
        %v1779 = vpack.c.b16 %v1745, %v1743
        %v1780 = vpack.c.b16 %v1748, %v1746
        %v1781 = vpack.c.b16 %v1749, %v1747
        %1814 = vmatpush.bf16.msra.mxu0 %v1764
        %1815 = vmatpush.bf16.msra.mxu0 %v1762
        %1816 = vmatpush.bf16.msra.mxu0 %v1760
        %1817 = vmatpush.bf16.msra.mxu0 %v1758
        %1818 = vmatpush.bf16.msra.mxu0 %v1756
        %1819 = vmatpush.bf16.msra.mxu0 %v1754
        %1820 = vmatpush.bf16.msra.mxu0 %v1752
        %1821 = vmatpush.bf16.msra.mxu0 %v1750
        %1822 = vmatmul.bf16.gmra.mxu0 %v1360
        %v1823 = vpop.f32.mrf.mxu0
        %v1824 = vadd.f32 %v1650, %v1823
        %v1825 = vpop.f32.mrf.mxu0
        %v1826 = vadd.f32 %v1650, %v1825
        %1827 = vdwg.mxu0
        %1828 = vmatpush.bf16.msra.mxu0 %v1780
        %1829 = vmatpush.bf16.msra.mxu0 %v1778
        %1830 = vmatpush.bf16.msra.mxu0 %v1776
        %1831 = vmatpush.bf16.msra.mxu0 %v1774
        %1832 = vmatpush.bf16.msra.mxu0 %v1772
        %1833 = vmatpush.bf16.msra.mxu0 %v1770
        %1834 = vmatpush.bf16.msra.mxu0 %v1768
        %1835 = vmatpush.bf16.msra.mxu0 %v1766
        %1836 = vmatmul.bf16.gmra.mxu0 %v1361
        %v1837 = vpop.f32.mrf.mxu0
        %v1838 = vadd.f32 %v1824, %v1837
        %v1839 = vpop.f32.mrf.mxu0
        %v1840 = vadd.f32 %v1826, %v1839
        %1841 = vdwg.mxu0
        %1842 = vmatpush.bf16.msra.mxu0 %v1765
        %1843 = vmatpush.bf16.msra.mxu0 %v1763
        %1844 = vmatpush.bf16.msra.mxu0 %v1761
        %1845 = vmatpush.bf16.msra.mxu0 %v1759
        %1846 = vmatpush.bf16.msra.mxu0 %v1757
        %1847 = vmatpush.bf16.msra.mxu0 %v1755
        %1848 = vmatpush.bf16.msra.mxu0 %v1753
        %1849 = vmatpush.bf16.msra.mxu0 %v1751
        %1850 = vmatmul.bf16.gmra.mxu0 %v1360
        %v1851 = vpop.f32.mrf.mxu0
        %v1852 = vadd.f32 %v1651, %v1851
        %v1853 = vpop.f32.mrf.mxu0
        %v1854 = vadd.f32 %v1651, %v1853
        %1855 = vdwg.mxu0
        %1856 = vmatpush.bf16.msra.mxu0 %v1781
        %1857 = vmatpush.bf16.msra.mxu0 %v1779
        %1858 = vmatpush.bf16.msra.mxu0 %v1777
        %1859 = vmatpush.bf16.msra.mxu0 %v1775
        %1860 = vmatpush.bf16.msra.mxu0 %v1773
        %1861 = vmatpush.bf16.msra.mxu0 %v1771
        %1862 = vmatpush.bf16.msra.mxu0 %v1769
        %1863 = vmatpush.bf16.msra.mxu0 %v1767
        %1864 = vmatmul.bf16.gmra.mxu0 %v1361
        %v1865 = vpop.f32.mrf.mxu0
        %v1866 = vadd.f32 %v1852, %v1865
        %v1867 = vpop.f32.mrf.mxu0
        %v1868 = vadd.f32 %v1854, %v1867
        %1869 = vdwg.mxu0
        %v1870 = vld [vmem:[%s1022] sm:$0xff]
        %v1871 = vld [vmem:[%s1022 + $0x8] sm:$0xff]
        %v1872 = vld [vmem:[%s1022 + $0x10] sm:$0xff]
        %v1873 = vld [vmem:[%s1022 + $0x18] sm:$0xff]
        %v1874 = vld [vmem:[%s1022 + $0x20] sm:$0xff]
        %v1875 = vld [vmem:[%s1022 + $0x28] sm:$0xff]
        %v1876 = vld [vmem:[%s1022 + $0x30] sm:$0xff]
        %v1877 = vld [vmem:[%s1022 + $0x38] sm:$0xff]
        %v1878 = vld [vmem:[%s1022 + $0x40] sm:$0xff]
        %v1879 = vld [vmem:[%s1022 + $0x48] sm:$0xff]
        %v1880 = vld [vmem:[%s1022 + $0x50] sm:$0xff]
        %v1881 = vld [vmem:[%s1022 + $0x58] sm:$0xff]
        %v1882 = vld [vmem:[%s1022 + $0x60] sm:$0xff]
        %v1883 = vld [vmem:[%s1022 + $0x68] sm:$0xff]
        %v1884 = vld [vmem:[%s1022 + $0x70] sm:$0xff]
        %v1885 = vld [vmem:[%s1022 + $0x78] sm:$0xff]
        %v1886 = vld [vmem:[%s1022 + $0x80] sm:$0xff]
        %v1887 = vld [vmem:[%s1022 + $0x88] sm:$0xff]
        %v1888 = vld [vmem:[%s1022 + $0x90] sm:$0xff]
        %v1889 = vld [vmem:[%s1022 + $0x98] sm:$0xff]
        %v1890 = vld [vmem:[%s1022 + $0xa0] sm:$0xff]
        %v1891 = vld [vmem:[%s1022 + $0xa8] sm:$0xff]
        %v1892 = vld [vmem:[%s1022 + $0xb0] sm:$0xff]
        %v1893 = vld [vmem:[%s1022 + $0xb8] sm:$0xff]
        %v1894 = vld [vmem:[%s1022 + $0xc0] sm:$0xff]
        %v1895 = vld [vmem:[%s1022 + $0xc8] sm:$0xff]
        %v1896 = vld [vmem:[%s1022 + $0xd0] sm:$0xff]
        %v1897 = vld [vmem:[%s1022 + $0xd8] sm:$0xff]
        %v1898 = vld [vmem:[%s1022 + $0xe0] sm:$0xff]
        %v1899 = vld [vmem:[%s1022 + $0xe8] sm:$0xff]
        %v1900 = vld [vmem:[%s1022 + $0xf0] sm:$0xff]
        %v1901 = vld [vmem:[%s1022 + $0xf8] sm:$0xff]
        %v1902 = vld [vmem:[%s1032] sm:$0x3]
        %v1904 = vperm.slane %v1902, 0
        %v1905 = vperm.slane %v1902, 1
        %v1940 = vunpack.c.l.b16 %v1870
        %v1941 = vunpack.c.h.b16 %v1870
        %v1942 = vunpack.c.l.b16 %v1871
        %v1943 = vunpack.c.h.b16 %v1871
        %v1944 = vunpack.c.l.b16 %v1872
        %v1945 = vunpack.c.h.b16 %v1872
        %v1946 = vunpack.c.l.b16 %v1873
        %v1947 = vunpack.c.h.b16 %v1873
        %v1948 = vunpack.c.l.b16 %v1874
        %v1949 = vunpack.c.h.b16 %v1874
        %v1950 = vunpack.c.l.b16 %v1875
        %v1951 = vunpack.c.h.b16 %v1875
        %v1952 = vunpack.c.l.b16 %v1876
        %v1953 = vunpack.c.h.b16 %v1876
        %v1954 = vunpack.c.l.b16 %v1877
        %v1955 = vunpack.c.h.b16 %v1877
        %v1956 = vunpack.c.l.b16 %v1878
        %v1957 = vunpack.c.h.b16 %v1878
        %v1958 = vunpack.c.l.b16 %v1879
        %v1959 = vunpack.c.h.b16 %v1879
        %v1960 = vunpack.c.l.b16 %v1880
        %v1961 = vunpack.c.h.b16 %v1880
        %v1962 = vunpack.c.l.b16 %v1881
        %v1963 = vunpack.c.h.b16 %v1881
        %v1964 = vunpack.c.l.b16 %v1882
        %v1965 = vunpack.c.h.b16 %v1882
        %v1966 = vunpack.c.l.b16 %v1883
        %v1967 = vunpack.c.h.b16 %v1883
        %v1968 = vunpack.c.l.b16 %v1884
        %v1969 = vunpack.c.h.b16 %v1884
        %v1970 = vunpack.c.l.b16 %v1885
        %v1971 = vunpack.c.h.b16 %v1885
        %v1972 = vunpack.c.l.b16 %v1886
        %v1973 = vunpack.c.h.b16 %v1886
        %v1974 = vunpack.c.l.b16 %v1887
        %v1975 = vunpack.c.h.b16 %v1887
        %v1976 = vunpack.c.l.b16 %v1888
        %v1977 = vunpack.c.h.b16 %v1888
        %v1978 = vunpack.c.l.b16 %v1889
        %v1979 = vunpack.c.h.b16 %v1889
        %v1980 = vunpack.c.l.b16 %v1890
        %v1981 = vunpack.c.h.b16 %v1890
        %v1982 = vunpack.c.l.b16 %v1891
        %v1983 = vunpack.c.h.b16 %v1891
        %v1984 = vunpack.c.l.b16 %v1892
        %v1985 = vunpack.c.h.b16 %v1892
        %v1986 = vunpack.c.l.b16 %v1893
        %v1987 = vunpack.c.h.b16 %v1893
        %v1988 = vunpack.c.l.b16 %v1894
        %v1989 = vunpack.c.h.b16 %v1894
        %v1990 = vunpack.c.l.b16 %v1895
        %v1991 = vunpack.c.h.b16 %v1895
        %v1992 = vunpack.c.l.b16 %v1896
        %v1993 = vunpack.c.h.b16 %v1896
        %v1994 = vunpack.c.l.b16 %v1897
        %v1995 = vunpack.c.h.b16 %v1897
        %v1996 = vunpack.c.l.b16 %v1898
        %v1997 = vunpack.c.h.b16 %v1898
        %v1998 = vunpack.c.l.b16 %v1899
        %v1999 = vunpack.c.h.b16 %v1899
        %v2000 = vunpack.c.l.b16 %v1900
        %v2001 = vunpack.c.h.b16 %v1900
        %v2002 = vunpack.c.l.b16 %v1901
        %v2003 = vunpack.c.h.b16 %v1901
        %v2004 = vpack.c.b16 %v1942, %v1940
        %v2005 = vpack.c.b16 %v1943, %v1941
        %v2006 = vpack.c.b16 %v1946, %v1944
        %v2007 = vpack.c.b16 %v1947, %v1945
        %v2008 = vpack.c.b16 %v1950, %v1948
        %v2009 = vpack.c.b16 %v1951, %v1949
        %v2010 = vpack.c.b16 %v1954, %v1952
        %v2011 = vpack.c.b16 %v1955, %v1953
        %v2012 = vpack.c.b16 %v1958, %v1956
        %v2013 = vpack.c.b16 %v1959, %v1957
        %v2014 = vpack.c.b16 %v1962, %v1960
        %v2015 = vpack.c.b16 %v1963, %v1961
        %v2016 = vpack.c.b16 %v1966, %v1964
        %v2017 = vpack.c.b16 %v1967, %v1965
        %v2018 = vpack.c.b16 %v1970, %v1968
        %v2019 = vpack.c.b16 %v1971, %v1969
        %v2020 = vpack.c.b16 %v1974, %v1972
        %v2021 = vpack.c.b16 %v1975, %v1973
        %v2022 = vpack.c.b16 %v1978, %v1976
        %v2023 = vpack.c.b16 %v1979, %v1977
        %v2024 = vpack.c.b16 %v1982, %v1980
        %v2025 = vpack.c.b16 %v1983, %v1981
        %v2026 = vpack.c.b16 %v1986, %v1984
        %v2027 = vpack.c.b16 %v1987, %v1985
        %v2028 = vpack.c.b16 %v1990, %v1988
        %v2029 = vpack.c.b16 %v1991, %v1989
        %v2030 = vpack.c.b16 %v1994, %v1992
        %v2031 = vpack.c.b16 %v1995, %v1993
        %v2032 = vpack.c.b16 %v1998, %v1996
        %v2033 = vpack.c.b16 %v1999, %v1997
        %v2034 = vpack.c.b16 %v2002, %v2000
        %v2035 = vpack.c.b16 %v2003, %v2001
        %2068 = vmatpush.bf16.msra.mxu0 %v2018
        %2069 = vmatpush.bf16.msra.mxu0 %v2016
        %2070 = vmatpush.bf16.msra.mxu0 %v2014
        %2071 = vmatpush.bf16.msra.mxu0 %v2012
        %2072 = vmatpush.bf16.msra.mxu0 %v2010
        %2073 = vmatpush.bf16.msra.mxu0 %v2008
        %2074 = vmatpush.bf16.msra.mxu0 %v2006
        %2075 = vmatpush.bf16.msra.mxu0 %v2004
        %2076 = vmatmul.bf16.gmra.mxu0 %v1360
        %v2077 = vpop.f32.mrf.mxu0
        %v2078 = vadd.f32 %v1904, %v2077
        %v2079 = vpop.f32.mrf.mxu0
        %v2080 = vadd.f32 %v1904, %v2079
        %2081 = vdwg.mxu0
        %2082 = vmatpush.bf16.msra.mxu0 %v2034
        %2083 = vmatpush.bf16.msra.mxu0 %v2032
        %2084 = vmatpush.bf16.msra.mxu0 %v2030
        %2085 = vmatpush.bf16.msra.mxu0 %v2028
        %2086 = vmatpush.bf16.msra.mxu0 %v2026
        %2087 = vmatpush.bf16.msra.mxu0 %v2024
        %2088 = vmatpush.bf16.msra.mxu0 %v2022
        %2089 = vmatpush.bf16.msra.mxu0 %v2020
        %2090 = vmatmul.bf16.gmra.mxu0 %v1361
        %v2091 = vpop.f32.mrf.mxu0
        %v2092 = vadd.f32 %v2078, %v2091
        %v2093 = vpop.f32.mrf.mxu0
        %v2094 = vadd.f32 %v2080, %v2093
        %2095 = vdwg.mxu0
        %2096 = vmatpush.bf16.msra.mxu0 %v2019
        %2097 = vmatpush.bf16.msra.mxu0 %v2017
        %2098 = vmatpush.bf16.msra.mxu0 %v2015
        %2099 = vmatpush.bf16.msra.mxu0 %v2013
        %2100 = vmatpush.bf16.msra.mxu0 %v2011
        %2101 = vmatpush.bf16.msra.mxu0 %v2009
        %2102 = vmatpush.bf16.msra.mxu0 %v2007
        %2103 = vmatpush.bf16.msra.mxu0 %v2005
        %2104 = vmatmul.bf16.gmra.mxu0 %v1360
        %v2105 = vpop.f32.mrf.mxu0
        %v2106 = vadd.f32 %v1905, %v2105
        %v2107 = vpop.f32.mrf.mxu0
        %v2108 = vadd.f32 %v1905, %v2107
        %2109 = vdwg.mxu0
        %2110 = vmatpush.bf16.msra.mxu0 %v2035
        %2111 = vmatpush.bf16.msra.mxu0 %v2033
        %2112 = vmatpush.bf16.msra.mxu0 %v2031
        %2113 = vmatpush.bf16.msra.mxu0 %v2029
        %2114 = vmatpush.bf16.msra.mxu0 %v2027
        %2115 = vmatpush.bf16.msra.mxu0 %v2025
        %2116 = vmatpush.bf16.msra.mxu0 %v2023
        %2117 = vmatpush.bf16.msra.mxu0 %v2021
        %2118 = vmatmul.bf16.gmra.mxu0 %v1361
        %v2119 = vpop.f32.mrf.mxu0
        %v2120 = vadd.f32 %v2106, %v2119
        %v2121 = vpop.f32.mrf.mxu0
        %v2122 = vadd.f32 %v2108, %v2121
        %2123 = vdwg.mxu0
        %v2124 = vrot.slane %v1584, 4
        %vm2125 = vcmask 1047556
        %v2126 = vsel %vm2125, 0.0, %v2124
        %v2128 = vunpack.c.l.s4 1983009808
        %v2129 = vunpack.c.0.s8 %v2128
        %v2130 = vperm.slane %v1584, %v2129
        %v2132 = vunpack.c.l.s4 1983009808
        %v2133 = vunpack.c.0.s8 %v2132
        %v2134 = vperm.slane %v2126, %v2133
        %v2135 = vrot.slane %v1612, 4
        %v2136 = vsel %vm2125, 0.0, %v2135
        %v2138 = vunpack.c.l.s4 1983009808
        %v2139 = vunpack.c.0.s8 %v2138
        %v2140 = vperm.slane %v1612, %v2139
        %v2142 = vunpack.c.l.s4 1983009808
        %v2143 = vunpack.c.0.s8 %v2142
        %v2144 = vperm.slane %v2136, %v2143
        %v2145 = vrot.slane %v2140, 4
        %v2146 = vsel %vm2125, %v2145, %v2130
        %v2147 = vrot.slane %v2130, 4
        %v2148 = vsel %vm2125, %v2140, %v2147
        %v2150 = vunpack.c.l.s4 1934713408
        %v2151 = vunpack.c.0.s8 %v2150
        %v2152 = vperm.slane %v2146, %v2151
        %v2154 = vunpack.c.l.s4 1934713408
        %v2155 = vunpack.c.0.s8 %v2154
        %v2156 = vperm.slane %v2148, %v2155
        %v2157 = vrot.slane %v2144, 4
        %v2158 = vsel %vm2125, %v2157, %v2134
        %v2159 = vrot.slane %v2134, 4
        %v2160 = vsel %vm2125, %v2144, %v2159
        %v2162 = vunpack.c.l.s4 1934713408
        %v2163 = vunpack.c.0.s8 %v2162
        %v2164 = vperm.slane %v2158, %v2163
        %v2166 = vunpack.c.l.s4 1934713408
        %v2167 = vunpack.c.0.s8 %v2166
        %v2168 = vperm.slane %v2160, %v2167
        %v2169 = vrot.slane %v2152, 4
        %v2170 = vsel %vm2125, 0.0, %v2169
        %v2171 = vrot.slane %v2156, 4
        %v2172 = vsel %vm2125, 0.0, %v2171
        %v2173 = vrot.slane %v2164, 4
        %v2174 = vsel %vm2125, 0.0, %v2173
        %v2175 = vrot.slane %v2168, 4
        %v2176 = vsel %vm2125, 0.0, %v2175
        %v2177 = vrot.slane %v1586, 4
        %v2178 = vsel %vm2125, 0.0, %v2177
        %v2180 = vunpack.c.l.s4 1983009808
        %v2181 = vunpack.c.0.s8 %v2180
        %v2182 = vperm.slane %v1586, %v2181
        %v2184 = vunpack.c.l.s4 1983009808
        %v2185 = vunpack.c.0.s8 %v2184
        %v2186 = vperm.slane %v2178, %v2185
        %v2187 = vrot.slane %v1614, 4
        %v2188 = vsel %vm2125, 0.0, %v2187
        %v2190 = vunpack.c.l.s4 1983009808
        %v2191 = vunpack.c.0.s8 %v2190
        %v2192 = vperm.slane %v1614, %v2191
        %v2194 = vunpack.c.l.s4 1983009808
        %v2195 = vunpack.c.0.s8 %v2194
        %v2196 = vperm.slane %v2188, %v2195
        %v2197 = vrot.slane %v2192, 4
        %v2198 = vsel %vm2125, %v2197, %v2182
        %v2199 = vrot.slane %v2182, 4
        %v2200 = vsel %vm2125, %v2192, %v2199
        %v2202 = vunpack.c.l.s4 1934713408
        %v2203 = vunpack.c.0.s8 %v2202
        %v2204 = vperm.slane %v2198, %v2203
        %v2206 = vunpack.c.l.s4 1934713408
        %v2207 = vunpack.c.0.s8 %v2206
        %v2208 = vperm.slane %v2200, %v2207
        %v2209 = vrot.slane %v2196, 4
        %v2210 = vsel %vm2125, %v2209, %v2186
        %v2211 = vrot.slane %v2186, 4
        %v2212 = vsel %vm2125, %v2196, %v2211
        %v2214 = vunpack.c.l.s4 1934713408
        %v2215 = vunpack.c.0.s8 %v2214
        %v2216 = vperm.slane %v2210, %v2215
        %v2218 = vunpack.c.l.s4 1934713408
        %v2219 = vunpack.c.0.s8 %v2218
        %v2220 = vperm.slane %v2212, %v2219
        %v2221 = vrot.slane %v2204, 4
        %v2222 = vsel %vm2125, 0.0, %v2221
        %v2223 = vrot.slane %v2208, 4
        %v2224 = vsel %vm2125, 0.0, %v2223
        %v2225 = vrot.slane %v2216, 4
        %v2226 = vsel %vm2125, 0.0, %v2225
        %v2227 = vrot.slane %v2220, 4
        %v2228 = vsel %vm2125, 0.0, %v2227
        %v2229 = vsel %vm2125, %v2171, %v2152
        %v2231 = vunpack.c.l.s4 1983009808
        %v2232 = vunpack.c.0.s8 %v2231
        %v2233 = vperm.slane %v2229, %v2232
        %v2234 = vrot.slane %v2172, 4
        %v2235 = vsel %vm2125, %v2234, %v2170
        %v2237 = vunpack.c.l.s4 1983009808
        %v2238 = vunpack.c.0.s8 %v2237
        %v2239 = vperm.slane %v2235, %v2238
        %v2240 = vsel %vm2125, %v2175, %v2164
        %v2242 = vunpack.c.l.s4 1983009808
        %v2243 = vunpack.c.0.s8 %v2242
        %v2244 = vperm.slane %v2240, %v2243
        %v2245 = vrot.slane %v2176, 4
        %v2246 = vsel %vm2125, %v2245, %v2174
        %v2248 = vunpack.c.l.s4 1983009808
        %v2249 = vunpack.c.0.s8 %v2248
        %v2250 = vperm.slane %v2246, %v2249
        %v2251 = vrot.slane %v2239, 4
        %v2252 = vsel %vm2125, %v2251, %v2233
        %v2254 = vunpack.c.l.s4 1934713408
        %v2255 = vunpack.c.0.s8 %v2254
        %v2256 = vperm.slane %v2252, %v2255
        %v2257 = vrot.slane %v2250, 4
        %v2258 = vsel %vm2125, %v2257, %v2244
        %v2260 = vunpack.c.l.s4 1934713408
        %v2261 = vunpack.c.0.s8 %v2260
        %v2262 = vperm.slane %v2258, %v2261
        %v2263 = vrot.slane %v2262, 4
        %v2264 = vsel %vm2125, %v2263, %v2256
        %v2265 = vrot.slane %v2256, 4
        %v2266 = vsel %vm2125, %v2262, %v2265
        %v2267 = vsel %vm2125, %v2223, %v2204
        %v2269 = vunpack.c.l.s4 1983009808
        %v2270 = vunpack.c.0.s8 %v2269
        %v2271 = vperm.slane %v2267, %v2270
        %v2272 = vrot.slane %v2224, 4
        %v2273 = vsel %vm2125, %v2272, %v2222
        %v2275 = vunpack.c.l.s4 1983009808
        %v2276 = vunpack.c.0.s8 %v2275
        %v2277 = vperm.slane %v2273, %v2276
        %v2278 = vsel %vm2125, %v2227, %v2216
        %v2280 = vunpack.c.l.s4 1983009808
        %v2281 = vunpack.c.0.s8 %v2280
        %v2282 = vperm.slane %v2278, %v2281
        %v2283 = vrot.slane %v2228, 4
        %v2284 = vsel %vm2125, %v2283, %v2226
        %v2286 = vunpack.c.l.s4 1983009808
        %v2287 = vunpack.c.0.s8 %v2286
        %v2288 = vperm.slane %v2284, %v2287
        %v2289 = vrot.slane %v2277, 4
        %v2290 = vsel %vm2125, %v2289, %v2271
        %v2292 = vunpack.c.l.s4 1934713408
        %v2293 = vunpack.c.0.s8 %v2292
        %v2294 = vperm.slane %v2290, %v2293
        %v2295 = vrot.slane %v2288, 4
        %v2296 = vsel %vm2125, %v2295, %v2282
        %v2298 = vunpack.c.l.s4 1934713408
        %v2299 = vunpack.c.0.s8 %v2298
        %v2300 = vperm.slane %v2296, %v2299
        %v2301 = vrot.slane %v2300, 4
        %v2302 = vsel %vm2125, %v2301, %v2294
        %v2303 = vrot.slane %v2294, 4
        %v2304 = vsel %vm2125, %v2300, %v2303
        %v2305 = vrot.slane %v1838, 4
        %v2306 = vsel %vm2125, 0.0, %v2305
        %v2308 = vunpack.c.l.s4 1983009808
        %v2309 = vunpack.c.0.s8 %v2308
        %v2310 = vperm.slane %v1838, %v2309
        %v2312 = vunpack.c.l.s4 1983009808
        %v2313 = vunpack.c.0.s8 %v2312
        %v2314 = vperm.slane %v2306, %v2313
        %v2315 = vrot.slane %v1866, 4
        %v2316 = vsel %vm2125, 0.0, %v2315
        %v2318 = vunpack.c.l.s4 1983009808
        %v2319 = vunpack.c.0.s8 %v2318
        %v2320 = vperm.slane %v1866, %v2319
        %v2322 = vunpack.c.l.s4 1983009808
        %v2323 = vunpack.c.0.s8 %v2322
        %v2324 = vperm.slane %v2316, %v2323
        %v2325 = vrot.slane %v2320, 4
        %v2326 = vsel %vm2125, %v2325, %v2310
        %v2327 = vrot.slane %v2310, 4
        %v2328 = vsel %vm2125, %v2320, %v2327
        %v2330 = vunpack.c.l.s4 1934713408
        %v2331 = vunpack.c.0.s8 %v2330
        %v2332 = vperm.slane %v2326, %v2331
        %v2334 = vunpack.c.l.s4 1934713408
        %v2335 = vunpack.c.0.s8 %v2334
        %v2336 = vperm.slane %v2328, %v2335
        %v2337 = vrot.slane %v2324, 4
        %v2338 = vsel %vm2125, %v2337, %v2314
        %v2339 = vrot.slane %v2314, 4
        %v2340 = vsel %vm2125, %v2324, %v2339
        %v2342 = vunpack.c.l.s4 1934713408
        %v2343 = vunpack.c.0.s8 %v2342
        %v2344 = vperm.slane %v2338, %v2343
        %v2346 = vunpack.c.l.s4 1934713408
        %v2347 = vunpack.c.0.s8 %v2346
        %v2348 = vperm.slane %v2340, %v2347
        %v2349 = vrot.slane %v2332, 4
        %v2350 = vsel %vm2125, 0.0, %v2349
        %v2351 = vrot.slane %v2336, 4
        %v2352 = vsel %vm2125, 0.0, %v2351
        %v2353 = vrot.slane %v2344, 4
        %v2354 = vsel %vm2125, 0.0, %v2353
        %v2355 = vrot.slane %v2348, 4
        %v2356 = vsel %vm2125, 0.0, %v2355
        %v2357 = vrot.slane %v1840, 4
        %v2358 = vsel %vm2125, 0.0, %v2357
        %v2360 = vunpack.c.l.s4 1983009808
        %v2361 = vunpack.c.0.s8 %v2360
        %v2362 = vperm.slane %v1840, %v2361
        %v2364 = vunpack.c.l.s4 1983009808
        %v2365 = vunpack.c.0.s8 %v2364
        %v2366 = vperm.slane %v2358, %v2365
        %v2367 = vrot.slane %v1868, 4
        %v2368 = vsel %vm2125, 0.0, %v2367
        %v2370 = vunpack.c.l.s4 1983009808
        %v2371 = vunpack.c.0.s8 %v2370
        %v2372 = vperm.slane %v1868, %v2371
        %v2374 = vunpack.c.l.s4 1983009808
        %v2375 = vunpack.c.0.s8 %v2374
        %v2376 = vperm.slane %v2368, %v2375
        %v2377 = vrot.slane %v2372, 4
        %v2378 = vsel %vm2125, %v2377, %v2362
        %v2379 = vrot.slane %v2362, 4
        %v2380 = vsel %vm2125, %v2372, %v2379
        %v2382 = vunpack.c.l.s4 1934713408
        %v2383 = vunpack.c.0.s8 %v2382
        %v2384 = vperm.slane %v2378, %v2383
        %v2386 = vunpack.c.l.s4 1934713408
        %v2387 = vunpack.c.0.s8 %v2386
        %v2388 = vperm.slane %v2380, %v2387
        %v2389 = vrot.slane %v2376, 4
        %v2390 = vsel %vm2125, %v2389, %v2366
        %v2391 = vrot.slane %v2366, 4
        %v2392 = vsel %vm2125, %v2376, %v2391
        %v2394 = vunpack.c.l.s4 1934713408
        %v2395 = vunpack.c.0.s8 %v2394
        %v2396 = vperm.slane %v2390, %v2395
        %v2398 = vunpack.c.l.s4 1934713408
        %v2399 = vunpack.c.0.s8 %v2398
        %v2400 = vperm.slane %v2392, %v2399
        %v2401 = vrot.slane %v2384, 4
        %v2402 = vsel %vm2125, 0.0, %v2401
        %v2403 = vrot.slane %v2388, 4
        %v2404 = vsel %vm2125, 0.0, %v2403
        %v2405 = vrot.slane %v2396, 4
        %v2406 = vsel %vm2125, 0.0, %v2405
        %v2407 = vrot.slane %v2400, 4
        %v2408 = vsel %vm2125, 0.0, %v2407
        %v2409 = vsel %vm2125, %v2351, %v2332
        %v2411 = vunpack.c.l.s4 1983009808
        %v2412 = vunpack.c.0.s8 %v2411
        %v2413 = vperm.slane %v2409, %v2412
        %v2414 = vrot.slane %v2352, 4
        %v2415 = vsel %vm2125, %v2414, %v2350
        %v2417 = vunpack.c.l.s4 1983009808
        %v2418 = vunpack.c.0.s8 %v2417
        %v2419 = vperm.slane %v2415, %v2418
        %v2420 = vsel %vm2125, %v2355, %v2344
        %v2422 = vunpack.c.l.s4 1983009808
        %v2423 = vunpack.c.0.s8 %v2422
        %v2424 = vperm.slane %v2420, %v2423
        %v2425 = vrot.slane %v2356, 4
        %v2426 = vsel %vm2125, %v2425, %v2354
        %v2428 = vunpack.c.l.s4 1983009808
        %v2429 = vunpack.c.0.s8 %v2428
        %v2430 = vperm.slane %v2426, %v2429
        %v2431 = vrot.slane %v2419, 4
        %v2432 = vsel %vm2125, %v2431, %v2413
        %v2434 = vunpack.c.l.s4 1934713408
        %v2435 = vunpack.c.0.s8 %v2434
        %v2436 = vperm.slane %v2432, %v2435
        %v2437 = vrot.slane %v2430, 4
        %v2438 = vsel %vm2125, %v2437, %v2424
        %v2440 = vunpack.c.l.s4 1934713408
        %v2441 = vunpack.c.0.s8 %v2440
        %v2442 = vperm.slane %v2438, %v2441
        %v2443 = vrot.slane %v2442, 4
        %v2444 = vsel %vm2125, %v2443, %v2436
        %v2445 = vrot.slane %v2436, 4
        %v2446 = vsel %vm2125, %v2442, %v2445
        %v2447 = vsel %vm2125, %v2403, %v2384
        %v2449 = vunpack.c.l.s4 1983009808
        %v2450 = vunpack.c.0.s8 %v2449
        %v2451 = vperm.slane %v2447, %v2450
        %v2452 = vrot.slane %v2404, 4
        %v2453 = vsel %vm2125, %v2452, %v2402
        %v2455 = vunpack.c.l.s4 1983009808
        %v2456 = vunpack.c.0.s8 %v2455
        %v2457 = vperm.slane %v2453, %v2456
        %v2458 = vsel %vm2125, %v2407, %v2396
        %v2460 = vunpack.c.l.s4 1983009808
        %v2461 = vunpack.c.0.s8 %v2460
        %v2462 = vperm.slane %v2458, %v2461
        %v2463 = vrot.slane %v2408, 4
        %v2464 = vsel %vm2125, %v2463, %v2406
        %v2466 = vunpack.c.l.s4 1983009808
        %v2467 = vunpack.c.0.s8 %v2466
        %v2468 = vperm.slane %v2464, %v2467
        %v2469 = vrot.slane %v2457, 4
        %v2470 = vsel %vm2125, %v2469, %v2451
        %v2472 = vunpack.c.l.s4 1934713408
        %v2473 = vunpack.c.0.s8 %v2472
        %v2474 = vperm.slane %v2470, %v2473
        %v2475 = vrot.slane %v2468, 4
        %v2476 = vsel %vm2125, %v2475, %v2462
        %v2478 = vunpack.c.l.s4 1934713408
        %v2479 = vunpack.c.0.s8 %v2478
        %v2480 = vperm.slane %v2476, %v2479
        %v2481 = vrot.slane %v2480, 4
        %v2482 = vsel %vm2125, %v2481, %v2474
        %v2483 = vrot.slane %v2474, 4
        %v2484 = vsel %vm2125, %v2480, %v2483
        %v2485 = vrot.slane %v2092, 4
        %v2486 = vsel %vm2125, 0.0, %v2485
        %v2488 = vunpack.c.l.s4 1983009808
        %v2489 = vunpack.c.0.s8 %v2488
        %v2490 = vperm.slane %v2092, %v2489
        %v2492 = vunpack.c.l.s4 1983009808
        %v2493 = vunpack.c.0.s8 %v2492
        %v2494 = vperm.slane %v2486, %v2493
        %v2495 = vrot.slane %v2120, 4
        %v2496 = vsel %vm2125, 0.0, %v2495
        %v2498 = vunpack.c.l.s4 1983009808
        %v2499 = vunpack.c.0.s8 %v2498
        %v2500 = vperm.slane %v2120, %v2499
        %v2502 = vunpack.c.l.s4 1983009808
        %v2503 = vunpack.c.0.s8 %v2502
        %v2504 = vperm.slane %v2496, %v2503
        %v2505 = vrot.slane %v2500, 4
        %v2506 = vsel %vm2125, %v2505, %v2490
        %v2507 = vrot.slane %v2490, 4
        %v2508 = vsel %vm2125, %v2500, %v2507
        %v2510 = vunpack.c.l.s4 1934713408
        %v2511 = vunpack.c.0.s8 %v2510
        %v2512 = vperm.slane %v2506, %v2511
        %v2514 = vunpack.c.l.s4 1934713408
        %v2515 = vunpack.c.0.s8 %v2514
        %v2516 = vperm.slane %v2508, %v2515
        %v2517 = vrot.slane %v2504, 4
        %v2518 = vsel %vm2125, %v2517, %v2494
        %v2519 = vrot.slane %v2494, 4
        %v2520 = vsel %vm2125, %v2504, %v2519
        %v2522 = vunpack.c.l.s4 1934713408
        %v2523 = vunpack.c.0.s8 %v2522
        %v2524 = vperm.slane %v2518, %v2523
        %v2526 = vunpack.c.l.s4 1934713408
        %v2527 = vunpack.c.0.s8 %v2526
        %v2528 = vperm.slane %v2520, %v2527
        %v2529 = vrot.slane %v2512, 4
        %v2530 = vsel %vm2125, 0.0, %v2529
        %v2531 = vrot.slane %v2516, 4
        %v2532 = vsel %vm2125, 0.0, %v2531
        %v2533 = vrot.slane %v2524, 4
        %v2534 = vsel %vm2125, 0.0, %v2533
        %v2535 = vrot.slane %v2528, 4
        %v2536 = vsel %vm2125, 0.0, %v2535
        %v2537 = vrot.slane %v2094, 4
        %v2538 = vsel %vm2125, 0.0, %v2537
        %v2540 = vunpack.c.l.s4 1983009808
        %v2541 = vunpack.c.0.s8 %v2540
        %v2542 = vperm.slane %v2094, %v2541
        %v2544 = vunpack.c.l.s4 1983009808
        %v2545 = vunpack.c.0.s8 %v2544
        %v2546 = vperm.slane %v2538, %v2545
        %v2547 = vrot.slane %v2122, 4
        %v2548 = vsel %vm2125, 0.0, %v2547
        %v2550 = vunpack.c.l.s4 1983009808
        %v2551 = vunpack.c.0.s8 %v2550
        %v2552 = vperm.slane %v2122, %v2551
        %v2554 = vunpack.c.l.s4 1983009808
        %v2555 = vunpack.c.0.s8 %v2554
        %v2556 = vperm.slane %v2548, %v2555
        %v2557 = vrot.slane %v2552, 4
        %v2558 = vsel %vm2125, %v2557, %v2542
        %v2559 = vrot.slane %v2542, 4
        %v2560 = vsel %vm2125, %v2552, %v2559
        %v2562 = vunpack.c.l.s4 1934713408
        %v2563 = vunpack.c.0.s8 %v2562
        %v2564 = vperm.slane %v2558, %v2563
        %v2566 = vunpack.c.l.s4 1934713408
        %v2567 = vunpack.c.0.s8 %v2566
        %v2568 = vperm.slane %v2560, %v2567
        %v2569 = vrot.slane %v2556, 4
        %v2570 = vsel %vm2125, %v2569, %v2546
        %v2571 = vrot.slane %v2546, 4
        %v2572 = vsel %vm2125, %v2556, %v2571
        %v2574 = vunpack.c.l.s4 1934713408
        %v2575 = vunpack.c.0.s8 %v2574
        %v2576 = vperm.slane %v2570, %v2575
        %v2578 = vunpack.c.l.s4 1934713408
        %v2579 = vunpack.c.0.s8 %v2578
        %v2580 = vperm.slane %v2572, %v2579
        %v2581 = vrot.slane %v2564, 4
        %v2582 = vsel %vm2125, 0.0, %v2581
        %v2583 = vrot.slane %v2568, 4
        %v2584 = vsel %vm2125, 0.0, %v2583
        %v2585 = vrot.slane %v2576, 4
        %v2586 = vsel %vm2125, 0.0, %v2585
        %v2587 = vrot.slane %v2580, 4
        %v2588 = vsel %vm2125, 0.0, %v2587
        %v2589 = vsel %vm2125, %v2531, %v2512
        %v2591 = vunpack.c.l.s4 1983009808
        %v2592 = vunpack.c.0.s8 %v2591
        %v2593 = vperm.slane %v2589, %v2592
        %v2594 = vrot.slane %v2532, 4
        %v2595 = vsel %vm2125, %v2594, %v2530
        %v2597 = vunpack.c.l.s4 1983009808
        %v2598 = vunpack.c.0.s8 %v2597
        %v2599 = vperm.slane %v2595, %v2598
        %v2600 = vsel %vm2125, %v2535, %v2524
        %v2602 = vunpack.c.l.s4 1983009808
        %v2603 = vunpack.c.0.s8 %v2602
        %v2604 = vperm.slane %v2600, %v2603
        %v2605 = vrot.slane %v2536, 4
        %v2606 = vsel %vm2125, %v2605, %v2534
        %v2608 = vunpack.c.l.s4 1983009808
        %v2609 = vunpack.c.0.s8 %v2608
        %v2610 = vperm.slane %v2606, %v2609
        %v2611 = vrot.slane %v2599, 4
        %v2612 = vsel %vm2125, %v2611, %v2593
        %v2614 = vunpack.c.l.s4 1934713408
        %v2615 = vunpack.c.0.s8 %v2614
        %v2616 = vperm.slane %v2612, %v2615
        %v2617 = vrot.slane %v2610, 4
        %v2618 = vsel %vm2125, %v2617, %v2604
        %v2620 = vunpack.c.l.s4 1934713408
        %v2621 = vunpack.c.0.s8 %v2620
        %v2622 = vperm.slane %v2618, %v2621
        %v2623 = vrot.slane %v2622, 4
        %v2624 = vsel %vm2125, %v2623, %v2616
        %v2625 = vrot.slane %v2616, 4
        %v2626 = vsel %vm2125, %v2622, %v2625
        %v2627 = vsel %vm2125, %v2583, %v2564
        %v2629 = vunpack.c.l.s4 1983009808
        %v2630 = vunpack.c.0.s8 %v2629
        %v2631 = vperm.slane %v2627, %v2630
        %v2632 = vrot.slane %v2584, 4
        %v2633 = vsel %vm2125, %v2632, %v2582
        %v2635 = vunpack.c.l.s4 1983009808
        %v2636 = vunpack.c.0.s8 %v2635
        %v2637 = vperm.slane %v2633, %v2636
        %v2638 = vsel %vm2125, %v2587, %v2576
        %v2640 = vunpack.c.l.s4 1983009808
        %v2641 = vunpack.c.0.s8 %v2640
        %v2642 = vperm.slane %v2638, %v2641
        %v2643 = vrot.slane %v2588, 4
        %v2644 = vsel %vm2125, %v2643, %v2586
        %v2646 = vunpack.c.l.s4 1983009808
        %v2647 = vunpack.c.0.s8 %v2646
        %v2648 = vperm.slane %v2644, %v2647
        %v2649 = vrot.slane %v2637, 4
        %v2650 = vsel %vm2125, %v2649, %v2631
        %v2652 = vunpack.c.l.s4 1934713408
        %v2653 = vunpack.c.0.s8 %v2652
        %v2654 = vperm.slane %v2650, %v2653
        %v2655 = vrot.slane %v2648, 4
        %v2656 = vsel %vm2125, %v2655, %v2642
        %v2658 = vunpack.c.l.s4 1934713408
        %v2659 = vunpack.c.0.s8 %v2658
        %v2660 = vperm.slane %v2656, %v2659
        %v2661 = vrot.slane %v2660, 4
        %v2662 = vsel %vm2125, %v2661, %v2654
        %v2663 = vrot.slane %v2654, 4
        %v2664 = vsel %vm2125, %v2660, %v2663
        %v2665 = vpack.c.bf16 %v2264, %v2264
        %v2666 = vpack.c.bf16 %v2302, %v2302
        %v2667 = vpack.c.bf16 %v2266, %v2266
        %v2668 = vpack.c.bf16 %v2304, %v2304
        %v2669 = vpack.c.bf16 %v2444, %v2444
        %v2670 = vpack.c.bf16 %v2482, %v2482
        %v2671 = vpack.c.bf16 %v2446, %v2446
        %v2672 = vpack.c.bf16 %v2484, %v2484
        %v2675 = vunpack.c.l.b16 %v2665
        %v2676 = vunpack.c.l.b16 %v2666
        %v2677 = vpack.c.b16 %v2676, %v2675
        %v2681 = vunpack.c.l.b16 %v2669
        %v2682 = vunpack.c.l.b16 %v2670
        %v2683 = vpack.c.b16 %v2682, %v2681
        %2685 = vmatpush.bf16.xpose.msra.mxu0 0
        %2686 = vmatpush.bf16.xpose.msra.mxu0 0
        %2687 = vmatpush.bf16.xpose.msra.mxu0 0
        %2688 = vmatpush.bf16.xpose.msra.mxu0 0
        %2689 = vmatpush.bf16.xpose.msra.mxu0 0
        %2690 = vmatpush.bf16.xpose.msra.mxu0 0
        %2691 = vmatpush.bf16.xpose.msra.mxu0 0
        %2692 = vmatpush.bf16.xpose.msra.mxu0 %v2683
        %2693 = vmatmul.bf16.gmra.mxu0 %v2677
        %v2694 = vpop.f32.mrf.mxu0
        %v2695 = vadd.f32 0.0, %v2694
        %v2696 = vpop.f32.mrf.mxu0
        %v2697 = vadd.f32 0.0, %v2696
        %2698 = vdwg.mxu0
        %v2701 = vunpack.c.l.b16 %v2667
        %v2702 = vunpack.c.l.b16 %v2668
        %v2703 = vpack.c.b16 %v2702, %v2701
        %v2707 = vunpack.c.l.b16 %v2671
        %v2708 = vunpack.c.l.b16 %v2672
        %v2709 = vpack.c.b16 %v2708, %v2707
        %2711 = vmatpush.bf16.xpose.msra.mxu0 0
        %2712 = vmatpush.bf16.xpose.msra.mxu0 0
        %2713 = vmatpush.bf16.xpose.msra.mxu0 0
        %2714 = vmatpush.bf16.xpose.msra.mxu0 0
        %2715 = vmatpush.bf16.xpose.msra.mxu0 0
        %2716 = vmatpush.bf16.xpose.msra.mxu0 0
        %2717 = vmatpush.bf16.xpose.msra.mxu0 0
        %2718 = vmatpush.bf16.xpose.msra.mxu0 %v2709
        %2719 = vmatmul.bf16.gmra.mxu0 %v2703
        %v2720 = vpop.f32.mrf.mxu0
        %v2721 = vadd.f32 0.0, %v2720
        %v2722 = vpop.f32.mrf.mxu0
        %v2723 = vadd.f32 0.0, %v2722
        %2724 = vdwg.mxu0
        %v2725 = vmul.f32 %v2695, 0.088388346
        %v2726 = vmul.f32 %v2697, 0.088388346
        %v2727 = vmul.f32 %v2721, 0.088388346
        %v2728 = vmul.f32 %v2723, 0.088388346
        %v2730 = vperm.slane %v1359, 0
        %v2732 = vadd.f32 %v2725, %v2730
        %v2733 = vadd.f32 %v2726, %v2730
        %v2734 = vadd.f32 %v2727, %v2730
        %v2735 = vadd.f32 %v2728, %v2730
        %vm2736 = vcmask 130048
        %v2737 = vsel %vm2736, %v2732, -inf
        %2738 = vmax.xlane.f32.xlu0 %v2737
        %v2739 = vpop.xlane.xlu0 %2738
        %v2740 = vsel %vm2736, %v2733, -inf
        %2741 = vmax.xlane.f32.xlu0 %v2740
        %v2742 = vpop.xlane.xlu0 %2741
        %v2743 = vsel %vm2736, %v2734, -inf
        %2744 = vmax.xlane.f32.xlu0 %v2743
        %v2745 = vpop.xlane.xlu0 %2744
        %v2746 = vsel %vm2736, %v2735, -inf
        %2747 = vmax.xlane.f32.xlu0 %v2746
        %v2748 = vpop.xlane.xlu0 %2747
        %v2749 = vsub.f32 %v2732, %v2739
        %v2750 = vsub.f32 %v2733, %v2742
        %v2751 = vsub.f32 %v2734, %v2745
        %v2752 = vsub.f32 %v2735, %v2748
        %v2753 = vmul.f32 %v2749, 1.442695
        %v2754 = vpow.pop %v2753
        %v2755 = vmul.f32 %v2750, 1.442695
        %v2756 = vpow.pop %v2755
        %v2757 = vmul.f32 %v2751, 1.442695
        %v2758 = vpow.pop %v2757
        %v2759 = vmul.f32 %v2752, 1.442695
        %v2760 = vpow.pop %v2759
        %v2761 = vsel %vm2736, %v2754, 0.0
        %2762 = vadd.xlane.f32.xlu0 %v2761
        %v2763 = vpop.xlane.xlu0 %2762
        %v2764 = vsel %vm2736, %v2756, 0.0
        %2765 = vadd.xlane.f32.xlu0 %v2764
        %v2766 = vpop.xlane.xlu0 %2765
        %v2767 = vsel %vm2736, %v2758, 0.0
        %2768 = vadd.xlane.f32.xlu0 %v2767
        %v2769 = vpop.xlane.xlu0 %2768
        %v2770 = vsel %vm2736, %v2760, 0.0
        %2771 = vadd.xlane.f32.xlu0 %v2770
        %v2772 = vpop.xlane.xlu0 %2771
        %v2773 = vrcp.pop %v2763
        %v2774 = vrcp.pop %v2766
        %v2775 = vrcp.pop %v2769
        %v2776 = vrcp.pop %v2772
        %v2777 = vmul.f32 %v2754, %v2773
        %v2778 = vmul.f32 %v2756, %v2774
        %v2779 = vmul.f32 %v2758, %v2775
        %v2780 = vmul.f32 %v2760, %v2776
        %v2781 = vpack.c.bf16 %v2777, %v2777
        %v2782 = vpack.c.bf16 %v2778, %v2778
        %v2783 = vpack.c.bf16 %v2779, %v2779
        %v2784 = vpack.c.bf16 %v2780, %v2780
        %v2785 = vpack.c.bf16 %v2624, %v2624
        %v2786 = vpack.c.bf16 %v2662, %v2662
        %v2787 = vpack.c.bf16 %v2626, %v2626
        %v2788 = vpack.c.bf16 %v2664, %v2664
        %v2791 = vunpack.c.l.b16 %v2781
        %v2792 = vunpack.c.l.b16 %v2782
        %v2793 = vpack.c.b16 %v2792, %v2791
        %v2796 = vunpack.c.l.b16 %v2785
        %v2797 = vunpack.c.l.b16 %v2786
        %v2798 = vpack.c.b16 %v2797, %v2796
        %v2801 = vsel %vm2736, %v2793, 0
        %2803 = vmatpush.bf16.msra.mxu0 0
        %2804 = vmatpush.bf16.msra.mxu0 0
        %2805 = vmatpush.bf16.msra.mxu0 0
        %2806 = vmatpush.bf16.msra.mxu0 0
        %2807 = vmatpush.bf16.msra.mxu0 0
        %2808 = vmatpush.bf16.msra.mxu0 0
        %2809 = vmatpush.bf16.msra.mxu0 0
        %2810 = vmatpush.bf16.msra.mxu0 %v2798
        %2811 = vmatmul.bf16.gmra.mxu0 %v2801
        %v2812 = vpop.f32.mrf.mxu0
        %v2813 = vadd.f32 0.0, %v2812
        %v2814 = vpop.f32.mrf.mxu0
        %v2815 = vadd.f32 0.0, %v2814
        %2816 = vdwg.mxu0
        %v2819 = vunpack.c.l.b16 %v2783
        %v2820 = vunpack.c.l.b16 %v2784
        %v2821 = vpack.c.b16 %v2820, %v2819
        %v2824 = vunpack.c.l.b16 %v2787
        %v2825 = vunpack.c.l.b16 %v2788
        %v2826 = vpack.c.b16 %v2825, %v2824
        %v2829 = vsel %vm2736, %v2821, 0
        %2831 = vmatpush.bf16.msra.mxu0 0
        %2832 = vmatpush.bf16.msra.mxu0 0
        %2833 = vmatpush.bf16.msra.mxu0 0
        %2834 = vmatpush.bf16.msra.mxu0 0
        %2835 = vmatpush.bf16.msra.mxu0 0
        %2836 = vmatpush.bf16.msra.mxu0 0
        %2837 = vmatpush.bf16.msra.mxu0 0
        %2838 = vmatpush.bf16.msra.mxu0 %v2826
        %2839 = vmatmul.bf16.gmra.mxu0 %v2829
        %v2840 = vpop.f32.mrf.mxu0
        %v2841 = vadd.f32 0.0, %v2840
        %v2842 = vpop.f32.mrf.mxu0
        %v2843 = vadd.f32 0.0, %v2842
        %2844 = vdwg.mxu0
        %v2845 = vrot.slane %v2813, 4
        %v2846 = vsel %vm2125, 0.0, %v2845
        %v2848 = vunpack.c.l.s4 1983009808
        %v2849 = vunpack.c.0.s8 %v2848
        %v2850 = vperm.slane %v2813, %v2849
        %v2852 = vunpack.c.l.s4 1983009808
        %v2853 = vunpack.c.0.s8 %v2852
        %v2854 = vperm.slane %v2846, %v2853
        %v2855 = vrot.slane %v2841, 4
        %v2856 = vsel %vm2125, 0.0, %v2855
        %v2858 = vunpack.c.l.s4 1983009808
        %v2859 = vunpack.c.0.s8 %v2858
        %v2860 = vperm.slane %v2841, %v2859
        %v2862 = vunpack.c.l.s4 1983009808
        %v2863 = vunpack.c.0.s8 %v2862
        %v2864 = vperm.slane %v2856, %v2863
        %v2865 = vrot.slane %v2860, 4
        %v2866 = vsel %vm2125, %v2865, %v2850
        %v2867 = vrot.slane %v2850, 4
        %v2868 = vsel %vm2125, %v2860, %v2867
        %v2870 = vunpack.c.l.s4 1934713408
        %v2871 = vunpack.c.0.s8 %v2870
        %v2872 = vperm.slane %v2866, %v2871
        %v2874 = vunpack.c.l.s4 1934713408
        %v2875 = vunpack.c.0.s8 %v2874
        %v2876 = vperm.slane %v2868, %v2875
        %v2877 = vrot.slane %v2864, 4
        %v2878 = vsel %vm2125, %v2877, %v2854
        %v2879 = vrot.slane %v2854, 4
        %v2880 = vsel %vm2125, %v2864, %v2879
        %v2882 = vunpack.c.l.s4 1934713408
        %v2883 = vunpack.c.0.s8 %v2882
        %v2884 = vperm.slane %v2878, %v2883
        %v2886 = vunpack.c.l.s4 1934713408
        %v2887 = vunpack.c.0.s8 %v2886
        %v2888 = vperm.slane %v2880, %v2887
        %v2889 = vrot.slane %v2872, 4
        %v2890 = vsel %vm2125, 0.0, %v2889
        %v2891 = vrot.slane %v2876, 4
        %v2892 = vsel %vm2125, 0.0, %v2891
        %v2893 = vrot.slane %v2884, 4
        %v2894 = vsel %vm2125, 0.0, %v2893
        %v2895 = vrot.slane %v2888, 4
        %v2896 = vsel %vm2125, 0.0, %v2895
        %v2897 = vrot.slane %v2815, 4
        %v2898 = vsel %vm2125, 0.0, %v2897
        %v2900 = vunpack.c.l.s4 1983009808
        %v2901 = vunpack.c.0.s8 %v2900
        %v2902 = vperm.slane %v2815, %v2901
        %v2904 = vunpack.c.l.s4 1983009808
        %v2905 = vunpack.c.0.s8 %v2904
        %v2906 = vperm.slane %v2898, %v2905
        %v2907 = vrot.slane %v2843, 4
        %v2908 = vsel %vm2125, 0.0, %v2907
        %v2910 = vunpack.c.l.s4 1983009808
        %v2911 = vunpack.c.0.s8 %v2910
        %v2912 = vperm.slane %v2843, %v2911
        %v2914 = vunpack.c.l.s4 1983009808
        %v2915 = vunpack.c.0.s8 %v2914
        %v2916 = vperm.slane %v2908, %v2915
        %v2917 = vrot.slane %v2912, 4
        %v2918 = vsel %vm2125, %v2917, %v2902
        %v2919 = vrot.slane %v2902, 4
        %v2920 = vsel %vm2125, %v2912, %v2919
        %v2922 = vunpack.c.l.s4 1934713408
        %v2923 = vunpack.c.0.s8 %v2922
        %v2924 = vperm.slane %v2918, %v2923
        %v2926 = vunpack.c.l.s4 1934713408
        %v2927 = vunpack.c.0.s8 %v2926
        %v2928 = vperm.slane %v2920, %v2927
        %v2929 = vrot.slane %v2916, 4
        %v2930 = vsel %vm2125, %v2929, %v2906
        %v2931 = vrot.slane %v2906, 4
        %v2932 = vsel %vm2125, %v2916, %v2931
        %v2934 = vunpack.c.l.s4 1934713408
        %v2935 = vunpack.c.0.s8 %v2934
        %v2936 = vperm.slane %v2930, %v2935
        %v2938 = vunpack.c.l.s4 1934713408
        %v2939 = vunpack.c.0.s8 %v2938
        %v2940 = vperm.slane %v2932, %v2939
        %v2941 = vrot.slane %v2924, 4
        %v2942 = vsel %vm2125, 0.0, %v2941
        %v2943 = vrot.slane %v2928, 4
        %v2944 = vsel %vm2125, 0.0, %v2943
        %v2945 = vrot.slane %v2936, 4
        %v2946 = vsel %vm2125, 0.0, %v2945
        %v2947 = vrot.slane %v2940, 4
        %v2948 = vsel %vm2125, 0.0, %v2947
        %v2949 = vsel %vm2125, %v2891, %v2872
        %v2951 = vunpack.c.l.s4 1983009808
        %v2952 = vunpack.c.0.s8 %v2951
        %v2953 = vperm.slane %v2949, %v2952
        %v2954 = vrot.slane %v2892, 4
        %v2955 = vsel %vm2125, %v2954, %v2890
        %v2957 = vunpack.c.l.s4 1983009808
        %v2958 = vunpack.c.0.s8 %v2957
        %v2959 = vperm.slane %v2955, %v2958
        %v2960 = vsel %vm2125, %v2895, %v2884
        %v2962 = vunpack.c.l.s4 1983009808
        %v2963 = vunpack.c.0.s8 %v2962
        %v2964 = vperm.slane %v2960, %v2963
        %v2965 = vrot.slane %v2896, 4
        %v2966 = vsel %vm2125, %v2965, %v2894
        %v2968 = vunpack.c.l.s4 1983009808
        %v2969 = vunpack.c.0.s8 %v2968
        %v2970 = vperm.slane %v2966, %v2969
        %v2971 = vrot.slane %v2959, 4
        %v2972 = vsel %vm2125, %v2971, %v2953
        %v2974 = vunpack.c.l.s4 1934713408
        %v2975 = vunpack.c.0.s8 %v2974
        %v2976 = vperm.slane %v2972, %v2975
        %v2977 = vrot.slane %v2970, 4
        %v2978 = vsel %vm2125, %v2977, %v2964
        %v2980 = vunpack.c.l.s4 1934713408
        %v2981 = vunpack.c.0.s8 %v2980
        %v2982 = vperm.slane %v2978, %v2981
        %v2983 = vrot.slane %v2982, 4
        %v2984 = vsel %vm2125, %v2983, %v2976
        %v2985 = vrot.slane %v2976, 4
        %v2986 = vsel %vm2125, %v2982, %v2985
        %v2987 = vsel %vm2125, %v2943, %v2924
        %v2989 = vunpack.c.l.s4 1983009808
        %v2990 = vunpack.c.0.s8 %v2989
        %v2991 = vperm.slane %v2987, %v2990
        %v2992 = vrot.slane %v2944, 4
        %v2993 = vsel %vm2125, %v2992, %v2942
        %v2995 = vunpack.c.l.s4 1983009808
        %v2996 = vunpack.c.0.s8 %v2995
        %v2997 = vperm.slane %v2993, %v2996
        %v2998 = vsel %vm2125, %v2947, %v2936
        %v3000 = vunpack.c.l.s4 1983009808
        %v3001 = vunpack.c.0.s8 %v3000
        %v3002 = vperm.slane %v2998, %v3001
        %v3003 = vrot.slane %v2948, 4
        %v3004 = vsel %vm2125, %v3003, %v2946
        %v3006 = vunpack.c.l.s4 1983009808
        %v3007 = vunpack.c.0.s8 %v3006
        %v3008 = vperm.slane %v3004, %v3007
        %v3009 = vrot.slane %v2997, 4
        %v3010 = vsel %vm2125, %v3009, %v2991
        %v3012 = vunpack.c.l.s4 1934713408
        %v3013 = vunpack.c.0.s8 %v3012
        %v3014 = vperm.slane %v3010, %v3013
        %v3015 = vrot.slane %v3008, 4
        %v3016 = vsel %vm2125, %v3015, %v3002
        %v3018 = vunpack.c.l.s4 1934713408
        %v3019 = vunpack.c.0.s8 %v3018
        %v3020 = vperm.slane %v3016, %v3019
        %v3021 = vrot.slane %v3020, 4
        %v3022 = vsel %vm2125, %v3021, %v3014
        %v3023 = vrot.slane %v3014, 4
        %v3024 = vsel %vm2125, %v3020, %v3023
        %v3025 = vpack.c.bf16 %v3022, %v2984
        %v3026 = vpack.c.bf16 %v3024, %v2986
        %v3027 = vld [vmem:[%s1042] sm:$0xff]
        %v3028 = vld [vmem:[%s1042 + $0x8] sm:$0xff]
        %v3029 = vld [vmem:[%s1042 + $0x10] sm:$0xff]
        %v3030 = vld [vmem:[%s1042 + $0x18] sm:$0xff]
        %v3031 = vld [vmem:[%s1042 + $0x20] sm:$0xff]
        %v3032 = vld [vmem:[%s1042 + $0x28] sm:$0xff]
        %v3033 = vld [vmem:[%s1042 + $0x30] sm:$0xff]
        %v3034 = vld [vmem:[%s1042 + $0x38] sm:$0xff]
        %v3035 = vld [vmem:[%s1042 + $0x40] sm:$0xff]
        %v3036 = vld [vmem:[%s1042 + $0x48] sm:$0xff]
        %v3037 = vld [vmem:[%s1042 + $0x50] sm:$0xff]
        %v3038 = vld [vmem:[%s1042 + $0x58] sm:$0xff]
        %v3039 = vld [vmem:[%s1042 + $0x60] sm:$0xff]
        %v3040 = vld [vmem:[%s1042 + $0x68] sm:$0xff]
        %v3041 = vld [vmem:[%s1042 + $0x70] sm:$0xff]
        %v3042 = vld [vmem:[%s1042 + $0x78] sm:$0xff]
        %v3043 = vld [vmem:[%s1042 + $0x80] sm:$0xff]
        %v3044 = vld [vmem:[%s1042 + $0x88] sm:$0xff]
        %v3045 = vld [vmem:[%s1042 + $0x90] sm:$0xff]
        %v3046 = vld [vmem:[%s1042 + $0x98] sm:$0xff]
        %v3047 = vld [vmem:[%s1042 + $0xa0] sm:$0xff]
        %v3048 = vld [vmem:[%s1042 + $0xa8] sm:$0xff]
        %v3049 = vld [vmem:[%s1042 + $0xb0] sm:$0xff]
        %v3050 = vld [vmem:[%s1042 + $0xb8] sm:$0xff]
        %v3051 = vld [vmem:[%s1042 + $0xc0] sm:$0xff]
        %v3052 = vld [vmem:[%s1042 + $0xc8] sm:$0xff]
        %v3053 = vld [vmem:[%s1042 + $0xd0] sm:$0xff]
        %v3054 = vld [vmem:[%s1042 + $0xd8] sm:$0xff]
        %v3055 = vld [vmem:[%s1042 + $0xe0] sm:$0xff]
        %v3056 = vld [vmem:[%s1042 + $0xe8] sm:$0xff]
        %v3057 = vld [vmem:[%s1042 + $0xf0] sm:$0xff]
        %v3058 = vld [vmem:[%s1042 + $0xf8] sm:$0xff]
        %v3059 = vld [vmem:[%s1052] sm:$0x3]
        %v3061 = vperm.slane %v3059, 0
        %v3062 = vperm.slane %v3059, 1
        %v3097 = vunpack.c.l.b16 %v3027
        %v3098 = vunpack.c.h.b16 %v3027
        %v3099 = vunpack.c.l.b16 %v3028
        %v3100 = vunpack.c.h.b16 %v3028
        %v3101 = vunpack.c.l.b16 %v3029
        %v3102 = vunpack.c.h.b16 %v3029
        %v3103 = vunpack.c.l.b16 %v3030
        %v3104 = vunpack.c.h.b16 %v3030
        %v3105 = vunpack.c.l.b16 %v3031
        %v3106 = vunpack.c.h.b16 %v3031
        %v3107 = vunpack.c.l.b16 %v3032
        %v3108 = vunpack.c.h.b16 %v3032
        %v3109 = vunpack.c.l.b16 %v3033
        %v3110 = vunpack.c.h.b16 %v3033
        %v3111 = vunpack.c.l.b16 %v3034
        %v3112 = vunpack.c.h.b16 %v3034
        %v3113 = vunpack.c.l.b16 %v3035
        %v3114 = vunpack.c.h.b16 %v3035
        %v3115 = vunpack.c.l.b16 %v3036
        %v3116 = vunpack.c.h.b16 %v3036
        %v3117 = vunpack.c.l.b16 %v3037
        %v3118 = vunpack.c.h.b16 %v3037
        %v3119 = vunpack.c.l.b16 %v3038
        %v3120 = vunpack.c.h.b16 %v3038
        %v3121 = vunpack.c.l.b16 %v3039
        %v3122 = vunpack.c.h.b16 %v3039
        %v3123 = vunpack.c.l.b16 %v3040
        %v3124 = vunpack.c.h.b16 %v3040
        %v3125 = vunpack.c.l.b16 %v3041
        %v3126 = vunpack.c.h.b16 %v3041
        %v3127 = vunpack.c.l.b16 %v3042
        %v3128 = vunpack.c.h.b16 %v3042
        %v3129 = vunpack.c.l.b16 %v3043
        %v3130 = vunpack.c.h.b16 %v3043
        %v3131 = vunpack.c.l.b16 %v3044
        %v3132 = vunpack.c.h.b16 %v3044
        %v3133 = vunpack.c.l.b16 %v3045
        %v3134 = vunpack.c.h.b16 %v3045
        %v3135 = vunpack.c.l.b16 %v3046
        %v3136 = vunpack.c.h.b16 %v3046
        %v3137 = vunpack.c.l.b16 %v3047
        %v3138 = vunpack.c.h.b16 %v3047
        %v3139 = vunpack.c.l.b16 %v3048
        %v3140 = vunpack.c.h.b16 %v3048
        %v3141 = vunpack.c.l.b16 %v3049
        %v3142 = vunpack.c.h.b16 %v3049
        %v3143 = vunpack.c.l.b16 %v3050
        %v3144 = vunpack.c.h.b16 %v3050
        %v3145 = vunpack.c.l.b16 %v3051
        %v3146 = vunpack.c.h.b16 %v3051
        %v3147 = vunpack.c.l.b16 %v3052
        %v3148 = vunpack.c.h.b16 %v3052
        %v3149 = vunpack.c.l.b16 %v3053
        %v3150 = vunpack.c.h.b16 %v3053
        %v3151 = vunpack.c.l.b16 %v3054
        %v3152 = vunpack.c.h.b16 %v3054
        %v3153 = vunpack.c.l.b16 %v3055
        %v3154 = vunpack.c.h.b16 %v3055
        %v3155 = vunpack.c.l.b16 %v3056
        %v3156 = vunpack.c.h.b16 %v3056
        %v3157 = vunpack.c.l.b16 %v3057
        %v3158 = vunpack.c.h.b16 %v3057
        %v3159 = vunpack.c.l.b16 %v3058
        %v3160 = vunpack.c.h.b16 %v3058
        %v3161 = vpack.c.b16 %v3099, %v3097
        %v3162 = vpack.c.b16 %v3100, %v3098
        %v3163 = vpack.c.b16 %v3103, %v3101
        %v3164 = vpack.c.b16 %v3104, %v3102
        %v3165 = vpack.c.b16 %v3107, %v3105
        %v3166 = vpack.c.b16 %v3108, %v3106
        %v3167 = vpack.c.b16 %v3111, %v3109
        %v3168 = vpack.c.b16 %v3112, %v3110
        %v3169 = vpack.c.b16 %v3115, %v3113
        %v3170 = vpack.c.b16 %v3116, %v3114
        %v3171 = vpack.c.b16 %v3119, %v3117
        %v3172 = vpack.c.b16 %v3120, %v3118
        %v3173 = vpack.c.b16 %v3123, %v3121
        %v3174 = vpack.c.b16 %v3124, %v3122
        %v3175 = vpack.c.b16 %v3127, %v3125
        %v3176 = vpack.c.b16 %v3128, %v3126
        %v3177 = vpack.c.b16 %v3131, %v3129
        %v3178 = vpack.c.b16 %v3132, %v3130
        %v3179 = vpack.c.b16 %v3135, %v3133
        %v3180 = vpack.c.b16 %v3136, %v3134
        %v3181 = vpack.c.b16 %v3139, %v3137
        %v3182 = vpack.c.b16 %v3140, %v3138
        %v3183 = vpack.c.b16 %v3143, %v3141
        %v3184 = vpack.c.b16 %v3144, %v3142
        %v3185 = vpack.c.b16 %v3147, %v3145
        %v3186 = vpack.c.b16 %v3148, %v3146
        %v3187 = vpack.c.b16 %v3151, %v3149
        %v3188 = vpack.c.b16 %v3152, %v3150
        %v3189 = vpack.c.b16 %v3155, %v3153
        %v3190 = vpack.c.b16 %v3156, %v3154
        %v3191 = vpack.c.b16 %v3159, %v3157
        %v3192 = vpack.c.b16 %v3160, %v3158
        %3225 = vmatpush.bf16.msra.mxu0 %v3175
        %3226 = vmatpush.bf16.msra.mxu0 %v3173
        %3227 = vmatpush.bf16.msra.mxu0 %v3171
        %3228 = vmatpush.bf16.msra.mxu0 %v3169
        %3229 = vmatpush.bf16.msra.mxu0 %v3167
        %3230 = vmatpush.bf16.msra.mxu0 %v3165
        %3231 = vmatpush.bf16.msra.mxu0 %v3163
        %3232 = vmatpush.bf16.msra.mxu0 %v3161
        %3233 = vmatmul.bf16.gmra.mxu0 %v3025
        %v3234 = vpop.f32.mrf.mxu0
        %v3235 = vadd.f32 %v3061, %v3234
        %v3236 = vpop.f32.mrf.mxu0
        %v3237 = vadd.f32 %v3061, %v3236
        %3238 = vdwg.mxu0
        %3239 = vmatpush.bf16.msra.mxu0 %v3191
        %3240 = vmatpush.bf16.msra.mxu0 %v3189
        %3241 = vmatpush.bf16.msra.mxu0 %v3187
        %3242 = vmatpush.bf16.msra.mxu0 %v3185
        %3243 = vmatpush.bf16.msra.mxu0 %v3183
        %3244 = vmatpush.bf16.msra.mxu0 %v3181
        %3245 = vmatpush.bf16.msra.mxu0 %v3179
        %3246 = vmatpush.bf16.msra.mxu0 %v3177
        %3247 = vmatmul.bf16.gmra.mxu0 %v3026
        %v3248 = vpop.f32.mrf.mxu0
        %v3249 = vadd.f32 %v3235, %v3248
        %v3250 = vpop.f32.mrf.mxu0
        %v3251 = vadd.f32 %v3237, %v3250
        %3252 = vdwg.mxu0
        %3253 = vmatpush.bf16.msra.mxu0 %v3176
        %3254 = vmatpush.bf16.msra.mxu0 %v3174
        %3255 = vmatpush.bf16.msra.mxu0 %v3172
        %3256 = vmatpush.bf16.msra.mxu0 %v3170
        %3257 = vmatpush.bf16.msra.mxu0 %v3168
        %3258 = vmatpush.bf16.msra.mxu0 %v3166
        %3259 = vmatpush.bf16.msra.mxu0 %v3164
        %3260 = vmatpush.bf16.msra.mxu0 %v3162
        %3261 = vmatmul.bf16.gmra.mxu0 %v3025
        %v3262 = vpop.f32.mrf.mxu0
        %v3263 = vadd.f32 %v3062, %v3262
        %v3264 = vpop.f32.mrf.mxu0
        %v3265 = vadd.f32 %v3062, %v3264
        %3266 = vdwg.mxu0
        %3267 = vmatpush.bf16.msra.mxu0 %v3192
        %3268 = vmatpush.bf16.msra.mxu0 %v3190
        %3269 = vmatpush.bf16.msra.mxu0 %v3188
        %3270 = vmatpush.bf16.msra.mxu0 %v3186
        %3271 = vmatpush.bf16.msra.mxu0 %v3184
        %3272 = vmatpush.bf16.msra.mxu0 %v3182
        %3273 = vmatpush.bf16.msra.mxu0 %v3180
        %3274 = vmatpush.bf16.msra.mxu0 %v3178
        %3275 = vmatmul.bf16.gmra.mxu0 %v3026
        %v3276 = vpop.f32.mrf.mxu0
        %v3277 = vadd.f32 %v3263, %v3276
        %v3278 = vpop.f32.mrf.mxu0
        %v3279 = vadd.f32 %v3265, %v3278
        %3280 = vdwg.mxu0
        %v3281 = vadd.f32 %v1353, %v3249
        %v3282 = vadd.f32 %v1354, %v3277
        %v3283 = vadd.f32 %v1355, %v3251
        %v3284 = vadd.f32 %v1356, %v3279
        %v3285 = vld [vmem:[%s1062] sm:$0x3]
        %v3286 = vld [vmem:[%s1072] sm:$0x3]
        %v3287 = vadd.f32 %v3281, %v3282
        %3288 = vadd.xlane.f32.xlu0 %v3287
        %v3289 = vpop.xlane.xlu0 %3288
        %v3290 = vadd.f32 %v3283, %v3284
        %3291 = vadd.xlane.f32.xlu0 %v3290
        %v3292 = vpop.xlane.xlu0 %3291
        %v3293 = vrcp.pop 256.0
        %v3294 = vmul.f32 256.0, %v3293
        %v3295 = vsub.f32 1.0, %v3294
        %v3296 = vmul.f32 %v3293, %v3295
        %v3297 = vadd.f32 %v3293, %v3296
        %vm3298 = vweird.f32 %v3293
        %v3299 = vsel %vm3298, %v3293, %v3297
        %v3300 = vmul.f32 %v3289, %v3299
        %v3301 = vmul.f32 %v3292, %v3299
        %v3302 = vsub.f32 %v3281, %v3300
        %v3303 = vsub.f32 %v3282, %v3300
        %v3304 = vsub.f32 %v3283, %v3301
        %v3305 = vsub.f32 %v3284, %v3301
        %v3306 = vmul.f32 %v3302, %v3302
        %v3307 = vmul.f32 %v3303, %v3303
        %v3308 = vmul.f32 %v3304, %v3304
        %v3309 = vmul.f32 %v3305, %v3305
        %v3310 = vadd.f32 %v3306, %v3307
        %3311 = vadd.xlane.f32.xlu0 %v3310
        %v3312 = vpop.xlane.xlu0 %3311
        %v3313 = vadd.f32 %v3308, %v3309
        %3314 = vadd.xlane.f32.xlu0 %v3313
        %v3315 = vpop.xlane.xlu0 %3314
        %v3316 = vmul.f32 %v3312, %v3299
        %v3317 = vmul.f32 %v3315, %v3299
        %v3318 = vadd.f32 %v3316, 1e-12
        %v3319 = vadd.f32 %v3317, 1e-12
        %v3320 = vrsqrt.pop %v3318
        %v3321 = vmul.f32 %v3320, %v3318
        %v3322 = vmul.f32 %v3321, %v3320
        %v3323 = vmul.f32 0.5, %v3322
        %v3324 = vsub.f32 1.5, %v3323
        %v3325 = vmul.f32 %v3320, %v3324
        %vm3326 = vweird.f32 %v3318
        %vm3327 = vweird.f32 %v3320
        %vm3328 = vmor %vm3326, %vm3327
        %v3329 = vsel %vm3328, %v3320, %v3325
        %v3330 = vrsqrt.pop %v3319
        %v3331 = vmul.f32 %v3330, %v3319
        %v3332 = vmul.f32 %v3331, %v3330
        %v3333 = vmul.f32 0.5, %v3332
        %v3334 = vsub.f32 1.5, %v3333
        %v3335 = vmul.f32 %v3330, %v3334
        %vm3336 = vweird.f32 %v3319
        %vm3337 = vweird.f32 %v3330
        %vm3338 = vmor %vm3336, %vm3337
        %v3339 = vsel %vm3338, %v3330, %v3335
        %v3340 = vmul.f32 %v3302, %v3329
        %v3341 = vmul.f32 %v3303, %v3329
        %v3342 = vmul.f32 %v3304, %v3339
        %v3343 = vmul.f32 %v3305, %v3339
        %v3345 = vperm.slane %v3285, 0
        %v3346 = vperm.slane %v3285, 1
        %v3349 = vmul.f32 %v3340, %v3345
        %v3350 = vmul.f32 %v3341, %v3346
        %v3351 = vmul.f32 %v3342, %v3345
        %v3352 = vmul.f32 %v3343, %v3346
        %v3354 = vperm.slane %v3286, 0
        %v3355 = vperm.slane %v3286, 1
        %v3358 = vadd.f32 %v3349, %v3354
        %v3359 = vadd.f32 %v3350, %v3355
        %v3360 = vadd.f32 %v3351, %v3354
        %v3361 = vadd.f32 %v3352, %v3355
        %v3362 = vpack.c.bf16 %v3360, %v3358
        %v3363 = vpack.c.bf16 %v3361, %v3359
        %v3364 = vld [vmem:[%s1082] sm:$0xff]
        %v3365 = vld [vmem:[%s1082 + $0x8] sm:$0xff]
        %v3366 = vld [vmem:[%s1082 + $0x10] sm:$0xff]
        %v3367 = vld [vmem:[%s1082 + $0x18] sm:$0xff]
        %v3368 = vld [vmem:[%s1082 + $0x20] sm:$0xff]
        %v3369 = vld [vmem:[%s1082 + $0x28] sm:$0xff]
        %v3370 = vld [vmem:[%s1082 + $0x30] sm:$0xff]
        %v3371 = vld [vmem:[%s1082 + $0x38] sm:$0xff]
        %v3372 = vld [vmem:[%s1082 + $0x40] sm:$0xff]
        %v3373 = vld [vmem:[%s1082 + $0x48] sm:$0xff]
        %v3374 = vld [vmem:[%s1082 + $0x50] sm:$0xff]
        %v3375 = vld [vmem:[%s1082 + $0x58] sm:$0xff]
        %v3376 = vld [vmem:[%s1082 + $0x60] sm:$0xff]
        %v3377 = vld [vmem:[%s1082 + $0x68] sm:$0xff]
        %v3378 = vld [vmem:[%s1082 + $0x70] sm:$0xff]
        %v3379 = vld [vmem:[%s1082 + $0x78] sm:$0xff]
        %v3380 = vld [vmem:[%s1082 + $0x80] sm:$0xff]
        %v3381 = vld [vmem:[%s1082 + $0x88] sm:$0xff]
        %v3382 = vld [vmem:[%s1082 + $0x90] sm:$0xff]
        %v3383 = vld [vmem:[%s1082 + $0x98] sm:$0xff]
        %v3384 = vld [vmem:[%s1082 + $0xa0] sm:$0xff]
        %v3385 = vld [vmem:[%s1082 + $0xa8] sm:$0xff]
        %v3386 = vld [vmem:[%s1082 + $0xb0] sm:$0xff]
        %v3387 = vld [vmem:[%s1082 + $0xb8] sm:$0xff]
        %v3388 = vld [vmem:[%s1082 + $0xc0] sm:$0xff]
        %v3389 = vld [vmem:[%s1082 + $0xc8] sm:$0xff]
        %v3390 = vld [vmem:[%s1082 + $0xd0] sm:$0xff]
        %v3391 = vld [vmem:[%s1082 + $0xd8] sm:$0xff]
        %v3392 = vld [vmem:[%s1082 + $0xe0] sm:$0xff]
        %v3393 = vld [vmem:[%s1082 + $0xe8] sm:$0xff]
        %v3394 = vld [vmem:[%s1082 + $0xf0] sm:$0xff]
        %v3395 = vld [vmem:[%s1082 + $0xf8] sm:$0xff]
        %v3396 = vld [vmem:[%s1082 + $0x100] sm:$0xff]
        %v3397 = vld [vmem:[%s1082 + $0x108] sm:$0xff]
        %v3398 = vld [vmem:[%s1082 + $0x110] sm:$0xff]
        %v3399 = vld [vmem:[%s1082 + $0x118] sm:$0xff]
        %v3400 = vld [vmem:[%s1082 + $0x120] sm:$0xff]
        %v3401 = vld [vmem:[%s1082 + $0x128] sm:$0xff]
        %v3402 = vld [vmem:[%s1082 + $0x130] sm:$0xff]
        %v3403 = vld [vmem:[%s1082 + $0x138] sm:$0xff]
        %v3404 = vld [vmem:[%s1082 + $0x140] sm:$0xff]
        %v3405 = vld [vmem:[%s1082 + $0x148] sm:$0xff]
        %v3406 = vld [vmem:[%s1082 + $0x150] sm:$0xff]
        %v3407 = vld [vmem:[%s1082 + $0x158] sm:$0xff]
        %v3408 = vld [vmem:[%s1082 + $0x160] sm:$0xff]
        %v3409 = vld [vmem:[%s1082 + $0x168] sm:$0xff]
        %v3410 = vld [vmem:[%s1082 + $0x170] sm:$0xff]
        %v3411 = vld [vmem:[%s1082 + $0x178] sm:$0xff]
        %v3412 = vld [vmem:[%s1082 + $0x180] sm:$0xff]
        %v3413 = vld [vmem:[%s1082 + $0x188] sm:$0xff]
        %v3414 = vld [vmem:[%s1082 + $0x190] sm:$0xff]
        %v3415 = vld [vmem:[%s1082 + $0x198] sm:$0xff]
        %v3416 = vld [vmem:[%s1082 + $0x1a0] sm:$0xff]
        %v3417 = vld [vmem:[%s1082 + $0x1a8] sm:$0xff]
        %v3418 = vld [vmem:[%s1082 + $0x1b0] sm:$0xff]
        %v3419 = vld [vmem:[%s1082 + $0x1b8] sm:$0xff]
        %v3420 = vld [vmem:[%s1082 + $0x1c0] sm:$0xff]
        %v3421 = vld [vmem:[%s1082 + $0x1c8] sm:$0xff]
        %v3422 = vld [vmem:[%s1082 + $0x1d0] sm:$0xff]
        %v3423 = vld [vmem:[%s1082 + $0x1d8] sm:$0xff]
        %v3424 = vld [vmem:[%s1082 + $0x1e0] sm:$0xff]
        %v3425 = vld [vmem:[%s1082 + $0x1e8] sm:$0xff]
        %v3426 = vld [vmem:[%s1082 + $0x1f0] sm:$0xff]
        %v3427 = vld [vmem:[%s1082 + $0x1f8] sm:$0xff]
        %v3428 = vld [vmem:[%s1258] sm:$0xf]
        %v3430 = vperm.slane %v3428, 0
        %v3431 = vperm.slane %v3428, 1
        %v3432 = vperm.slane %v3428, 2
        %v3433 = vperm.slane %v3428, 3
        %v3502 = vunpack.c.l.b16 %v3364
        %v3503 = vunpack.c.h.b16 %v3364
        %v3504 = vunpack.c.l.b16 %v3365
        %v3505 = vunpack.c.h.b16 %v3365
        %v3506 = vunpack.c.l.b16 %v3366
        %v3507 = vunpack.c.h.b16 %v3366
        %v3508 = vunpack.c.l.b16 %v3367
        %v3509 = vunpack.c.h.b16 %v3367
        %v3510 = vunpack.c.l.b16 %v3368
        %v3511 = vunpack.c.h.b16 %v3368
        %v3512 = vunpack.c.l.b16 %v3369
        %v3513 = vunpack.c.h.b16 %v3369
        %v3514 = vunpack.c.l.b16 %v3370
        %v3515 = vunpack.c.h.b16 %v3370
        %v3516 = vunpack.c.l.b16 %v3371
        %v3517 = vunpack.c.h.b16 %v3371
        %v3518 = vunpack.c.l.b16 %v3372
        %v3519 = vunpack.c.h.b16 %v3372
        %v3520 = vunpack.c.l.b16 %v3373
        %v3521 = vunpack.c.h.b16 %v3373
        %v3522 = vunpack.c.l.b16 %v3374
        %v3523 = vunpack.c.h.b16 %v3374
        %v3524 = vunpack.c.l.b16 %v3375
        %v3525 = vunpack.c.h.b16 %v3375
        %v3526 = vunpack.c.l.b16 %v3376
        %v3527 = vunpack.c.h.b16 %v3376
        %v3528 = vunpack.c.l.b16 %v3377
        %v3529 = vunpack.c.h.b16 %v3377
        %v3530 = vunpack.c.l.b16 %v3378
        %v3531 = vunpack.c.h.b16 %v3378
        %v3532 = vunpack.c.l.b16 %v3379
        %v3533 = vunpack.c.h.b16 %v3379
        %v3534 = vunpack.c.l.b16 %v3380
        %v3535 = vunpack.c.h.b16 %v3380
        %v3536 = vunpack.c.l.b16 %v3381
        %v3537 = vunpack.c.h.b16 %v3381
        %v3538 = vunpack.c.l.b16 %v3382
        %v3539 = vunpack.c.h.b16 %v3382
        %v3540 = vunpack.c.l.b16 %v3383
        %v3541 = vunpack.c.h.b16 %v3383
        %v3542 = vunpack.c.l.b16 %v3384
        %v3543 = vunpack.c.h.b16 %v3384
        %v3544 = vunpack.c.l.b16 %v3385
        %v3545 = vunpack.c.h.b16 %v3385
        %v3546 = vunpack.c.l.b16 %v3386
        %v3547 = vunpack.c.h.b16 %v3386
        %v3548 = vunpack.c.l.b16 %v3387
        %v3549 = vunpack.c.h.b16 %v3387
        %v3550 = vunpack.c.l.b16 %v3388
        %v3551 = vunpack.c.h.b16 %v3388
        %v3552 = vunpack.c.l.b16 %v3389
        %v3553 = vunpack.c.h.b16 %v3389
        %v3554 = vunpack.c.l.b16 %v3390
        %v3555 = vunpack.c.h.b16 %v3390
        %v3556 = vunpack.c.l.b16 %v3391
        %v3557 = vunpack.c.h.b16 %v3391
        %v3558 = vunpack.c.l.b16 %v3392
        %v3559 = vunpack.c.h.b16 %v3392
        %v3560 = vunpack.c.l.b16 %v3393
        %v3561 = vunpack.c.h.b16 %v3393
        %v3562 = vunpack.c.l.b16 %v3394
        %v3563 = vunpack.c.h.b16 %v3394
        %v3564 = vunpack.c.l.b16 %v3395
        %v3565 = vunpack.c.h.b16 %v3395
        %v3566 = vunpack.c.l.b16 %v3396
        %v3567 = vunpack.c.h.b16 %v3396
        %v3568 = vunpack.c.l.b16 %v3397
        %v3569 = vunpack.c.h.b16 %v3397
        %v3570 = vunpack.c.l.b16 %v3398
        %v3571 = vunpack.c.h.b16 %v3398
        %v3572 = vunpack.c.l.b16 %v3399
        %v3573 = vunpack.c.h.b16 %v3399
        %v3574 = vunpack.c.l.b16 %v3400
        %v3575 = vunpack.c.h.b16 %v3400
        %v3576 = vunpack.c.l.b16 %v3401
        %v3577 = vunpack.c.h.b16 %v3401
        %v3578 = vunpack.c.l.b16 %v3402
        %v3579 = vunpack.c.h.b16 %v3402
        %v3580 = vunpack.c.l.b16 %v3403
        %v3581 = vunpack.c.h.b16 %v3403
        %v3582 = vunpack.c.l.b16 %v3404
        %v3583 = vunpack.c.h.b16 %v3404
        %v3584 = vunpack.c.l.b16 %v3405
        %v3585 = vunpack.c.h.b16 %v3405
        %v3586 = vunpack.c.l.b16 %v3406
        %v3587 = vunpack.c.h.b16 %v3406
        %v3588 = vunpack.c.l.b16 %v3407
        %v3589 = vunpack.c.h.b16 %v3407
        %v3590 = vunpack.c.l.b16 %v3408
        %v3591 = vunpack.c.h.b16 %v3408
        %v3592 = vunpack.c.l.b16 %v3409
        %v3593 = vunpack.c.h.b16 %v3409
        %v3594 = vunpack.c.l.b16 %v3410
        %v3595 = vunpack.c.h.b16 %v3410
        %v3596 = vunpack.c.l.b16 %v3411
        %v3597 = vunpack.c.h.b16 %v3411
        %v3598 = vunpack.c.l.b16 %v3412
        %v3599 = vunpack.c.h.b16 %v3412
        %v3600 = vunpack.c.l.b16 %v3413
        %v3601 = vunpack.c.h.b16 %v3413
        %v3602 = vunpack.c.l.b16 %v3414
        %v3603 = vunpack.c.h.b16 %v3414
        %v3604 = vunpack.c.l.b16 %v3415
        %v3605 = vunpack.c.h.b16 %v3415
        %v3606 = vunpack.c.l.b16 %v3416
        %v3607 = vunpack.c.h.b16 %v3416
        %v3608 = vunpack.c.l.b16 %v3417
        %v3609 = vunpack.c.h.b16 %v3417
        %v3610 = vunpack.c.l.b16 %v3418
        %v3611 = vunpack.c.h.b16 %v3418
        %v3612 = vunpack.c.l.b16 %v3419
        %v3613 = vunpack.c.h.b16 %v3419
        %v3614 = vunpack.c.l.b16 %v3420
        %v3615 = vunpack.c.h.b16 %v3420
        %v3616 = vunpack.c.l.b16 %v3421
        %v3617 = vunpack.c.h.b16 %v3421
        %v3618 = vunpack.c.l.b16 %v3422
        %v3619 = vunpack.c.h.b16 %v3422
        %v3620 = vunpack.c.l.b16 %v3423
        %v3621 = vunpack.c.h.b16 %v3423
        %v3622 = vunpack.c.l.b16 %v3424
        %v3623 = vunpack.c.h.b16 %v3424
        %v3624 = vunpack.c.l.b16 %v3425
        %v3625 = vunpack.c.h.b16 %v3425
        %v3626 = vunpack.c.l.b16 %v3426
        %v3627 = vunpack.c.h.b16 %v3426
        %v3628 = vunpack.c.l.b16 %v3427
        %v3629 = vunpack.c.h.b16 %v3427
        %v3630 = vpack.c.b16 %v3506, %v3502
        %v3631 = vpack.c.b16 %v3507, %v3503
        %v3632 = vpack.c.b16 %v3508, %v3504
        %v3633 = vpack.c.b16 %v3509, %v3505
        %v3634 = vpack.c.b16 %v3514, %v3510
        %v3635 = vpack.c.b16 %v3515, %v3511
        %v3636 = vpack.c.b16 %v3516, %v3512
        %v3637 = vpack.c.b16 %v3517, %v3513
        %v3638 = vpack.c.b16 %v3522, %v3518
        %v3639 = vpack.c.b16 %v3523, %v3519
        %v3640 = vpack.c.b16 %v3524, %v3520
        %v3641 = vpack.c.b16 %v3525, %v3521
        %v3642 = vpack.c.b16 %v3530, %v3526
        %v3643 = vpack.c.b16 %v3531, %v3527
        %v3644 = vpack.c.b16 %v3532, %v3528
        %v3645 = vpack.c.b16 %v3533, %v3529
        %v3646 = vpack.c.b16 %v3538, %v3534
        %v3647 = vpack.c.b16 %v3539, %v3535
        %v3648 = vpack.c.b16 %v3540, %v3536
        %v3649 = vpack.c.b16 %v3541, %v3537
        %v3650 = vpack.c.b16 %v3546, %v3542
        %v3651 = vpack.c.b16 %v3547, %v3543
        %v3652 = vpack.c.b16 %v3548, %v3544
        %v3653 = vpack.c.b16 %v3549, %v3545
        %v3654 = vpack.c.b16 %v3554, %v3550
        %v3655 = vpack.c.b16 %v3555, %v3551
        %v3656 = vpack.c.b16 %v3556, %v3552
        %v3657 = vpack.c.b16 %v3557, %v3553
        %v3658 = vpack.c.b16 %v3562, %v3558
        %v3659 = vpack.c.b16 %v3563, %v3559
        %v3660 = vpack.c.b16 %v3564, %v3560
        %v3661 = vpack.c.b16 %v3565, %v3561
        %v3662 = vpack.c.b16 %v3570, %v3566
        %v3663 = vpack.c.b16 %v3571, %v3567
        %v3664 = vpack.c.b16 %v3572, %v3568
        %v3665 = vpack.c.b16 %v3573, %v3569
        %v3666 = vpack.c.b16 %v3578, %v3574
        %v3667 = vpack.c.b16 %v3579, %v3575
        %v3668 = vpack.c.b16 %v3580, %v3576
        %v3669 = vpack.c.b16 %v3581, %v3577
        %v3670 = vpack.c.b16 %v3586, %v3582
        %v3671 = vpack.c.b16 %v3587, %v3583
        %v3672 = vpack.c.b16 %v3588, %v3584
        %v3673 = vpack.c.b16 %v3589, %v3585
        %v3674 = vpack.c.b16 %v3594, %v3590
        %v3675 = vpack.c.b16 %v3595, %v3591
        %v3676 = vpack.c.b16 %v3596, %v3592
        %v3677 = vpack.c.b16 %v3597, %v3593
        %v3678 = vpack.c.b16 %v3602, %v3598
        %v3679 = vpack.c.b16 %v3603, %v3599
        %v3680 = vpack.c.b16 %v3604, %v3600
        %v3681 = vpack.c.b16 %v3605, %v3601
        %v3682 = vpack.c.b16 %v3610, %v3606
        %v3683 = vpack.c.b16 %v3611, %v3607
        %v3684 = vpack.c.b16 %v3612, %v3608
        %v3685 = vpack.c.b16 %v3613, %v3609
        %v3686 = vpack.c.b16 %v3618, %v3614
        %v3687 = vpack.c.b16 %v3619, %v3615
        %v3688 = vpack.c.b16 %v3620, %v3616
        %v3689 = vpack.c.b16 %v3621, %v3617
        %v3690 = vpack.c.b16 %v3626, %v3622
        %v3691 = vpack.c.b16 %v3627, %v3623
        %v3692 = vpack.c.b16 %v3628, %v3624
        %v3693 = vpack.c.b16 %v3629, %v3625
        %3758 = vmatpush.bf16.msra.mxu0 %v3658
        %3759 = vmatpush.bf16.msra.mxu0 %v3654
        %3760 = vmatpush.bf16.msra.mxu0 %v3650
        %3761 = vmatpush.bf16.msra.mxu0 %v3646
        %3762 = vmatpush.bf16.msra.mxu0 %v3642
        %3763 = vmatpush.bf16.msra.mxu0 %v3638
        %3764 = vmatpush.bf16.msra.mxu0 %v3634
        %3765 = vmatpush.bf16.msra.mxu0 %v3630
        %3766 = vmatmul.bf16.gmra.mxu0 %v3362
        %v3767 = vpop.f32.mrf.mxu0
        %v3768 = vadd.f32 %v3430, %v3767
        %v3769 = vpop.f32.mrf.mxu0
        %v3770 = vadd.f32 %v3430, %v3769
        %3771 = vdwg.mxu0
        %3772 = vmatpush.bf16.msra.mxu0 %v3690
        %3773 = vmatpush.bf16.msra.mxu0 %v3686
        %3774 = vmatpush.bf16.msra.mxu0 %v3682
        %3775 = vmatpush.bf16.msra.mxu0 %v3678
        %3776 = vmatpush.bf16.msra.mxu0 %v3674
        %3777 = vmatpush.bf16.msra.mxu0 %v3670
        %3778 = vmatpush.bf16.msra.mxu0 %v3666
        %3779 = vmatpush.bf16.msra.mxu0 %v3662
        %3780 = vmatmul.bf16.gmra.mxu0 %v3363
        %v3781 = vpop.f32.mrf.mxu0
        %v3782 = vadd.f32 %v3768, %v3781
        %v3783 = vpop.f32.mrf.mxu0
        %v3784 = vadd.f32 %v3770, %v3783
        %3785 = vdwg.mxu0
        %3786 = vmatpush.bf16.msra.mxu0 %v3659
        %3787 = vmatpush.bf16.msra.mxu0 %v3655
        %3788 = vmatpush.bf16.msra.mxu0 %v3651
        %3789 = vmatpush.bf16.msra.mxu0 %v3647
        %3790 = vmatpush.bf16.msra.mxu0 %v3643
        %3791 = vmatpush.bf16.msra.mxu0 %v3639
        %3792 = vmatpush.bf16.msra.mxu0 %v3635
        %3793 = vmatpush.bf16.msra.mxu0 %v3631
        %3794 = vmatmul.bf16.gmra.mxu0 %v3362
        %v3795 = vpop.f32.mrf.mxu0
        %v3796 = vadd.f32 %v3431, %v3795
        %v3797 = vpop.f32.mrf.mxu0
        %v3798 = vadd.f32 %v3431, %v3797
        %3799 = vdwg.mxu0
        %3800 = vmatpush.bf16.msra.mxu0 %v3691
        %3801 = vmatpush.bf16.msra.mxu0 %v3687
        %3802 = vmatpush.bf16.msra.mxu0 %v3683
        %3803 = vmatpush.bf16.msra.mxu0 %v3679
        %3804 = vmatpush.bf16.msra.mxu0 %v3675
        %3805 = vmatpush.bf16.msra.mxu0 %v3671
        %3806 = vmatpush.bf16.msra.mxu0 %v3667
        %3807 = vmatpush.bf16.msra.mxu0 %v3663
        %3808 = vmatmul.bf16.gmra.mxu0 %v3363
        %v3809 = vpop.f32.mrf.mxu0
        %v3810 = vadd.f32 %v3796, %v3809
        %v3811 = vpop.f32.mrf.mxu0
        %v3812 = vadd.f32 %v3798, %v3811
        %3813 = vdwg.mxu0
        %3814 = vmatpush.bf16.msra.mxu0 %v3660
        %3815 = vmatpush.bf16.msra.mxu0 %v3656
        %3816 = vmatpush.bf16.msra.mxu0 %v3652
        %3817 = vmatpush.bf16.msra.mxu0 %v3648
        %3818 = vmatpush.bf16.msra.mxu0 %v3644
        %3819 = vmatpush.bf16.msra.mxu0 %v3640
        %3820 = vmatpush.bf16.msra.mxu0 %v3636
        %3821 = vmatpush.bf16.msra.mxu0 %v3632
        %3822 = vmatmul.bf16.gmra.mxu0 %v3362
        %v3823 = vpop.f32.mrf.mxu0
        %v3824 = vadd.f32 %v3432, %v3823
        %v3825 = vpop.f32.mrf.mxu0
        %v3826 = vadd.f32 %v3432, %v3825
        %3827 = vdwg.mxu0
        %3828 = vmatpush.bf16.msra.mxu0 %v3692
        %3829 = vmatpush.bf16.msra.mxu0 %v3688
        %3830 = vmatpush.bf16.msra.mxu0 %v3684
        %3831 = vmatpush.bf16.msra.mxu0 %v3680
        %3832 = vmatpush.bf16.msra.mxu0 %v3676
        %3833 = vmatpush.bf16.msra.mxu0 %v3672
        %3834 = vmatpush.bf16.msra.mxu0 %v3668
        %3835 = vmatpush.bf16.msra.mxu0 %v3664
        %3836 = vmatmul.bf16.gmra.mxu0 %v3363
        %v3837 = vpop.f32.mrf.mxu0
        %v3838 = vadd.f32 %v3824, %v3837
        %v3839 = vpop.f32.mrf.mxu0
        %v3840 = vadd.f32 %v3826, %v3839
        %3841 = vdwg.mxu0
        %3842 = vmatpush.bf16.msra.mxu0 %v3661
        %3843 = vmatpush.bf16.msra.mxu0 %v3657
        %3844 = vmatpush.bf16.msra.mxu0 %v3653
        %3845 = vmatpush.bf16.msra.mxu0 %v3649
        %3846 = vmatpush.bf16.msra.mxu0 %v3645
        %3847 = vmatpush.bf16.msra.mxu0 %v3641
        %3848 = vmatpush.bf16.msra.mxu0 %v3637
        %3849 = vmatpush.bf16.msra.mxu0 %v3633
        %3850 = vmatmul.bf16.gmra.mxu0 %v3362
        %v3851 = vpop.f32.mrf.mxu0
        %v3852 = vadd.f32 %v3433, %v3851
        %v3853 = vpop.f32.mrf.mxu0
        %v3854 = vadd.f32 %v3433, %v3853
        %3855 = vdwg.mxu0
        %3856 = vmatpush.bf16.msra.mxu0 %v3693
        %3857 = vmatpush.bf16.msra.mxu0 %v3689
        %3858 = vmatpush.bf16.msra.mxu0 %v3685
        %3859 = vmatpush.bf16.msra.mxu0 %v3681
        %3860 = vmatpush.bf16.msra.mxu0 %v3677
        %3861 = vmatpush.bf16.msra.mxu0 %v3673
        %3862 = vmatpush.bf16.msra.mxu0 %v3669
        %3863 = vmatpush.bf16.msra.mxu0 %v3665
        %3864 = vmatmul.bf16.gmra.mxu0 %v3363
        %v3865 = vpop.f32.mrf.mxu0
        %v3866 = vadd.f32 %v3852, %v3865
        %v3867 = vpop.f32.mrf.mxu0
        %v3868 = vadd.f32 %v3854, %v3867
        %3869 = vdwg.mxu0
        %v3870 = vmul.f32 %v3782, 0.5
        %v3871 = vmul.f32 %v3810, 0.5
        %v3872 = vmul.f32 %v3838, 0.5
        %v3873 = vmul.f32 %v3866, 0.5
        %v3874 = vmul.f32 %v3784, 0.5
        %v3875 = vmul.f32 %v3812, 0.5
        %v3876 = vmul.f32 %v3840, 0.5
        %v3877 = vmul.f32 %v3868, 0.5
        %v3878 = vmul.f32 %v3782, 0.044715
        %v3879 = vmul.f32 %v3810, 0.044715
        %v3880 = vmul.f32 %v3838, 0.044715
        %v3881 = vmul.f32 %v3866, 0.044715
        %v3882 = vmul.f32 %v3784, 0.044715
        %v3883 = vmul.f32 %v3812, 0.044715
        %v3884 = vmul.f32 %v3840, 0.044715
        %v3885 = vmul.f32 %v3868, 0.044715
        %v3886 = vmul.f32 %v3878, %v3782
        %v3887 = vmul.f32 %v3879, %v3810
        %v3888 = vmul.f32 %v3880, %v3838
        %v3889 = vmul.f32 %v3881, %v3866
        %v3890 = vmul.f32 %v3882, %v3784
        %v3891 = vmul.f32 %v3883, %v3812
        %v3892 = vmul.f32 %v3884, %v3840
        %v3893 = vmul.f32 %v3885, %v3868
        %v3894 = vmul.f32 %v3886, %v3782
        %v3895 = vmul.f32 %v3887, %v3810
        %v3896 = vmul.f32 %v3888, %v3838
        %v3897 = vmul.f32 %v3889, %v3866
        %v3898 = vmul.f32 %v3890, %v3784
        %v3899 = vmul.f32 %v3891, %v3812
        %v3900 = vmul.f32 %v3892, %v3840
        %v3901 = vmul.f32 %v3893, %v3868
        %v3902 = vadd.f32 %v3782, %v3894
        %v3903 = vadd.f32 %v3810, %v3895
        %v3904 = vadd.f32 %v3838, %v3896
        %v3905 = vadd.f32 %v3866, %v3897
        %v3906 = vadd.f32 %v3784, %v3898
        %v3907 = vadd.f32 %v3812, %v3899
        %v3908 = vadd.f32 %v3840, %v3900
        %v3909 = vadd.f32 %v3868, %v3901
        %v3910 = vmul.f32 %v3902, 0.7978846
        %v3911 = vmul.f32 %v3903, 0.7978846
        %v3912 = vmul.f32 %v3904, 0.7978846
        %v3913 = vmul.f32 %v3905, 0.7978846
        %v3914 = vmul.f32 %v3906, 0.7978846
        %v3915 = vmul.f32 %v3907, 0.7978846
        %v3916 = vmul.f32 %v3908, 0.7978846
        %v3917 = vmul.f32 %v3909, 0.7978846
        %v3918 = vtanh.pop %v3910
        %v3919 = vtanh.pop %v3911
        %v3920 = vtanh.pop %v3912
        %v3921 = vtanh.pop %v3913
        %v3922 = vtanh.pop %v3914
        %v3923 = vtanh.pop %v3915
        %v3924 = vtanh.pop %v3916
        %v3925 = vtanh.pop %v3917
        %v3926 = vadd.f32 %v3918, 1.0
        %v3927 = vadd.f32 %v3919, 1.0
        %v3928 = vadd.f32 %v3920, 1.0
        %v3929 = vadd.f32 %v3921, 1.0
        %v3930 = vadd.f32 %v3922, 1.0
        %v3931 = vadd.f32 %v3923, 1.0
        %v3932 = vadd.f32 %v3924, 1.0
        %v3933 = vadd.f32 %v3925, 1.0
        %v3934 = vmul.f32 %v3870, %v3926
        %v3935 = vmul.f32 %v3871, %v3927
        %v3936 = vmul.f32 %v3872, %v3928
        %v3937 = vmul.f32 %v3873, %v3929
        %v3938 = vmul.f32 %v3874, %v3930
        %v3939 = vmul.f32 %v3875, %v3931
        %v3940 = vmul.f32 %v3876, %v3932
        %v3941 = vmul.f32 %v3877, %v3933
        %v3942 = vpack.c.bf16 %v3938, %v3934
        %v3943 = vpack.c.bf16 %v3939, %v3935
        %v3944 = vpack.c.bf16 %v3940, %v3936
        %v3945 = vpack.c.bf16 %v3941, %v3937
        %v3946 = vld [vmem:[%s1092] sm:$0xff]
        %v3947 = vld [vmem:[%s1092 + $0x8] sm:$0xff]
        %v3948 = vld [vmem:[%s1092 + $0x10] sm:$0xff]
        %v3949 = vld [vmem:[%s1092 + $0x18] sm:$0xff]
        %v3950 = vld [vmem:[%s1092 + $0x20] sm:$0xff]
        %v3951 = vld [vmem:[%s1092 + $0x28] sm:$0xff]
        %v3952 = vld [vmem:[%s1092 + $0x30] sm:$0xff]
        %v3953 = vld [vmem:[%s1092 + $0x38] sm:$0xff]
        %v3954 = vld [vmem:[%s1092 + $0x40] sm:$0xff]
        %v3955 = vld [vmem:[%s1092 + $0x48] sm:$0xff]
        %v3956 = vld [vmem:[%s1092 + $0x50] sm:$0xff]
        %v3957 = vld [vmem:[%s1092 + $0x58] sm:$0xff]
        %v3958 = vld [vmem:[%s1092 + $0x60] sm:$0xff]
        %v3959 = vld [vmem:[%s1092 + $0x68] sm:$0xff]
        %v3960 = vld [vmem:[%s1092 + $0x70] sm:$0xff]
        %v3961 = vld [vmem:[%s1092 + $0x78] sm:$0xff]
        %v3962 = vld [vmem:[%s1092 + $0x80] sm:$0xff]
        %v3963 = vld [vmem:[%s1092 + $0x88] sm:$0xff]
        %v3964 = vld [vmem:[%s1092 + $0x90] sm:$0xff]
        %v3965 = vld [vmem:[%s1092 + $0x98] sm:$0xff]
        %v3966 = vld [vmem:[%s1092 + $0xa0] sm:$0xff]
        %v3967 = vld [vmem:[%s1092 + $0xa8] sm:$0xff]
        %v3968 = vld [vmem:[%s1092 + $0xb0] sm:$0xff]
        %v3969 = vld [vmem:[%s1092 + $0xb8] sm:$0xff]
        %v3970 = vld [vmem:[%s1092 + $0xc0] sm:$0xff]
        %v3971 = vld [vmem:[%s1092 + $0xc8] sm:$0xff]
        %v3972 = vld [vmem:[%s1092 + $0xd0] sm:$0xff]
        %v3973 = vld [vmem:[%s1092 + $0xd8] sm:$0xff]
        %v3974 = vld [vmem:[%s1092 + $0xe0] sm:$0xff]
        %v3975 = vld [vmem:[%s1092 + $0xe8] sm:$0xff]
        %v3976 = vld [vmem:[%s1092 + $0xf0] sm:$0xff]
        %v3977 = vld [vmem:[%s1092 + $0xf8] sm:$0xff]
        %v3978 = vld [vmem:[%s1092 + $0x100] sm:$0xff]
        %v3979 = vld [vmem:[%s1092 + $0x108] sm:$0xff]
        %v3980 = vld [vmem:[%s1092 + $0x110] sm:$0xff]
        %v3981 = vld [vmem:[%s1092 + $0x118] sm:$0xff]
        %v3982 = vld [vmem:[%s1092 + $0x120] sm:$0xff]
        %v3983 = vld [vmem:[%s1092 + $0x128] sm:$0xff]
        %v3984 = vld [vmem:[%s1092 + $0x130] sm:$0xff]
        %v3985 = vld [vmem:[%s1092 + $0x138] sm:$0xff]
        %v3986 = vld [vmem:[%s1092 + $0x140] sm:$0xff]
        %v3987 = vld [vmem:[%s1092 + $0x148] sm:$0xff]
        %v3988 = vld [vmem:[%s1092 + $0x150] sm:$0xff]
        %v3989 = vld [vmem:[%s1092 + $0x158] sm:$0xff]
        %v3990 = vld [vmem:[%s1092 + $0x160] sm:$0xff]
        %v3991 = vld [vmem:[%s1092 + $0x168] sm:$0xff]
        %v3992 = vld [vmem:[%s1092 + $0x170] sm:$0xff]
        %v3993 = vld [vmem:[%s1092 + $0x178] sm:$0xff]
        %v3994 = vld [vmem:[%s1092 + $0x180] sm:$0xff]
        %v3995 = vld [vmem:[%s1092 + $0x188] sm:$0xff]
        %v3996 = vld [vmem:[%s1092 + $0x190] sm:$0xff]
        %v3997 = vld [vmem:[%s1092 + $0x198] sm:$0xff]
        %v3998 = vld [vmem:[%s1092 + $0x1a0] sm:$0xff]
        %v3999 = vld [vmem:[%s1092 + $0x1a8] sm:$0xff]
        %v4000 = vld [vmem:[%s1092 + $0x1b0] sm:$0xff]
        %v4001 = vld [vmem:[%s1092 + $0x1b8] sm:$0xff]
        %v4002 = vld [vmem:[%s1092 + $0x1c0] sm:$0xff]
        %v4003 = vld [vmem:[%s1092 + $0x1c8] sm:$0xff]
        %v4004 = vld [vmem:[%s1092 + $0x1d0] sm:$0xff]
        %v4005 = vld [vmem:[%s1092 + $0x1d8] sm:$0xff]
        %v4006 = vld [vmem:[%s1092 + $0x1e0] sm:$0xff]
        %v4007 = vld [vmem:[%s1092 + $0x1e8] sm:$0xff]
        %v4008 = vld [vmem:[%s1092 + $0x1f0] sm:$0xff]
        %v4009 = vld [vmem:[%s1092 + $0x1f8] sm:$0xff]
        %v4010 = vld [vmem:[%s1262] sm:$0x3]
        %v4012 = vperm.slane %v4010, 0
        %v4013 = vperm.slane %v4010, 1
        %v4080 = vunpack.c.l.b16 %v3946
        %v4081 = vunpack.c.h.b16 %v3946
        %v4082 = vunpack.c.l.b16 %v3947
        %v4083 = vunpack.c.h.b16 %v3947
        %v4084 = vunpack.c.l.b16 %v3948
        %v4085 = vunpack.c.h.b16 %v3948
        %v4086 = vunpack.c.l.b16 %v3949
        %v4087 = vunpack.c.h.b16 %v3949
        %v4088 = vunpack.c.l.b16 %v3950
        %v4089 = vunpack.c.h.b16 %v3950
        %v4090 = vunpack.c.l.b16 %v3951
        %v4091 = vunpack.c.h.b16 %v3951
        %v4092 = vunpack.c.l.b16 %v3952
        %v4093 = vunpack.c.h.b16 %v3952
        %v4094 = vunpack.c.l.b16 %v3953
        %v4095 = vunpack.c.h.b16 %v3953
        %v4096 = vunpack.c.l.b16 %v3954
        %v4097 = vunpack.c.h.b16 %v3954
        %v4098 = vunpack.c.l.b16 %v3955
        %v4099 = vunpack.c.h.b16 %v3955
        %v4100 = vunpack.c.l.b16 %v3956
        %v4101 = vunpack.c.h.b16 %v3956
        %v4102 = vunpack.c.l.b16 %v3957
        %v4103 = vunpack.c.h.b16 %v3957
        %v4104 = vunpack.c.l.b16 %v3958
        %v4105 = vunpack.c.h.b16 %v3958
        %v4106 = vunpack.c.l.b16 %v3959
        %v4107 = vunpack.c.h.b16 %v3959
        %v4108 = vunpack.c.l.b16 %v3960
        %v4109 = vunpack.c.h.b16 %v3960
        %v4110 = vunpack.c.l.b16 %v3961
        %v4111 = vunpack.c.h.b16 %v3961
        %v4112 = vunpack.c.l.b16 %v3962
        %v4113 = vunpack.c.h.b16 %v3962
        %v4114 = vunpack.c.l.b16 %v3963
        %v4115 = vunpack.c.h.b16 %v3963
        %v4116 = vunpack.c.l.b16 %v3964
        %v4117 = vunpack.c.h.b16 %v3964
        %v4118 = vunpack.c.l.b16 %v3965
        %v4119 = vunpack.c.h.b16 %v3965
        %v4120 = vunpack.c.l.b16 %v3966
        %v4121 = vunpack.c.h.b16 %v3966
        %v4122 = vunpack.c.l.b16 %v3967
        %v4123 = vunpack.c.h.b16 %v3967
        %v4124 = vunpack.c.l.b16 %v3968
        %v4125 = vunpack.c.h.b16 %v3968
        %v4126 = vunpack.c.l.b16 %v3969
        %v4127 = vunpack.c.h.b16 %v3969
        %v4128 = vunpack.c.l.b16 %v3970
        %v4129 = vunpack.c.h.b16 %v3970
        %v4130 = vunpack.c.l.b16 %v3971
        %v4131 = vunpack.c.h.b16 %v3971
        %v4132 = vunpack.c.l.b16 %v3972
        %v4133 = vunpack.c.h.b16 %v3972
        %v4134 = vunpack.c.l.b16 %v3973
        %v4135 = vunpack.c.h.b16 %v3973
        %v4136 = vunpack.c.l.b16 %v3974
        %v4137 = vunpack.c.h.b16 %v3974
        %v4138 = vunpack.c.l.b16 %v3975
        %v4139 = vunpack.c.h.b16 %v3975
        %v4140 = vunpack.c.l.b16 %v3976
        %v4141 = vunpack.c.h.b16 %v3976
        %v4142 = vunpack.c.l.b16 %v3977
        %v4143 = vunpack.c.h.b16 %v3977
        %v4144 = vunpack.c.l.b16 %v3978
        %v4145 = vunpack.c.h.b16 %v3978
        %v4146 = vunpack.c.l.b16 %v3979
        %v4147 = vunpack.c.h.b16 %v3979
        %v4148 = vunpack.c.l.b16 %v3980
        %v4149 = vunpack.c.h.b16 %v3980
        %v4150 = vunpack.c.l.b16 %v3981
        %v4151 = vunpack.c.h.b16 %v3981
        %v4152 = vunpack.c.l.b16 %v3982
        %v4153 = vunpack.c.h.b16 %v3982
        %v4154 = vunpack.c.l.b16 %v3983
        %v4155 = vunpack.c.h.b16 %v3983
        %v4156 = vunpack.c.l.b16 %v3984
        %v4157 = vunpack.c.h.b16 %v3984
        %v4158 = vunpack.c.l.b16 %v3985
        %v4159 = vunpack.c.h.b16 %v3985
        %v4160 = vunpack.c.l.b16 %v3986
        %v4161 = vunpack.c.h.b16 %v3986
        %v4162 = vunpack.c.l.b16 %v3987
        %v4163 = vunpack.c.h.b16 %v3987
        %v4164 = vunpack.c.l.b16 %v3988
        %v4165 = vunpack.c.h.b16 %v3988
        %v4166 = vunpack.c.l.b16 %v3989
        %v4167 = vunpack.c.h.b16 %v3989
        %v4168 = vunpack.c.l.b16 %v3990
        %v4169 = vunpack.c.h.b16 %v3990
        %v4170 = vunpack.c.l.b16 %v3991
        %v4171 = vunpack.c.h.b16 %v3991
        %v4172 = vunpack.c.l.b16 %v3992
        %v4173 = vunpack.c.h.b16 %v3992
        %v4174 = vunpack.c.l.b16 %v3993
        %v4175 = vunpack.c.h.b16 %v3993
        %v4176 = vunpack.c.l.b16 %v3994
        %v4177 = vunpack.c.h.b16 %v3994
        %v4178 = vunpack.c.l.b16 %v3995
        %v4179 = vunpack.c.h.b16 %v3995
        %v4180 = vunpack.c.l.b16 %v3996
        %v4181 = vunpack.c.h.b16 %v3996
        %v4182 = vunpack.c.l.b16 %v3997
        %v4183 = vunpack.c.h.b16 %v3997
        %v4184 = vunpack.c.l.b16 %v3998
        %v4185 = vunpack.c.h.b16 %v3998
        %v4186 = vunpack.c.l.b16 %v3999
        %v4187 = vunpack.c.h.b16 %v3999
        %v4188 = vunpack.c.l.b16 %v4000
        %v4189 = vunpack.c.h.b16 %v4000
        %v4190 = vunpack.c.l.b16 %v4001
        %v4191 = vunpack.c.h.b16 %v4001
        %v4192 = vunpack.c.l.b16 %v4002
        %v4193 = vunpack.c.h.b16 %v4002
        %v4194 = vunpack.c.l.b16 %v4003
        %v4195 = vunpack.c.h.b16 %v4003
        %v4196 = vunpack.c.l.b16 %v4004
        %v4197 = vunpack.c.h.b16 %v4004
        %v4198 = vunpack.c.l.b16 %v4005
        %v4199 = vunpack.c.h.b16 %v4005
        %v4200 = vunpack.c.l.b16 %v4006
        %v4201 = vunpack.c.h.b16 %v4006
        %v4202 = vunpack.c.l.b16 %v4007
        %v4203 = vunpack.c.h.b16 %v4007
        %v4204 = vunpack.c.l.b16 %v4008
        %v4205 = vunpack.c.h.b16 %v4008
        %v4206 = vunpack.c.l.b16 %v4009
        %v4207 = vunpack.c.h.b16 %v4009
        %v4208 = vpack.c.b16 %v4082, %v4080
        %v4209 = vpack.c.b16 %v4083, %v4081
        %v4210 = vpack.c.b16 %v4086, %v4084
        %v4211 = vpack.c.b16 %v4087, %v4085
        %v4212 = vpack.c.b16 %v4090, %v4088
        %v4213 = vpack.c.b16 %v4091, %v4089
        %v4214 = vpack.c.b16 %v4094, %v4092
        %v4215 = vpack.c.b16 %v4095, %v4093
        %v4216 = vpack.c.b16 %v4098, %v4096
        %v4217 = vpack.c.b16 %v4099, %v4097
        %v4218 = vpack.c.b16 %v4102, %v4100
        %v4219 = vpack.c.b16 %v4103, %v4101
        %v4220 = vpack.c.b16 %v4106, %v4104
        %v4221 = vpack.c.b16 %v4107, %v4105
        %v4222 = vpack.c.b16 %v4110, %v4108
        %v4223 = vpack.c.b16 %v4111, %v4109
        %v4224 = vpack.c.b16 %v4114, %v4112
        %v4225 = vpack.c.b16 %v4115, %v4113
        %v4226 = vpack.c.b16 %v4118, %v4116
        %v4227 = vpack.c.b16 %v4119, %v4117
        %v4228 = vpack.c.b16 %v4122, %v4120
        %v4229 = vpack.c.b16 %v4123, %v4121
        %v4230 = vpack.c.b16 %v4126, %v4124
        %v4231 = vpack.c.b16 %v4127, %v4125
        %v4232 = vpack.c.b16 %v4130, %v4128
        %v4233 = vpack.c.b16 %v4131, %v4129
        %v4234 = vpack.c.b16 %v4134, %v4132
        %v4235 = vpack.c.b16 %v4135, %v4133
        %v4236 = vpack.c.b16 %v4138, %v4136
        %v4237 = vpack.c.b16 %v4139, %v4137
        %v4238 = vpack.c.b16 %v4142, %v4140
        %v4239 = vpack.c.b16 %v4143, %v4141
        %v4240 = vpack.c.b16 %v4146, %v4144
        %v4241 = vpack.c.b16 %v4147, %v4145
        %v4242 = vpack.c.b16 %v4150, %v4148
        %v4243 = vpack.c.b16 %v4151, %v4149
        %v4244 = vpack.c.b16 %v4154, %v4152
        %v4245 = vpack.c.b16 %v4155, %v4153
        %v4246 = vpack.c.b16 %v4158, %v4156
        %v4247 = vpack.c.b16 %v4159, %v4157
        %v4248 = vpack.c.b16 %v4162, %v4160
        %v4249 = vpack.c.b16 %v4163, %v4161
        %v4250 = vpack.c.b16 %v4166, %v4164
        %v4251 = vpack.c.b16 %v4167, %v4165
        %v4252 = vpack.c.b16 %v4170, %v4168
        %v4253 = vpack.c.b16 %v4171, %v4169
        %v4254 = vpack.c.b16 %v4174, %v4172
        %v4255 = vpack.c.b16 %v4175, %v4173
        %v4256 = vpack.c.b16 %v4178, %v4176
        %v4257 = vpack.c.b16 %v4179, %v4177
        %v4258 = vpack.c.b16 %v4182, %v4180
        %v4259 = vpack.c.b16 %v4183, %v4181
        %v4260 = vpack.c.b16 %v4186, %v4184
        %v4261 = vpack.c.b16 %v4187, %v4185
        %v4262 = vpack.c.b16 %v4190, %v4188
        %v4263 = vpack.c.b16 %v4191, %v4189
        %v4264 = vpack.c.b16 %v4194, %v4192
        %v4265 = vpack.c.b16 %v4195, %v4193
        %v4266 = vpack.c.b16 %v4198, %v4196
        %v4267 = vpack.c.b16 %v4199, %v4197
        %v4268 = vpack.c.b16 %v4202, %v4200
        %v4269 = vpack.c.b16 %v4203, %v4201
        %v4270 = vpack.c.b16 %v4206, %v4204
        %v4271 = vpack.c.b16 %v4207, %v4205
        %4336 = vmatpush.bf16.msra.mxu0 %v4222
        %4337 = vmatpush.bf16.msra.mxu0 %v4220
        %4338 = vmatpush.bf16.msra.mxu0 %v4218
        %4339 = vmatpush.bf16.msra.mxu0 %v4216
        %4340 = vmatpush.bf16.msra.mxu0 %v4214
        %4341 = vmatpush.bf16.msra.mxu0 %v4212
        %4342 = vmatpush.bf16.msra.mxu0 %v4210
        %4343 = vmatpush.bf16.msra.mxu0 %v4208
        %4344 = vmatmul.bf16.gmra.mxu0 %v3942
        %v4345 = vpop.f32.mrf.mxu0
        %v4346 = vadd.f32 %v4012, %v4345
        %v4347 = vpop.f32.mrf.mxu0
        %v4348 = vadd.f32 %v4012, %v4347
        %4349 = vdwg.mxu0
        %4350 = vmatpush.bf16.msra.mxu0 %v4238
        %4351 = vmatpush.bf16.msra.mxu0 %v4236
        %4352 = vmatpush.bf16.msra.mxu0 %v4234
        %4353 = vmatpush.bf16.msra.mxu0 %v4232
        %4354 = vmatpush.bf16.msra.mxu0 %v4230
        %4355 = vmatpush.bf16.msra.mxu0 %v4228
        %4356 = vmatpush.bf16.msra.mxu0 %v4226
        %4357 = vmatpush.bf16.msra.mxu0 %v4224
        %4358 = vmatmul.bf16.gmra.mxu0 %v3943
        %v4359 = vpop.f32.mrf.mxu0
        %v4360 = vadd.f32 %v4346, %v4359
        %v4361 = vpop.f32.mrf.mxu0
        %v4362 = vadd.f32 %v4348, %v4361
        %4363 = vdwg.mxu0
        %4364 = vmatpush.bf16.msra.mxu0 %v4254
        %4365 = vmatpush.bf16.msra.mxu0 %v4252
        %4366 = vmatpush.bf16.msra.mxu0 %v4250
        %4367 = vmatpush.bf16.msra.mxu0 %v4248
        %4368 = vmatpush.bf16.msra.mxu0 %v4246
        %4369 = vmatpush.bf16.msra.mxu0 %v4244
        %4370 = vmatpush.bf16.msra.mxu0 %v4242
        %4371 = vmatpush.bf16.msra.mxu0 %v4240
        %4372 = vmatmul.bf16.gmra.mxu0 %v3944
        %v4373 = vpop.f32.mrf.mxu0
        %v4374 = vadd.f32 %v4360, %v4373
        %v4375 = vpop.f32.mrf.mxu0
        %v4376 = vadd.f32 %v4362, %v4375
        %4377 = vdwg.mxu0
        %4378 = vmatpush.bf16.msra.mxu0 %v4270
        %4379 = vmatpush.bf16.msra.mxu0 %v4268
        %4380 = vmatpush.bf16.msra.mxu0 %v4266
        %4381 = vmatpush.bf16.msra.mxu0 %v4264
        %4382 = vmatpush.bf16.msra.mxu0 %v4262
        %4383 = vmatpush.bf16.msra.mxu0 %v4260
        %4384 = vmatpush.bf16.msra.mxu0 %v4258
        %4385 = vmatpush.bf16.msra.mxu0 %v4256
        %4386 = vmatmul.bf16.gmra.mxu0 %v3945
        %v4387 = vpop.f32.mrf.mxu0
        %v4388 = vadd.f32 %v4374, %v4387
        %v4389 = vpop.f32.mrf.mxu0
        %v4390 = vadd.f32 %v4376, %v4389
        %4391 = vdwg.mxu0
        %4392 = vmatpush.bf16.msra.mxu0 %v4223
        %4393 = vmatpush.bf16.msra.mxu0 %v4221
        %4394 = vmatpush.bf16.msra.mxu0 %v4219
        %4395 = vmatpush.bf16.msra.mxu0 %v4217
        %4396 = vmatpush.bf16.msra.mxu0 %v4215
        %4397 = vmatpush.bf16.msra.mxu0 %v4213
        %4398 = vmatpush.bf16.msra.mxu0 %v4211
        %4399 = vmatpush.bf16.msra.mxu0 %v4209
        %4400 = vmatmul.bf16.gmra.mxu0 %v3942
        %v4401 = vpop.f32.mrf.mxu0
        %v4402 = vadd.f32 %v4013, %v4401
        %v4403 = vpop.f32.mrf.mxu0
        %v4404 = vadd.f32 %v4013, %v4403
        %4405 = vdwg.mxu0
        %4406 = vmatpush.bf16.msra.mxu0 %v4239
        %4407 = vmatpush.bf16.msra.mxu0 %v4237
        %4408 = vmatpush.bf16.msra.mxu0 %v4235
        %4409 = vmatpush.bf16.msra.mxu0 %v4233
        %4410 = vmatpush.bf16.msra.mxu0 %v4231
        %4411 = vmatpush.bf16.msra.mxu0 %v4229
        %4412 = vmatpush.bf16.msra.mxu0 %v4227
        %4413 = vmatpush.bf16.msra.mxu0 %v4225
        %4414 = vmatmul.bf16.gmra.mxu0 %v3943
        %v4415 = vpop.f32.mrf.mxu0
        %v4416 = vadd.f32 %v4402, %v4415
        %v4417 = vpop.f32.mrf.mxu0
        %v4418 = vadd.f32 %v4404, %v4417
        %4419 = vdwg.mxu0
        %4420 = vmatpush.bf16.msra.mxu0 %v4255
        %4421 = vmatpush.bf16.msra.mxu0 %v4253
        %4422 = vmatpush.bf16.msra.mxu0 %v4251
        %4423 = vmatpush.bf16.msra.mxu0 %v4249
        %4424 = vmatpush.bf16.msra.mxu0 %v4247
        %4425 = vmatpush.bf16.msra.mxu0 %v4245
        %4426 = vmatpush.bf16.msra.mxu0 %v4243
        %4427 = vmatpush.bf16.msra.mxu0 %v4241
        %4428 = vmatmul.bf16.gmra.mxu0 %v3944
        %v4429 = vpop.f32.mrf.mxu0
        %v4430 = vadd.f32 %v4416, %v4429
        %v4431 = vpop.f32.mrf.mxu0
        %v4432 = vadd.f32 %v4418, %v4431
        %4433 = vdwg.mxu0
        %4434 = vmatpush.bf16.msra.mxu0 %v4271
        %4435 = vmatpush.bf16.msra.mxu0 %v4269
        %4436 = vmatpush.bf16.msra.mxu0 %v4267
        %4437 = vmatpush.bf16.msra.mxu0 %v4265
        %4438 = vmatpush.bf16.msra.mxu0 %v4263
        %4439 = vmatpush.bf16.msra.mxu0 %v4261
        %4440 = vmatpush.bf16.msra.mxu0 %v4259
        %4441 = vmatpush.bf16.msra.mxu0 %v4257
        %4442 = vmatmul.bf16.gmra.mxu0 %v3945
        %v4443 = vpop.f32.mrf.mxu0
        %v4444 = vadd.f32 %v4430, %v4443
        %v4445 = vpop.f32.mrf.mxu0
        %v4446 = vadd.f32 %v4432, %v4445
        %4447 = vdwg.mxu0
        %v4448 = vadd.f32 %v3358, %v4388
        %v4449 = vadd.f32 %v3359, %v4444
        %v4450 = vadd.f32 %v3360, %v4390
        %v4451 = vadd.f32 %v3361, %v4446
        %v4452 = vld [vmem:[%s1102] sm:$0x3]
        %v4453 = vld [vmem:[%s1112] sm:$0x3]
        %v4454 = vadd.f32 %v4448, %v4449
        %4455 = vadd.xlane.f32.xlu0 %v4454
        %v4456 = vpop.xlane.xlu0 %4455
        %v4457 = vadd.f32 %v4450, %v4451
        %4458 = vadd.xlane.f32.xlu0 %v4457
        %v4459 = vpop.xlane.xlu0 %4458
        %v4460 = vmul.f32 %v4456, %v3299
        %v4461 = vmul.f32 %v4459, %v3299
        %v4462 = vsub.f32 %v4448, %v4460
        %v4463 = vsub.f32 %v4449, %v4460
        %v4464 = vsub.f32 %v4450, %v4461
        %v4465 = vsub.f32 %v4451, %v4461
        %v4466 = vmul.f32 %v4462, %v4462
        %v4467 = vmul.f32 %v4463, %v4463
        %v4468 = vmul.f32 %v4464, %v4464
        %v4469 = vmul.f32 %v4465, %v4465
        %v4470 = vadd.f32 %v4466, %v4467
        %4471 = vadd.xlane.f32.xlu0 %v4470
        %v4472 = vpop.xlane.xlu0 %4471
        %v4473 = vadd.f32 %v4468, %v4469
        %4474 = vadd.xlane.f32.xlu0 %v4473
        %v4475 = vpop.xlane.xlu0 %4474
        %v4476 = vmul.f32 %v4472, %v3299
        %v4477 = vmul.f32 %v4475, %v3299
        %v4478 = vadd.f32 %v4476, 1e-12
        %v4479 = vadd.f32 %v4477, 1e-12
        %v4480 = vrsqrt.pop %v4478
        %v4481 = vmul.f32 %v4480, %v4478
        %v4482 = vmul.f32 %v4481, %v4480
        %v4483 = vmul.f32 0.5, %v4482
        %v4484 = vsub.f32 1.5, %v4483
        %v4485 = vmul.f32 %v4480, %v4484
        %vm4486 = vweird.f32 %v4478
        %vm4487 = vweird.f32 %v4480
        %vm4488 = vmor %vm4486, %vm4487
        %v4489 = vsel %vm4488, %v4480, %v4485
        %v4490 = vrsqrt.pop %v4479
        %v4491 = vmul.f32 %v4490, %v4479
        %v4492 = vmul.f32 %v4491, %v4490
        %v4493 = vmul.f32 0.5, %v4492
        %v4494 = vsub.f32 1.5, %v4493
        %v4495 = vmul.f32 %v4490, %v4494
        %vm4496 = vweird.f32 %v4479
        %vm4497 = vweird.f32 %v4490
        %vm4498 = vmor %vm4496, %vm4497
        %v4499 = vsel %vm4498, %v4490, %v4495
        %v4500 = vmul.f32 %v4462, %v4489
        %v4501 = vmul.f32 %v4463, %v4489
        %v4502 = vmul.f32 %v4464, %v4499
        %v4503 = vmul.f32 %v4465, %v4499
        %v4505 = vperm.slane %v4452, 0
        %v4506 = vperm.slane %v4452, 1
        %v4509 = vmul.f32 %v4500, %v4505
        %v4510 = vmul.f32 %v4501, %v4506
        %v4511 = vmul.f32 %v4502, %v4505
        %v4512 = vmul.f32 %v4503, %v4506
        %v4514 = vperm.slane %v4453, 0
        %v4515 = vperm.slane %v4453, 1
        %v4518 = vadd.f32 %v4509, %v4514
        %v4519 = vadd.f32 %v4510, %v4515
        %v4520 = vadd.f32 %v4511, %v4514
        %v4521 = vadd.f32 %v4512, %v4515
        %4522 = vst [vmem:[%s1250] sm:$0xff] %v4518
        %4523 = vst [vmem:[%s1250 + $0x8] sm:$0xff] %v4519
        %4524 = vst [vmem:[%s1250 + $0x10] sm:$0xff] %v4520
        %4525 = vst [vmem:[%s1250 + $0x18] sm:$0xff] %v4521
        %s4526 = sand.u32 %s571, 1
        %s4527 = scalar_lea.sflag [#allocation4], %s4526
        %s4528 = sand.u32 %s571, 1
        %s4529 = smul.addr %s4528, 32
        %s4530 = scalar_lea.vmem [#allocation23], %s4529
        // Predicated region
        $region173: #{tpu_custom_call.1} parent=99 // pred_check
          %p4531 = pneg %p581
        $region174: #{tpu_custom_call.1} parent=99 // pred_check_branch
          %4533 = sbr.rel (%p4531) target = $region176
        $region175: #{tpu_custom_call.1} parent=99 // pred_region
          %4535 = vsyncadd %s4527, 0
          %s4536 = smul.addr %s45, 4
          %s4537 = smul.addr %s4536, 8
          %s4538 = scalar_lea.hbm %s20, %s4537
          %s4539 = sshll.u32 %s4530, 4
          %s4540 = int_to_ptr.vmem [resolvable:$true] %s4539
          %s4541 = sshll.u32 %s4538, 4
          %s4542 = int_to_ptr.hbm [resolvable:$true] %s4541
          %4547 = dma.vmem_to_hbm [thread:$0]  %s4540, 512, %s4542, %s4527, 256, 256, 16
        $region176: #{tpu_custom_call.1} parent=99 // pred_fallthru
          _
      $region100: #{tpu_custom_call.1} parent=5 // pred_fallthru
        _
      %p4548 = scmp.le.s32.totalorder 2, %s36
      // Predicated region
      $region177: #{tpu_custom_call.1} parent=5 // pred_check
        %p4549 = pneg %p4548
      $region178: #{tpu_custom_call.1} parent=5 // pred_check_branch
        %4551 = sbr.rel (%p4549) target = $region180
      $region179: #{tpu_custom_call.1} parent=5 // pred_region
        %s4552 = ssub.s32 %s36, 2
        // Predicated region
        $region181: #{tpu_custom_call.1} parent=179 // pred_check
          %p4553 = pneg %p587
        $region182: #{tpu_custom_call.1} parent=179 // pred_check_branch
          %4555 = sbr.rel (%p4553) target = $region184
        $region183: #{tpu_custom_call.1} parent=179 // pred_region
          %s4556 = sand.u32 %s572, 1
          %s4557 = scalar_lea.sflag [#allocation4], %s4556
          %s4558 = sand.u32 %s572, 1
          %s4559 = smul.addr %s4558, 32
          %s4560 = scalar_lea.vmem [#allocation23], %s4559
          %4562 = dma.done %s4557, 512
        $region184: #{tpu_custom_call.1} parent=179 // pred_fallthru
          _
      $region180: #{tpu_custom_call.1} parent=5 // pred_fallthru
        _
    $region6: #{tpu_custom_call.1} parent=1 // loop_footer
      %s40 = sadd.s32 1, %s36
    $region7: #{tpu_custom_call.1} parent=1 // loop_footer_branch
      %35 = sbr.rel target = $region3
    $region8: #{tpu_custom_call.1} parent=1 // loop_exit
      _
    %4563 = vsyncpa [#allocation3], 1
    %s4564 = scalar_lea.sflag [#allocation3], 1
    %4565 = vsyncpa %s4564, 1
    %4566 = vsyncpa [#allocation6], 1
    %s4567 = scalar_lea.sflag [#allocation6], 1
    %4568 = vsyncpa %s4567, 1
    %4569 = vsyncpa [#allocation9], 1
    %4570 = vsyncpa [#allocation4], 1
    %s4571 = scalar_lea.sflag [#allocation4], 1
    %4572 = vsyncpa %s4571, 1

</llo_original>
